<compile_context>
chip_gen: v7x
topology: tpu7x:2x2x1
jax: 0.10.0
libtpu: 0.0.40
codegen_flags: <defaults>
</compile_context>

<pallas_src>
import functools

import jax
import jax.numpy as jnp
from jax import lax
from jax.experimental import pallas as pl
from jax.experimental.pallas import tpu as pltpu


# ----------------------------------------------------------------------------
# Pallas kernel
# ----------------------------------------------------------------------------
def _self_attn_kernel(x_ref, w_ref, b_ref, gamma_ref, o_ref, *, cq):
    """Fused self-attention for a (Bt, C, N) block, channel-major throughout.

    x_ref    : (Bt, C, N)   input pixels, ORIGINAL dtype (exact residual)
    w_ref    : (D, C)       fused [Wq; Wk; Wv] rows, D = 2*Cq + C (matmul dtype)
    b_ref    : (D, 1)       fused [bq; bk; bv] column, f32
    gamma_ref: (1,) SMEM    residual gate (scalar)
    o_ref    : (Bt, C, N)   output block
    """
    md = w_ref.dtype
    gamma = gamma_ref[0]
    bt = x_ref.shape[0]
    w = w_ref[...]                                    # (D, C)
    bias = b_ref[...]                                 # (D, 1)

    # Bt is small and static -> unrolled loop of pure 2-D MXU matmuls.
    for bi in range(bt):
        x_cn = x_ref[bi]                              # (C, N)
        # Fused Q|K|V projection: (D, C) @ (C, N) -> (D, N); lanes stay on N.
        proj = jnp.dot(w, x_cn.astype(md),
                       preferred_element_type=jnp.float32) + bias
        q = proj[:cq, :]                              # (Cq, N) sublane-aligned
        k = proj[cq:2 * cq, :]                        # (Cq, N)
        v = proj[2 * cq:, :]                          # (C,  N)

        # scores[n, m] = q[:, n] . k[:, m]  (contract the shared head dim Cq,
        # no transpose materialized -- dimension numbers do the work).
        s = lax.dot_general(q.astype(md), k.astype(md),
                            (((0,), (0,)), ((), ())),
                            preferred_element_type=jnp.float32)   # (N, N)

        # Numerically-stable softmax over the key axis (exact normalization).
        s_max = s.max(axis=-1, keepdims=True)
        e = jnp.exp(s - s_max)
        p = e / e.sum(axis=-1, keepdims=True)

        # out[c, n] = sum_m v[c, m] * p[n, m]   (v @ p^T, lanes stay on N).
        out = lax.dot_general(v.astype(md), p.astype(md),
                              (((1,), (1,)), ((), ())),
                              preferred_element_type=jnp.float32)  # (C, N)

        # Fresh load of x for the residual (do not keep x live across both
        # matmul phases) -- residual computed in f32 from the original dtype.
        o_ref[bi] = (gamma * out
                     + x_ref[bi].astype(jnp.float32)).astype(o_ref.dtype)


# ----------------------------------------------------------------------------
# Wrapper helpers
# ----------------------------------------------------------------------------
def _vmem_limit_bytes():
    """Per-TensorCore VMEM request with headroom for compiler scratch."""
    phys = 64 * 1024 * 1024                 # conservative floor (v7x per-TC)
    try:
        phys = int(pltpu.get_tpu_info().vmem_capacity_bytes)
    except Exception:
        pass
    return max(32 * 1024 * 1024, min(phys - 16 * 1024 * 1024, 100 * 1024 * 1024))


def _pick_batch_tile(batch, c, n, d, vmem_budget, *, max_tile=8, itemsize=4):
    """Largest divisor of `batch` (<= max_tile) whose VMEM working set fits.

    Counts what actually lives in VMEM: double-buffered input and output
    blocks, the fused (D, N) projection, ~3 concurrently-live (N, N) score
    tensors (s, e, p) and the attention-output / residual temporaries.
    """
    per_b = itemsize * (2 * c * n        # double-buffered input block
                        + 2 * c * n      # double-buffered output block
                        + d * n          # fused projection
                        + 3 * n * n      # s, e, p live simultaneously
                        + 2 * c * n)     # attention output + residual temps
    best = 1
    for bt in range(1, min(batch, max_tile) + 1):
        if batch % bt == 0 and bt * per_b <= vmem_budget:
            best = bt
    # TODO(synk): on v7x (2 TensorCores) prefer >= 2 parallel grid steps when
    # batch > 1 even if the whole batch fits one tile.
    return best


def _attention_math_xla(x_cn, w_cat, b_col, gamma, cq):
    """Plain-XLA fused attention (used for tiny spatial maps, N < 128)."""
    xf = x_cn.astype(jnp.float32)
    proj = jnp.einsum('dc,bcn->bdn', w_cat, xf) + b_col[None]    # (B, D, N)
    q, k, v = proj[:, :cq], proj[:, cq:2 * cq], proj[:, 2 * cq:]
    s = jnp.einsum('bqn,bqm->bnm', q, k)                         # (B, N, N)
    p = jax.nn.softmax(s, axis=-1)
    out = jnp.einsum('bcm,bnm->bcn', v, p)                       # (B, C, N)
    return gamma * out + xf


# ----------------------------------------------------------------------------
# SelfAttention forward
# ----------------------------------------------------------------------------
def self_attention(x_nchw, wq, bq, wk, bk, wv, bv, gamma, *,
                   matmul_dtype=jnp.float32, min_pallas_n=128):
    """SAGAN SelfAttention forward.

    x_nchw: (B, C, W, H);  wq/wk: (C//8, C);  wv: (C, C);  biases 1-D;
    gamma scalar.  Matmuls run in `matmul_dtype` (f32 default; bf16 is an
    opt-in for real-MXU runs, f32 accumulation either way).  The residual
    path always uses x at its original dtype.
    """
    B, C, W, H = x_nchw.shape
    N = W * H
    Cq = wq.shape[0]
    D = 2 * Cq + C
    out_dtype = x_nchw.dtype

    # (B, C, W, H) -> (B, C, N) is a free reshape (no HBM transpose).
    x_cn = x_nchw.reshape(B, C, N)

    # Fuse the three 1x1-conv projections: natural row-stacked weight, no .T.
    w_cat = jnp.concatenate([wq, wk, wv], axis=0)                 # (D, C)
    b_col = jnp.concatenate([bq, bk, bv]).reshape(D, 1).astype(jnp.float32)
    gamma_arr = jnp.asarray(gamma, jnp.float32).reshape(1)

    if N < min_pallas_n:
        # Tiny spatial maps (the deeper autoencoder stages): masked lane-sparse
        # stores + per-call overhead would dominate a Pallas launch.
        out = _attention_math_xla(x_cn, w_cat.astype(jnp.float32), b_col,
                                  gamma_arr[0], Cq)
        return out.astype(out_dtype).reshape(B, C, W, H)

    vmem_limit = _vmem_limit_bytes()
    Bt = _pick_batch_tile(B, C, N, D, (vmem_limit * 3) // 4)
    grid = (B // Bt,)
    kernel = functools.partial(_self_attn_kernel, cq=Cq)

    out_cn = pl.pallas_call(
        kernel,
        out_shape=jax.ShapeDtypeStruct((B, C, N), out_dtype),
        grid_spec=pltpu.PrefetchScalarGridSpec(
            num_scalar_prefetch=0,
            grid=grid,
            in_specs=[
                pl.BlockSpec((Bt, C, N), lambda i: (i, 0, 0)),       # x (orig dtype)
                pl.BlockSpec((D, C), lambda i: (0, 0)),              # [Wq;Wk;Wv]
                pl.BlockSpec((D, 1), lambda i: (0, 0)),              # [bq;bk;bv]
                pl.BlockSpec(memory_space=pltpu.MemorySpace.SMEM),   # gamma
            ],
            out_specs=pl.BlockSpec((Bt, C, N), lambda i: (i, 0, 0)),
        ),
        compiler_params=pltpu.CompilerParams(
            dimension_semantics=("parallel",),
            vmem_limit_bytes=vmem_limit),
    )(x_cn, w_cat.astype(matmul_dtype), b_col, gamma_arr)

    # TODO(synk): for very large maps (N >= ~1-2k) tile the key axis
    # flash-style (extra "arbitrary" grid dim + online softmax) instead of
    # materializing the dense (N, N) scores; unnecessary at these sizes.
    return out_cn.reshape(B, C, W, H)


def self_attention_ref(x, wq, bq, wk, bk, wv, bv, gamma):
    """Plain-JAX f32 mirror of the PyTorch SelfAttention.forward."""
    B, C, W, H = x.shape
    N = W * H
    xf = x.reshape(B, C, N).astype(jnp.float32)
    q = jnp.einsum('qc,bcn->bnq', wq, xf) + bq[None, None, :]
    k = jnp.einsum('qc,bcn->bqn', wk, xf) + bk[None, :, None]
    attn = jax.nn.softmax(jnp.einsum('bnq,bqm->bnm', q, k), axis=-1)
    v = jnp.einsum('vc,bcn->bvn', wv, xf) + bv[None, :, None]
    out = jnp.einsum('bvn,bmn->bvm', v, attn)
    return (gamma * out.reshape(B, C, W, H) + x).astype(x.dtype)


# ----------------------------------------------------------------------------
# Autoencoder forward (convs via XLA, attention via the Pallas kernel)
# ----------------------------------------------------------------------------
def _conv2d(x, w, b, stride, padding):
    y = lax.conv_general_dilated(
        x, w, window_strides=(stride, stride),
        padding=((padding, padding), (padding, padding)),
        dimension_numbers=('NCHW', 'OIHW', 'NCHW'))
    return y + b[None, :, None, None]


def _conv_transpose2d(x, w, b, stride, padding):
    # PyTorch ConvTranspose2d weight layout is (C_in, C_out, kH, kW).
    k = w.shape[-1]
    w_flip = jnp.transpose(jnp.flip(w, axis=(2, 3)), (1, 0, 2, 3))  # -> OIHW
    pad = k - 1 - padding
    y = lax.conv_general_dilated(
        x, w_flip, window_strides=(1, 1),
        padding=((pad, pad), (pad, pad)),
        lhs_dilation=(stride, stride),
        dimension_numbers=('NCHW', 'OIHW', 'NCHW'))
    return y + b[None, :, None, None]


def autoencoder_forward(p, x, *, matmul_dtype=jnp.float32):
    """Forward pass of the PyTorch Autoencoder: SelfAttention blocks run as
    fused Pallas kernels (XLA fallback for tiny maps); convs run through XLA."""
    # TODO(synk): Conv2d / ConvTranspose2d (4x4, stride 2) have no bespoke
    # Pallas kernel here; they are executed by lax.conv_general_dilated.
    h = jax.nn.relu(_conv2d(x, p['enc1_w'], p['enc1_b'], 2, 1))
    h = self_attention(h, *p['attn1'], matmul_dtype=matmul_dtype)
    h = jax.nn.relu(_conv2d(h, p['enc2_w'], p['enc2_b'], 2, 1))
    h = self_attention(h, *p['attn2'], matmul_dtype=matmul_dtype)
    h = jax.nn.relu(_conv2d(h, p['enc3_w'], p['enc3_b'], 2, 1))
    h = self_attention(h, *p['attn3'], matmul_dtype=matmul_dtype)
    h = jax.nn.relu(_conv_transpose2d(h, p['dec1_w'], p['dec1_b'], 2, 1))
    h = jax.nn.relu(_conv_transpose2d(h, p['dec2_w'], p['dec2_b'], 2, 1))
    h = jnp.tanh(_conv_transpose2d(h, p['dec3_w'], p['dec3_b'], 2, 1))
    return h


# ----------------------------------------------------------------------------
# Self-test
# ----------------------------------------------------------------------------
if __name__ == "__main__":
    key = jax.random.PRNGKey(0)
    ks = jax.random.split(key, 16)

    # ---- 1. Pallas-path SelfAttention (N = 256) vs. reference ---------------
    B, C, W, H = 4, 64, 16, 16
    Cq = C // 8
    x = jax.random.normal(ks[0], (B, C, W, H), jnp.float32)
    wq = jax.random.normal(ks[1], (Cq, C), jnp.float32) * 0.1
    bq = jax.random.normal(ks[2], (Cq,), jnp.float32) * 0.1
    wk = jax.random.normal(ks[3], (Cq, C), jnp.float32) * 0.1
    bk = jax.random.normal(ks[4], (Cq,), jnp.float32) * 0.1
    wv = jax.random.normal(ks[5], (C, C), jnp.float32) * 0.1
    bv = jax.random.normal(ks[6], (C,), jnp.float32) * 0.1
    gamma = jnp.float32(0.5)   # PyTorch inits gamma to 0; nonzero exercises path

    ref = self_attention_ref(x, wq, bq, wk, bk, wv, bv, gamma)
    out = jax.block_until_ready(self_attention(x, wq, bq, wk, bk, wv, bv, gamma))
    assert out.shape == (B, C, W, H)
    # Tolerance covers MXU-vs-XLA f32 matmul pass differences on real TPUs.
    assert jnp.allclose(out, ref, atol=2e-2, rtol=2e-2), "pallas kernel mismatch"

    # ---- 2. Small-N fallback path (N = 64 < 128) vs. reference --------------
    B2, C2, W2, H2 = 2, 128, 8, 8
    Cq2 = C2 // 8
    x2 = jax.random.normal(ks[7], (B2, C2, W2, H2), jnp.float32)
    wq2 = jax.random.normal(ks[8], (Cq2, C2), jnp.float32) * 0.05
    bq2 = jax.random.normal(ks[9], (Cq2,), jnp.float32) * 0.05
    wk2 = jax.random.normal(ks[10], (Cq2, C2), jnp.float32) * 0.05
    bk2 = jax.random.normal(ks[11], (Cq2,), jnp.float32) * 0.05
    wv2 = jax.random.normal(ks[12], (C2, C2), jnp.float32) * 0.05
    bv2 = jax.random.normal(ks[13], (C2,), jnp.float32) * 0.05
    ref2 = self_attention_ref(x2, wq2, bq2, wk2, bk2, wv2, bv2, gamma)
    out2 = jax.block_until_ready(
        self_attention(x2, wq2, bq2, wk2, bk2, wv2, bv2, gamma))
    assert jnp.allclose(out2, ref2, atol=2e-2, rtol=2e-2), "fallback mismatch"

    # ---- 3. Full Autoencoder forward ----------------------------------------
    def _attn_params(k, c):
        kk = jax.random.split(k, 3)
        return (jax.random.normal(kk[0], (c // 8, c), jnp.float32) * 0.05,
                jnp.zeros((c // 8,), jnp.float32),
                jax.random.normal(kk[1], (c // 8, c), jnp.float32) * 0.05,
                jnp.zeros((c // 8,), jnp.float32),
                jax.random.normal(kk[2], (c, c), jnp.float32) * 0.05,
                jnp.zeros((c,), jnp.float32),
                jnp.float32(0.1))   # PyTorch init is 0.0; nonzero exercises path

    kp = jax.random.split(ks[14], 12)
    params = {
        'enc1_w': jax.random.normal(kp[0], (64, 3, 4, 4), jnp.float32) * 0.1,
        'enc1_b': jnp.zeros((64,), jnp.float32),
        'enc2_w': jax.random.normal(kp[1], (128, 64, 4, 4), jnp.float32) * 0.05,
        'enc2_b': jnp.zeros((128,), jnp.float32),
        'enc3_w': jax.random.normal(kp[2], (256, 128, 4, 4), jnp.float32) * 0.03,
        'enc3_b': jnp.zeros((256,), jnp.float32),
        'attn1': _attn_params(kp[3], 64),
        'attn2': _attn_params(kp[4], 128),
        'attn3': _attn_params(kp[5], 256),
        'dec1_w': jax.random.normal(kp[6], (256, 128, 4, 4), jnp.float32) * 0.03,
        'dec1_b': jnp.zeros((128,), jnp.float32),
        'dec2_w': jax.random.normal(kp[7], (128, 64, 4, 4), jnp.float32) * 0.05,
        'dec2_b': jnp.zeros((64,), jnp.float32),
        'dec3_w': jax.random.normal(kp[8], (64, 3, 4, 4), jnp.float32) * 0.1,
        'dec3_b': jnp.zeros((3,), jnp.float32),
    }

    # 32x32 input -> attn1 sees a 16x16 map (N=256, Pallas path); attn2/attn3
    # see 8x8 / 4x4 maps and take the small-N XLA fallback.
    x_img = jax.random.normal(ks[15], (2, 3, 32, 32), jnp.float32)
    fwd = jax.jit(lambda xx: autoencoder_forward(params, xx))
    y = jax.block_until_ready(fwd(x_img))
    assert y.shape == (2, 3, 32, 32)
    assert bool(jnp.all(jnp.isfinite(y)))

    print("KERNEL_OK")
</pallas_src>

<mosaic_0001>
module attributes {stable_mosaic.version = 11 : i64} {
  func.func @_self_attn_kernel(%arg0: i32, %arg1: memref<4x64x256xf32, #tpu.memory_space<vmem>>, %arg2: memref<80x64xf32, #tpu.memory_space<vmem>>, %arg3: memref<80x1xf32, #tpu.memory_space<vmem>>, %arg4: memref<1xf32, #tpu.memory_space<smem>>, %arg5: memref<4x64x256xf32, #tpu.memory_space<vmem>>) attributes {dimension_semantics = [#tpu.dimension_semantics<parallel>], iteration_bounds = array<i64: 1>, scalar_prefetch = 0 : i64, scratch_operands = 0 : i64, tpu.core_type = #tpu.core_type<tc>, window_params = [{transform_indices = @transform_0, window_bounds = array<i64: 4, 64, 256>}, {pipeline_mode = #tpu.pipeline_mode<synchronous>, transform_indices = @transform_1, window_bounds = array<i64: 80, 64>}, {pipeline_mode = #tpu.pipeline_mode<synchronous>, transform_indices = @transform_2, window_bounds = array<i64: 80, 1>}, {transform_indices = @transform_3, window_bounds = array<i64: 1>}, {transform_indices = @transform_4, window_bounds = array<i64: 4, 64, 256>}]} {
    %c0 = arith.constant 0 : index
    %0 = memref.load %arg4[%c0] : memref<1xf32, #tpu.memory_space<smem>>
    %c0_0 = arith.constant 0 : index
    %c0_1 = arith.constant 0 : index
    %1 = vector.load %arg2[%c0_0, %c0_1] : memref<80x64xf32, #tpu.memory_space<vmem>>, vector<80x64xf32>
    %c0_2 = arith.constant 0 : index
    %c0_3 = arith.constant 0 : index
    %2 = vector.load %arg3[%c0_2, %c0_3] : memref<80x1xf32, #tpu.memory_space<vmem>>, vector<80x1xf32>
    %c0_4 = arith.constant 0 : index
    %c0_5 = arith.constant 0 : index
    %c0_6 = arith.constant 0 : index
    %3 = vector.load %arg1[%c0_4, %c0_5, %c0_6] : memref<4x64x256xf32, #tpu.memory_space<vmem>>, vector<1x64x256xf32>
    %4 = vector.shape_cast %3 : vector<1x64x256xf32> to vector<64x256xf32>
    %cst = arith.constant dense<0.000000e+00> : vector<80x256xf32>
    %5 = tpu.matmul %1, %4, %cst {dimension_numbers = #tpu.dot_dimension_numbers<[1], [0], [0], [1], [0, 0, 1, 1], [], []>} : vector<80x64xf32>, vector<64x256xf32>, vector<80x256xf32> -> vector<80x256xf32>
    %6 = vector.broadcast %2 : vector<80x1xf32> to vector<80x256xf32>
    %7 = arith.addf %5, %6 : vector<80x256xf32>
    %8 = vector.extract_strided_slice %7 {offsets = [0, 0], sizes = [8, 256], strides = [1, 1]} : vector<80x256xf32> to vector<8x256xf32>
    %9 = vector.extract_strided_slice %7 {offsets = [8, 0], sizes = [8, 256], strides = [1, 1]} : vector<80x256xf32> to vector<8x256xf32>
    %10 = vector.extract_strided_slice %7 {offsets = [16, 0], sizes = [64, 256], strides = [1, 1]} : vector<80x256xf32> to vector<64x256xf32>
    %cst_7 = arith.constant dense<0.000000e+00> : vector<256x256xf32>
    %11 = tpu.matmul %8, %9, %cst_7 {dimension_numbers = #tpu.dot_dimension_numbers<[0], [0], [1], [1], [0, 1, 1, 1], [], []>} : vector<8x256xf32>, vector<8x256xf32>, vector<256x256xf32> -> vector<256x256xf32>
    %cst_8 = arith.constant dense<0xFF800000> : vector<256xf32>
    %12 = vector.multi_reduction <maximumf>, %11, %cst_8 [1] : vector<256x256xf32> to vector<256xf32>
    %13 = vector.shape_cast %12 : vector<256xf32> to vector<256x1xf32>
    %14 = vector.broadcast %13 : vector<256x1xf32> to vector<256x256xf32>
    %15 = arith.subf %11, %14 : vector<256x256xf32>
    %16 = math.exp %15 : vector<256x256xf32>
    %cst_9 = arith.constant dense<0.000000e+00> : vector<256xf32>
    %17 = vector.multi_reduction <add>, %16, %cst_9 [1] : vector<256x256xf32> to vector<256xf32>
    %18 = vector.shape_cast %17 : vector<256xf32> to vector<256x1xf32>
    %19 = vector.broadcast %18 : vector<256x1xf32> to vector<256x256xf32>
    %20 = arith.divf %16, %19 : vector<256x256xf32>
    %cst_10 = arith.constant dense<0.000000e+00> : vector<64x256xf32>
    %21 = tpu.matmul %10, %20, %cst_10 {dimension_numbers = #tpu.dot_dimension_numbers<[1], [1], [0], [0], [0, 0, 1, 0], [], []>} : vector<64x256xf32>, vector<256x256xf32>, vector<64x256xf32> -> vector<64x256xf32>
    %22 = vector.broadcast %0 : f32 to vector<64x256xf32>
    %23 = arith.mulf %22, %21 : vector<64x256xf32>
    %c0_11 = arith.constant 0 : index
    %c0_12 = arith.constant 0 : index
    %c0_13 = arith.constant 0 : index
    %24 = vector.load %arg1[%c0_11, %c0_12, %c0_13] : memref<4x64x256xf32, #tpu.memory_space<vmem>>, vector<1x64x256xf32>
    %25 = vector.shape_cast %24 : vector<1x64x256xf32> to vector<64x256xf32>
    %26 = arith.addf %23, %25 : vector<64x256xf32>
    %c0_14 = arith.constant 0 : index
    %c0_15 = arith.constant 0 : index
    %c0_16 = arith.constant 0 : index
    %27 = vector.load %arg5[%c0_14, %c0_15, %c0_16] : memref<4x64x256xf32, #tpu.memory_space<vmem>>, vector<1x64x256xf32>
    %28 = vector.shape_cast %27 : vector<1x64x256xf32> to vector<64x256xf32>
    %29 = vector.shape_cast %26 : vector<64x256xf32> to vector<1x64x256xf32>
    tpu.vector_store %arg5[%c0_14, %c0_15, %c0_16], %29 {strides = array<i32>} : memref<4x64x256xf32, #tpu.memory_space<vmem>>, vector<1x64x256xf32>,
    %c1 = arith.constant 1 : index
    %c0_17 = arith.constant 0 : index
    %c0_18 = arith.constant 0 : index
    %30 = vector.load %arg1[%c1, %c0_17, %c0_18] : memref<4x64x256xf32, #tpu.memory_space<vmem>>, vector<1x64x256xf32>
    %31 = vector.shape_cast %30 : vector<1x64x256xf32> to vector<64x256xf32>
    %cst_19 = arith.constant dense<0.000000e+00> : vector<80x256xf32>
    %32 = tpu.matmul %1, %31, %cst_19 {dimension_numbers = #tpu.dot_dimension_numbers<[1], [0], [0], [1], [0, 0, 1, 1], [], []>} : vector<80x64xf32>, vector<64x256xf32>, vector<80x256xf32> -> vector<80x256xf32>
    %33 = vector.broadcast %2 : vector<80x1xf32> to vector<80x256xf32>
    %34 = arith.addf %32, %33 : vector<80x256xf32>
    %35 = vector.extract_strided_slice %34 {offsets = [0, 0], sizes = [8, 256], strides = [1, 1]} : vector<80x256xf32> to vector<8x256xf32>
    %36 = vector.extract_strided_slice %34 {offsets = [8, 0], sizes = [8, 256], strides = [1, 1]} : vector<80x256xf32> to vector<8x256xf32>
    %37 = vector.extract_strided_slice %34 {offsets = [16, 0], sizes = [64, 256], strides = [1, 1]} : vector<80x256xf32> to vector<64x256xf32>
    %cst_20 = arith.constant dense<0.000000e+00> : vector<256x256xf32>
    %38 = tpu.matmul %35, %36, %cst_20 {dimension_numbers = #tpu.dot_dimension_numbers<[0], [0], [1], [1], [0, 1, 1, 1], [], []>} : vector<8x256xf32>, vector<8x256xf32>, vector<256x256xf32> -> vector<256x256xf32>
    %cst_21 = arith.constant dense<0xFF800000> : vector<256xf32>
    %39 = vector.multi_reduction <maximumf>, %38, %cst_21 [1] : vector<256x256xf32> to vector<256xf32>
    %40 = vector.shape_cast %39 : vector<256xf32> to vector<256x1xf32>
    %41 = vector.broadcast %40 : vector<256x1xf32> to vector<256x256xf32>
    %42 = arith.subf %38, %41 : vector<256x256xf32>
    %43 = math.exp %42 : vector<256x256xf32>
    %cst_22 = arith.constant dense<0.000000e+00> : vector<256xf32>
    %44 = vector.multi_reduction <add>, %43, %cst_22 [1] : vector<256x256xf32> to vector<256xf32>
    %45 = vector.shape_cast %44 : vector<256xf32> to vector<256x1xf32>
    %46 = vector.broadcast %45 : vector<256x1xf32> to vector<256x256xf32>
    %47 = arith.divf %43, %46 : vector<256x256xf32>
    %cst_23 = arith.constant dense<0.000000e+00> : vector<64x256xf32>
    %48 = tpu.matmul %37, %47, %cst_23 {dimension_numbers = #tpu.dot_dimension_numbers<[1], [1], [0], [0], [0, 0, 1, 0], [], []>} : vector<64x256xf32>, vector<256x256xf32>, vector<64x256xf32> -> vector<64x256xf32>
    %49 = vector.broadcast %0 : f32 to vector<64x256xf32>
    %50 = arith.mulf %49, %48 : vector<64x256xf32>
    %c1_24 = arith.constant 1 : index
    %c0_25 = arith.constant 0 : index
    %c0_26 = arith.constant 0 : index
    %51 = vector.load %arg1[%c1_24, %c0_25, %c0_26] : memref<4x64x256xf32, #tpu.memory_space<vmem>>, vector<1x64x256xf32>
    %52 = vector.shape_cast %51 : vector<1x64x256xf32> to vector<64x256xf32>
    %53 = arith.addf %50, %52 : vector<64x256xf32>
    %c1_27 = arith.constant 1 : index
    %c0_28 = arith.constant 0 : index
    %c0_29 = arith.constant 0 : index
    %54 = vector.load %arg5[%c1_27, %c0_28, %c0_29] : memref<4x64x256xf32, #tpu.memory_space<vmem>>, vector<1x64x256xf32>
    %55 = vector.shape_cast %54 : vector<1x64x256xf32> to vector<64x256xf32>
    %56 = vector.shape_cast %53 : vector<64x256xf32> to vector<1x64x256xf32>
    tpu.vector_store %arg5[%c1_27, %c0_28, %c0_29], %56 {strides = array<i32>} : memref<4x64x256xf32, #tpu.memory_space<vmem>>, vector<1x64x256xf32>,
    %c2 = arith.constant 2 : index
    %c0_30 = arith.constant 0 : index
    %c0_31 = arith.constant 0 : index
    %57 = vector.load %arg1[%c2, %c0_30, %c0_31] : memref<4x64x256xf32, #tpu.memory_space<vmem>>, vector<1x64x256xf32>
    %58 = vector.shape_cast %57 : vector<1x64x256xf32> to vector<64x256xf32>
    %cst_32 = arith.constant dense<0.000000e+00> : vector<80x256xf32>
    %59 = tpu.matmul %1, %58, %cst_32 {dimension_numbers = #tpu.dot_dimension_numbers<[1], [0], [0], [1], [0, 0, 1, 1], [], []>} : vector<80x64xf32>, vector<64x256xf32>, vector<80x256xf32> -> vector<80x256xf32>
    %60 = vector.broadcast %2 : vector<80x1xf32> to vector<80x256xf32>
    %61 = arith.addf %59, %60 : vector<80x256xf32>
    %62 = vector.extract_strided_slice %61 {offsets = [0, 0], sizes = [8, 256], strides = [1, 1]} : vector<80x256xf32> to vector<8x256xf32>
    %63 = vector.extract_strided_slice %61 {offsets = [8, 0], sizes = [8, 256], strides = [1, 1]} : vector<80x256xf32> to vector<8x256xf32>
    %64 = vector.extract_strided_slice %61 {offsets = [16, 0], sizes = [64, 256], strides = [1, 1]} : vector<80x256xf32> to vector<64x256xf32>
    %cst_33 = arith.constant dense<0.000000e+00> : vector<256x256xf32>
    %65 = tpu.matmul %62, %63, %cst_33 {dimension_numbers = #tpu.dot_dimension_numbers<[0], [0], [1], [1], [0, 1, 1, 1], [], []>} : vector<8x256xf32>, vector<8x256xf32>, vector<256x256xf32> -> vector<256x256xf32>
    %cst_34 = arith.constant dense<0xFF800000> : vector<256xf32>
    %66 = vector.multi_reduction <maximumf>, %65, %cst_34 [1] : vector<256x256xf32> to vector<256xf32>
    %67 = vector.shape_cast %66 : vector<256xf32> to vector<256x1xf32>
    %68 = vector.broadcast %67 : vector<256x1xf32> to vector<256x256xf32>
    %69 = arith.subf %65, %68 : vector<256x256xf32>
    %70 = math.exp %69 : vector<256x256xf32>
    %cst_35 = arith.constant dense<0.000000e+00> : vector<256xf32>
    %71 = vector.multi_reduction <add>, %70, %cst_35 [1] : vector<256x256xf32> to vector<256xf32>
    %72 = vector.shape_cast %71 : vector<256xf32> to vector<256x1xf32>
    %73 = vector.broadcast %72 : vector<256x1xf32> to vector<256x256xf32>
    %74 = arith.divf %70, %73 : vector<256x256xf32>
    %cst_36 = arith.constant dense<0.000000e+00> : vector<64x256xf32>
    %75 = tpu.matmul %64, %74, %cst_36 {dimension_numbers = #tpu.dot_dimension_numbers<[1], [1], [0], [0], [0, 0, 1, 0], [], []>} : vector<64x256xf32>, vector<256x256xf32>, vector<64x256xf32> -> vector<64x256xf32>
    %76 = vector.broadcast %0 : f32 to vector<64x256xf32>
    %77 = arith.mulf %76, %75 : vector<64x256xf32>
    %c2_37 = arith.constant 2 : index
    %c0_38 = arith.constant 0 : index
    %c0_39 = arith.constant 0 : index
    %78 = vector.load %arg1[%c2_37, %c0_38, %c0_39] : memref<4x64x256xf32, #tpu.memory_space<vmem>>, vector<1x64x256xf32>
    %79 = vector.shape_cast %78 : vector<1x64x256xf32> to vector<64x256xf32>
    %80 = arith.addf %77, %79 : vector<64x256xf32>
    %c2_40 = arith.constant 2 : index
    %c0_41 = arith.constant 0 : index
    %c0_42 = arith.constant 0 : index
    %81 = vector.load %arg5[%c2_40, %c0_41, %c0_42] : memref<4x64x256xf32, #tpu.memory_space<vmem>>, vector<1x64x256xf32>
    %82 = vector.shape_cast %81 : vector<1x64x256xf32> to vector<64x256xf32>
    %83 = vector.shape_cast %80 : vector<64x256xf32> to vector<1x64x256xf32>
    tpu.vector_store %arg5[%c2_40, %c0_41, %c0_42], %83 {strides = array<i32>} : memref<4x64x256xf32, #tpu.memory_space<vmem>>, vector<1x64x256xf32>,
    %c3 = arith.constant 3 : index
    %c0_43 = arith.constant 0 : index
    %c0_44 = arith.constant 0 : index
    %84 = vector.load %arg1[%c3, %c0_43, %c0_44] : memref<4x64x256xf32, #tpu.memory_space<vmem>>, vector<1x64x256xf32>
    %85 = vector.shape_cast %84 : vector<1x64x256xf32> to vector<64x256xf32>
    %cst_45 = arith.constant dense<0.000000e+00> : vector<80x256xf32>
    %86 = tpu.matmul %1, %85, %cst_45 {dimension_numbers = #tpu.dot_dimension_numbers<[1], [0], [0], [1], [0, 0, 1, 1], [], []>} : vector<80x64xf32>, vector<64x256xf32>, vector<80x256xf32> -> vector<80x256xf32>
    %87 = vector.broadcast %2 : vector<80x1xf32> to vector<80x256xf32>
    %88 = arith.addf %86, %87 : vector<80x256xf32>
    %89 = vector.extract_strided_slice %88 {offsets = [0, 0], sizes = [8, 256], strides = [1, 1]} : vector<80x256xf32> to vector<8x256xf32>
    %90 = vector.extract_strided_slice %88 {offsets = [8, 0], sizes = [8, 256], strides = [1, 1]} : vector<80x256xf32> to vector<8x256xf32>
    %91 = vector.extract_strided_slice %88 {offsets = [16, 0], sizes = [64, 256], strides = [1, 1]} : vector<80x256xf32> to vector<64x256xf32>
    %cst_46 = arith.constant dense<0.000000e+00> : vector<256x256xf32>
    %92 = tpu.matmul %89, %90, %cst_46 {dimension_numbers = #tpu.dot_dimension_numbers<[0], [0], [1], [1], [0, 1, 1, 1], [], []>} : vector<8x256xf32>, vector<8x256xf32>, vector<256x256xf32> -> vector<256x256xf32>
    %cst_47 = arith.constant dense<0xFF800000> : vector<256xf32>
    %93 = vector.multi_reduction <maximumf>, %92, %cst_47 [1] : vector<256x256xf32> to vector<256xf32>
    %94 = vector.shape_cast %93 : vector<256xf32> to vector<256x1xf32>
    %95 = vector.broadcast %94 : vector<256x1xf32> to vector<256x256xf32>
    %96 = arith.subf %92, %95 : vector<256x256xf32>
    %97 = math.exp %96 : vector<256x256xf32>
    %cst_48 = arith.constant dense<0.000000e+00> : vector<256xf32>
    %98 = vector.multi_reduction <add>, %97, %cst_48 [1] : vector<256x256xf32> to vector<256xf32>
    %99 = vector.shape_cast %98 : vector<256xf32> to vector<256x1xf32>
    %100 = vector.broadcast %99 : vector<256x1xf32> to vector<256x256xf32>
    %101 = arith.divf %97, %100 : vector<256x256xf32>
    %cst_49 = arith.constant dense<0.000000e+00> : vector<64x256xf32>
    %102 = tpu.matmul %91, %101, %cst_49 {dimension_numbers = #tpu.dot_dimension_numbers<[1], [1], [0], [0], [0, 0, 1, 0], [], []>} : vector<64x256xf32>, vector<256x256xf32>, vector<64x256xf32> -> vector<64x256xf32>
    %103 = vector.broadcast %0 : f32 to vector<64x256xf32>
    %104 = arith.mulf %103, %102 : vector<64x256xf32>
    %c3_50 = arith.constant 3 : index
    %c0_51 = arith.constant 0 : index
    %c0_52 = arith.constant 0 : index
    %105 = vector.load %arg1[%c3_50, %c0_51, %c0_52] : memref<4x64x256xf32, #tpu.memory_space<vmem>>, vector<1x64x256xf32>
    %106 = vector.shape_cast %105 : vector<1x64x256xf32> to vector<64x256xf32>
    %107 = arith.addf %104, %106 : vector<64x256xf32>
    %c3_53 = arith.constant 3 : index
    %c0_54 = arith.constant 0 : index
    %c0_55 = arith.constant 0 : index
    %108 = vector.load %arg5[%c3_53, %c0_54, %c0_55] : memref<4x64x256xf32, #tpu.memory_space<vmem>>, vector<1x64x256xf32>
    %109 = vector.shape_cast %108 : vector<1x64x256xf32> to vector<64x256xf32>
    %110 = vector.shape_cast %107 : vector<64x256xf32> to vector<1x64x256xf32>
    tpu.vector_store %arg5[%c3_53, %c0_54, %c0_55], %110 {strides = array<i32>} : memref<4x64x256xf32, #tpu.memory_space<vmem>>, vector<1x64x256xf32>,
    return
  }
  func.func @transform_0(%arg0: i32) -> (i32, i32, i32) {
    %c0_i32 = arith.constant 0 : i32
    %c0_i32_0 = arith.constant 0 : i32
    %c0_i32_1 = arith.constant 0 : i32
    return %arg0, %c0_i32, %c0_i32_0 : i32, i32, i32
  }
  func.func @transform_1(%arg0: i32) -> (i32, i32) {
    %c0_i32 = arith.constant 0 : i32
    %c0_i32_0 = arith.constant 0 : i32
    %c0_i32_1 = arith.constant 0 : i32
    return %c0_i32, %c0_i32_0 : i32, i32
  }
  func.func @transform_2(%arg0: i32) -> (i32, i32) {
    %c0_i32 = arith.constant 0 : i32
    %c0_i32_0 = arith.constant 0 : i32
    %c0_i32_1 = arith.constant 0 : i32
    return %c0_i32, %c0_i32_0 : i32, i32
  }
  func.func @transform_3(%arg0: i32) -> i32 {
    %c0_i32 = arith.constant 0 : i32
    %c0_i32_0 = arith.constant 0 : i32
    return %c0_i32 : i32
  }
  func.func @transform_4(%arg0: i32) -> (i32, i32, i32) {
    %c0_i32 = arith.constant 0 : i32
    %c0_i32_0 = arith.constant 0 : i32
    %c0_i32_1 = arith.constant 0 : i32
    return %arg0, %c0_i32, %c0_i32_0 : i32, i32, i32
  }
}

</mosaic_0001>

<llo_original>
// kernel: tpu_custom_call.1
$region0: #{tpu_custom_call.1}
  #allocation0 [shape = 'u32[]', space=smem, size = 0x4, offset = 0x4, fixed_abs, tag = 'smem constant byte address 0x4 - core index']
  #allocation1 [shape = 'u32[144,128]{1,0:T(1,128)}', space=vmem, size = 0x12000, scoped, tag = 'internal scratch']
  #allocation2 [shape = 'f32[1]{0:T(128)S(6)}', space=smem, size = 0x200, scoped, tag = 'scoped memory for tpu_custom_call.1']
  %s0 = inlined_call_operand.hbm [shape: f32[4,64,256], index: 0, kind: input, shape index: {}]
  %s1 = inlined_call_operand.vmem [shape: f32[80,64], index: 1, kind: input, shape index: {}]
  %s2 = inlined_call_operand.vmem [shape: f32[80,1], index: 2, kind: input, shape index: {}]
  %s3 = inlined_call_operand.<no memory space> [shape: f32[1], index: 3, kind: input, shape index: {}]
  %s4 = inlined_call_operand.hbm [shape: f32[4,64,256], index: 4, kind: output, shape index: {}]
  %s5 = sld [smem:[#allocation0]]
  $region30: #{tpu_custom_call.1} parent=0
    _
  %s7 = ssub.s32 1, %s5
  %s8 = scalar_select 0, %s7, %s5
  %9 = sst [smem:[#allocation2]] %s3
  $region1: #{tpu_custom_call.1} parent=0
    #allocation3 [shape = 'u8[262144]{0}', space=vmem, size = 0x40000, scoped, tag = 'input window, operand 0, single buffered']
    #allocation4 [shape = 's32[1]{0}', space=sflag, size = 0x4, scoped, tag = 'scoped memory for tpu_custom_call.1']
    #allocation5 [shape = 's32[1]{0}', space=sflag, size = 0x4, scoped, tag = 'scoped memory for tpu_custom_call.1']
    #allocation6 [shape = 'u8[262144]{0}', space=vmem, size = 0x40000, scoped, tag = 'output window, operand 0, single buffered']
    %10 = vsyncpa [#allocation4], 0
    %11 = vsyncpa [#allocation5], 0
    // Predicated region
    $region2: #{tpu_custom_call.1} parent=1 // pred_check
      _
    $region3: #{tpu_custom_call.1} parent=1 // pred_check_branch
      %13 = sbr.rel (0) target = $region5
    $region4: #{tpu_custom_call.1} parent=1 // pred_region
      %s15 = ssub.s32 8192, 8192
      %16 = vsyncadd [#allocation4], %s15
      %s17 = sshll.u32 [#allocation3], 4
      %s18 = int_to_ptr.vmem [resolvable:$true] %s17
      %23 = dma.hbm_to_vmem [thread:$0]  %s0, 8192, %s18, [#allocation4], 256, 256, 16
    $region5: #{tpu_custom_call.1} parent=1 // pred_fallthru
      _
    // Predicated region
    $region6: #{tpu_custom_call.1} parent=1 // pred_check
      _
    $region7: #{tpu_custom_call.1} parent=1 // pred_check_branch
      %25 = sbr.rel (0) target = $region9
    $region8: #{tpu_custom_call.1} parent=1 // pred_region
      _
    $region9: #{tpu_custom_call.1} parent=1 // pred_fallthru
      _
    // Predicated region
    $region10: #{tpu_custom_call.1} parent=1 // pred_check
      _
    $region11: #{tpu_custom_call.1} parent=1 // pred_check_branch
      %27 = sbr.rel (0) target = $region13
    $region12: #{tpu_custom_call.1} parent=1 // pred_region
      _
    $region13: #{tpu_custom_call.1} parent=1 // pred_fallthru
      _
    // Predicated region
    $region14: #{tpu_custom_call.1} parent=1 // pred_check
      _
    $region15: #{tpu_custom_call.1} parent=1 // pred_check_branch
      %29 = sbr.rel (0) target = $region17
    $region16: #{tpu_custom_call.1} parent=1 // pred_region
      _
    $region17: #{tpu_custom_call.1} parent=1 // pred_fallthru
      _
    // Predicated region
    $region18: #{tpu_custom_call.1} parent=1 // pred_check
      _
    $region19: #{tpu_custom_call.1} parent=1 // pred_check_branch
      %31 = sbr.rel (0) target = $region21
    $region20: #{tpu_custom_call.1} parent=1 // pred_region
      %32 = dma.done [#allocation4], 8192
    $region21: #{tpu_custom_call.1} parent=1 // pred_fallthru
      _
    %s33 = sld [smem:[#allocation2]]
    %v34 = vld [vmem:[%s1] sm:$0xff]
    %v35 = vld [vmem:[%s1 + $0x8] sm:$0xff]
    %v36 = vld [vmem:[%s1 + $0x10] sm:$0xff]
    %v37 = vld [vmem:[%s1 + $0x18] sm:$0xff]
    %v38 = vld [vmem:[%s1 + $0x20] sm:$0xff]
    %v39 = vld [vmem:[%s1 + $0x28] sm:$0xff]
    %v40 = vld [vmem:[%s1 + $0x30] sm:$0xff]
    %v41 = vld [vmem:[%s1 + $0x38] sm:$0xff]
    %v42 = vld [vmem:[%s1 + $0x40] sm:$0xff]
    %v43 = vld [vmem:[%s1 + $0x48] sm:$0xff]
    %v44 = vld [vmem:[%s2] sm:$0xff]
    %v45 = vld [vmem:[%s2 + $0x8] sm:$0xff]
    %v46 = vld [vmem:[%s2 + $0x10] sm:$0xff]
    %v47 = vld [vmem:[%s2 + $0x18] sm:$0xff]
    %v48 = vld [vmem:[%s2 + $0x20] sm:$0xff]
    %v49 = vld [vmem:[%s2 + $0x28] sm:$0xff]
    %v50 = vld [vmem:[%s2 + $0x30] sm:$0xff]
    %v51 = vld [vmem:[%s2 + $0x38] sm:$0xff]
    %v52 = vld [vmem:[%s2 + $0x40] sm:$0xff]
    %v53 = vld [vmem:[%s2 + $0x48] sm:$0xff]
    %v54 = vld [vmem:[#allocation3] sm:$0xff]
    %v55 = vld [vmem:[#allocation3 + $0x8] sm:$0xff]
    %v56 = vld [vmem:[#allocation3 + $0x10] sm:$0xff]
    %v57 = vld [vmem:[#allocation3 + $0x18] sm:$0xff]
    %v58 = vld [vmem:[#allocation3 + $0x20] sm:$0xff]
    %v59 = vld [vmem:[#allocation3 + $0x28] sm:$0xff]
    %v60 = vld [vmem:[#allocation3 + $0x30] sm:$0xff]
    %v61 = vld [vmem:[#allocation3 + $0x38] sm:$0xff]
    %v62 = vld [vmem:[#allocation3 + $0x40] sm:$0xff]
    %v63 = vld [vmem:[#allocation3 + $0x48] sm:$0xff]
    %v64 = vld [vmem:[#allocation3 + $0x50] sm:$0xff]
    %v65 = vld [vmem:[#allocation3 + $0x58] sm:$0xff]
    %v66 = vld [vmem:[#allocation3 + $0x60] sm:$0xff]
    %v67 = vld [vmem:[#allocation3 + $0x68] sm:$0xff]
    %v68 = vld [vmem:[#allocation3 + $0x70] sm:$0xff]
    %v69 = vld [vmem:[#allocation3 + $0x78] sm:$0xff]
    %71 = vset.pattern.permute.xlu0 0
    %72 = vperm.xlu0 %71, %v44
    %v73 = vpop.permute.xlu0 %72
    %76 = vset.pattern.permute.xlu0 0
    %77 = vperm.xlu0 %76, %v45
    %v78 = vpop.permute.xlu0 %77
    %81 = vset.pattern.permute.xlu0 0
    %82 = vperm.xlu0 %81, %v46
    %v83 = vpop.permute.xlu0 %82
    %86 = vset.pattern.permute.xlu0 0
    %87 = vperm.xlu0 %86, %v47
    %v88 = vpop.permute.xlu0 %87
    %91 = vset.pattern.permute.xlu0 0
    %92 = vperm.xlu0 %91, %v48
    %v93 = vpop.permute.xlu0 %92
    %96 = vset.pattern.permute.xlu0 0
    %97 = vperm.xlu0 %96, %v49
    %v98 = vpop.permute.xlu0 %97
    %101 = vset.pattern.permute.xlu0 0
    %102 = vperm.xlu0 %101, %v50
    %v103 = vpop.permute.xlu0 %102
    %106 = vset.pattern.permute.xlu0 0
    %107 = vperm.xlu0 %106, %v51
    %v108 = vpop.permute.xlu0 %107
    %111 = vset.pattern.permute.xlu0 0
    %112 = vperm.xlu0 %111, %v52
    %v113 = vpop.permute.xlu0 %112
    %116 = vset.pattern.permute.xlu0 0
    %117 = vperm.xlu0 %116, %v53
    %v118 = vpop.permute.xlu0 %117
    %vm120 = vcmask 523264
    %v122 = vsel %vm120, %v34, 0
    %v125 = vsel %vm120, %v35, 0
    %v128 = vsel %vm120, %v36, 0
    %v131 = vsel %vm120, %v37, 0
    %v134 = vsel %vm120, %v38, 0
    %v137 = vsel %vm120, %v39, 0
    %v140 = vsel %vm120, %v40, 0
    %v143 = vsel %vm120, %v41, 0
    %v146 = vsel %vm120, %v42, 0
    %v149 = vsel %vm120, %v43, 0
    %151 = vmatprep.subr.mxu0 %v55
    %152 = vmatpush1.msra.mxu0 %v54
    %153 = vmatprep.subr.mxu0 %v57
    %154 = vmatpush1.msra.mxu0 %v56
    %155 = vmatprep.subr.mxu0 %v59
    %156 = vmatpush1.msra.mxu0 %v58
    %157 = vmatprep.subr.mxu0 %v61
    %158 = vmatpush1.msra.mxu0 %v60
    %159 = vmatprep.subr.mxu0 %v63
    %160 = vmatpush1.msra.mxu0 %v62
    %161 = vmatprep.subr.mxu0 %v65
    %162 = vmatpush1.msra.mxu0 %v64
    %163 = vmatprep.subr.mxu0 %v67
    %164 = vmatpush1.msra.mxu0 %v66
    %165 = vmatprep.subr.mxu0 %v69
    %166 = vmatpush1.msra.mxu0 %v68
    %167 = vmatprep.subr.mxu0 0.0
    %168 = vmatpush1.msra.mxu0 0.0
    %169 = vmatprep.subr.mxu0 0.0
    %170 = vmatpush1.msra.mxu0 0.0
    %171 = vmatprep.subr.mxu0 0.0
    %172 = vmatpush1.msra.mxu0 0.0
    %173 = vmatprep.subr.mxu0 0.0
    %174 = vmatpush1.msra.mxu0 0.0
    %175 = vmatprep.subr.mxu0 0.0
    %176 = vmatpush1.msra.mxu0 0.0
    %177 = vmatprep.subr.mxu0 0.0
    %178 = vmatpush1.msra.mxu0 0.0
    %179 = vmatprep.subr.mxu0 0.0
    %180 = vmatpush1.msra.mxu0 0.0
    %181 = vmatprep.subr.mxu0 0.0
    %182 = vmatpush1.msra.mxu0 0.0
    %183 = vmatprep.subr.mxu0 0.0
    %184 = vmatpush1.msra.mxu0 0.0
    %185 = vmatprep.subr.mxu0 0.0
    %186 = vmatpush1.msra.mxu0 0.0
    %187 = vmatprep.subr.mxu0 0.0
    %188 = vmatpush1.msra.mxu0 0.0
    %189 = vmatprep.subr.mxu0 0.0
    %190 = vmatpush1.msra.mxu0 0.0
    %191 = vmatprep.subr.mxu0 0.0
    %192 = vmatpush1.msra.mxu0 0.0
    %193 = vmatprep.subr.mxu0 0.0
    %194 = vmatpush1.msra.mxu0 0.0
    %195 = vmatprep.subr.mxu0 0.0
    %196 = vmatpush1.msra.mxu0 0.0
    %197 = vmatprep.subr.mxu0 0.0
    %198 = vmatpush1.msra.mxu0 0.0
    %199 = vmatprep.subr.mxu0 0.0
    %200 = vmatpush1.msra.mxu0 0.0
    %201 = vmatprep.subr.mxu0 0.0
    %202 = vmatpush1.msra.mxu0 0.0
    %203 = vmatprep.subr.mxu0 0.0
    %204 = vmatpush1.msra.mxu0 0.0
    %205 = vmatprep.subr.mxu0 0.0
    %206 = vmatpush1.msra.mxu0 0.0
    %207 = vmatprep.subr.mxu0 0.0
    %208 = vmatpush1.msra.mxu0 0.0
    %209 = vmatprep.subr.mxu0 0.0
    %210 = vmatpush1.msra.mxu0 0.0
    %211 = vmatprep.subr.mxu0 0.0
    %212 = vmatpush1.msra.mxu0 0.0
    %213 = vmatprep.subr.mxu0 0.0
    %214 = vmatpush1.msra.mxu0 0.0
    %215 = vmatprep.mubr.f32.mxu0 0.0
    %216 = vmatmul.mubr.f32.gmra.mrb[0].mxu0 %v122
    %v217 = vpop.f32.mrb[0].mxu0
    %v218 = vadd.f32 %v73, %v217
    %v219 = vpop.f32.mrb[0].mxu0
    %v220 = vadd.f32 %v73, %v219
    %221 = vmatprep.mubr.f32.mxu0 0.0
    %222 = vmatmul.mubr.f32.gmra.mrb[0].mxu0 %v125
    %v223 = vpop.f32.mrb[0].mxu0
    %v224 = vadd.f32 %v78, %v223
    %v225 = vpop.f32.mrb[0].mxu0
    %v226 = vadd.f32 %v78, %v225
    %227 = vmatprep.mubr.f32.mxu0 0.0
    %228 = vmatmul.mubr.f32.gmra.mrb[0].mxu0 %v128
    %v229 = vpop.f32.mrb[0].mxu0
    %v230 = vadd.f32 %v83, %v229
    %v231 = vpop.f32.mrb[0].mxu0
    %v232 = vadd.f32 %v83, %v231
    %233 = vmatprep.mubr.f32.mxu0 0.0
    %234 = vmatmul.mubr.f32.gmra.mrb[0].mxu0 %v131
    %v235 = vpop.f32.mrb[0].mxu0
    %v236 = vadd.f32 %v88, %v235
    %v237 = vpop.f32.mrb[0].mxu0
    %v238 = vadd.f32 %v88, %v237
    %239 = vmatprep.mubr.f32.mxu0 0.0
    %240 = vmatmul.mubr.f32.gmra.mrb[0].mxu0 %v134
    %v241 = vpop.f32.mrb[0].mxu0
    %v242 = vadd.f32 %v93, %v241
    %v243 = vpop.f32.mrb[0].mxu0
    %v244 = vadd.f32 %v93, %v243
    %245 = vmatprep.mubr.f32.mxu0 0.0
    %246 = vmatmul.mubr.f32.gmra.mrb[0].mxu0 %v137
    %v247 = vpop.f32.mrb[0].mxu0
    %v248 = vadd.f32 %v98, %v247
    %v249 = vpop.f32.mrb[0].mxu0
    %v250 = vadd.f32 %v98, %v249
    %251 = vmatprep.mubr.f32.mxu0 0.0
    %252 = vmatmul.mubr.f32.gmra.mrb[0].mxu0 %v140
    %v253 = vpop.f32.mrb[0].mxu0
    %v254 = vadd.f32 %v103, %v253
    %v255 = vpop.f32.mrb[0].mxu0
    %v256 = vadd.f32 %v103, %v255
    %257 = vmatprep.mubr.f32.mxu0 0.0
    %258 = vmatmul.mubr.f32.gmra.mrb[0].mxu0 %v143
    %v259 = vpop.f32.mrb[0].mxu0
    %v260 = vadd.f32 %v108, %v259
    %v261 = vpop.f32.mrb[0].mxu0
    %v262 = vadd.f32 %v108, %v261
    %263 = vmatprep.mubr.f32.mxu0 0.0
    %264 = vmatmul.mubr.f32.gmra.mrb[0].mxu0 %v146
    %v265 = vpop.f32.mrb[0].mxu0
    %v266 = vadd.f32 %v113, %v265
    %v267 = vpop.f32.mrb[0].mxu0
    %v268 = vadd.f32 %v113, %v267
    %269 = vmatprep.mubr.f32.mxu0 0.0
    %270 = vmatmul.mubr.f32.gmra.mrb[0].mxu0 %v149
    %v271 = vpop.f32.mrb[0].mxu0
    %v272 = vadd.f32 %v118, %v271
    %v273 = vpop.f32.mrb[0].mxu0
    %v274 = vadd.f32 %v118, %v273
    %275 = vdwg.mxu0
    %276 = vxpose.xlu0.b32.start [1/16] %v218, 128
    %277 = vxpose.xlu0.b32.cont [2/16] 0.0, 128
    %278 = vxpose.xlu0.b32.cont [3/16] 0.0, 128
    %279 = vxpose.xlu0.b32.cont [4/16] 0.0, 128
    %280 = vxpose.xlu0.b32.cont [5/16] 0.0, 128
    %281 = vxpose.xlu0.b32.cont [6/16] 0.0, 128
    %282 = vxpose.xlu0.b32.cont [7/16] 0.0, 128
    %283 = vxpose.xlu0.b32.cont [8/16] 0.0, 128
    %284 = vxpose.xlu0.b32.cont [9/16] 0.0, 128
    %285 = vxpose.xlu0.b32.cont [10/16] 0.0, 128
    %286 = vxpose.xlu0.b32.cont [11/16] 0.0, 128
    %287 = vxpose.xlu0.b32.cont [12/16] 0.0, 128
    %288 = vxpose.xlu0.b32.cont [13/16] 0.0, 128
    %289 = vxpose.xlu0.b32.cont [14/16] 0.0, 128
    %290 = vxpose.xlu0.b32.cont [15/16] 0.0, 128
    %291 = vxpose.xlu0.b32.end [16/16] 0.0, 128
    %v292 = vpop.trf.xlu0
    %v293 = vpop.trf.xlu0
    %v294 = vpop.trf.xlu0
    %v295 = vpop.trf.xlu0
    %v296 = vpop.trf.xlu0
    %v297 = vpop.trf.xlu0
    %v298 = vpop.trf.xlu0
    %v299 = vpop.trf.xlu0
    %v300 = vpop.trf.xlu0
    %v301 = vpop.trf.xlu0
    %v302 = vpop.trf.xlu0
    %v303 = vpop.trf.xlu0
    %v304 = vpop.trf.xlu0
    %v305 = vpop.trf.xlu0
    %v306 = vpop.trf.xlu0
    %v307 = vpop.trf.xlu0
    %308 = vxpose.xlu0.b32.start [1/16] %v220, 128
    %309 = vxpose.xlu0.b32.cont [2/16] 0.0, 128
    %310 = vxpose.xlu0.b32.cont [3/16] 0.0, 128
    %311 = vxpose.xlu0.b32.cont [4/16] 0.0, 128
    %312 = vxpose.xlu0.b32.cont [5/16] 0.0, 128
    %313 = vxpose.xlu0.b32.cont [6/16] 0.0, 128
    %314 = vxpose.xlu0.b32.cont [7/16] 0.0, 128
    %315 = vxpose.xlu0.b32.cont [8/16] 0.0, 128
    %316 = vxpose.xlu0.b32.cont [9/16] 0.0, 128
    %317 = vxpose.xlu0.b32.cont [10/16] 0.0, 128
    %318 = vxpose.xlu0.b32.cont [11/16] 0.0, 128
    %319 = vxpose.xlu0.b32.cont [12/16] 0.0, 128
    %320 = vxpose.xlu0.b32.cont [13/16] 0.0, 128
    %321 = vxpose.xlu0.b32.cont [14/16] 0.0, 128
    %322 = vxpose.xlu0.b32.cont [15/16] 0.0, 128
    %323 = vxpose.xlu0.b32.end [16/16] 0.0, 128
    %v324 = vpop.trf.xlu0
    %v325 = vpop.trf.xlu0
    %v326 = vpop.trf.xlu0
    %v327 = vpop.trf.xlu0
    %v328 = vpop.trf.xlu0
    %v329 = vpop.trf.xlu0
    %v330 = vpop.trf.xlu0
    %v331 = vpop.trf.xlu0
    %v332 = vpop.trf.xlu0
    %v333 = vpop.trf.xlu0
    %v334 = vpop.trf.xlu0
    %v335 = vpop.trf.xlu0
    %v336 = vpop.trf.xlu0
    %v337 = vpop.trf.xlu0
    %v338 = vpop.trf.xlu0
    %v339 = vpop.trf.xlu0
    %vm340 = vcmask 64512
    %v342 = vsel %vm340, %v292, 0
    %v345 = vsel %vm340, %v293, 0
    %v348 = vsel %vm340, %v294, 0
    %v351 = vsel %vm340, %v295, 0
    %v354 = vsel %vm340, %v296, 0
    %v357 = vsel %vm340, %v297, 0
    %v360 = vsel %vm340, %v298, 0
    %v363 = vsel %vm340, %v299, 0
    %v366 = vsel %vm340, %v300, 0
    %v369 = vsel %vm340, %v301, 0
    %v372 = vsel %vm340, %v302, 0
    %v375 = vsel %vm340, %v303, 0
    %v378 = vsel %vm340, %v304, 0
    %v381 = vsel %vm340, %v305, 0
    %v384 = vsel %vm340, %v306, 0
    %v387 = vsel %vm340, %v307, 0
    %v390 = vsel %vm340, %v324, 0
    %v393 = vsel %vm340, %v325, 0
    %v396 = vsel %vm340, %v326, 0
    %v399 = vsel %vm340, %v327, 0
    %v402 = vsel %vm340, %v328, 0
    %v405 = vsel %vm340, %v329, 0
    %v408 = vsel %vm340, %v330, 0
    %v411 = vsel %vm340, %v331, 0
    %v414 = vsel %vm340, %v332, 0
    %v417 = vsel %vm340, %v333, 0
    %v420 = vsel %vm340, %v334, 0
    %v423 = vsel %vm340, %v335, 0
    %v426 = vsel %vm340, %v336, 0
    %v429 = vsel %vm340, %v337, 0
    %v432 = vsel %vm340, %v338, 0
    %v435 = vsel %vm340, %v339, 0
    %437 = vmatprep.subr.mxu0 %v226
    %438 = vmatpush1.msra.mxu0 %v224
    %439 = vmatprep.subr.mxu0 0.0
    %440 = vmatpush1.msra.mxu0 0.0
    %441 = vmatprep.subr.mxu0 0.0
    %442 = vmatpush1.msra.mxu0 0.0
    %443 = vmatprep.subr.mxu0 0.0
    %444 = vmatpush1.msra.mxu0 0.0
    %445 = vmatprep.subr.mxu0 0.0
    %446 = vmatpush1.msra.mxu0 0.0
    %447 = vmatprep.subr.mxu0 0.0
    %448 = vmatpush1.msra.mxu0 0.0
    %449 = vmatprep.subr.mxu0 0.0
    %450 = vmatpush1.msra.mxu0 0.0
    %451 = vmatprep.subr.mxu0 0.0
    %452 = vmatpush1.msra.mxu0 0.0
    %453 = vmatprep.subr.mxu0 0.0
    %454 = vmatpush1.msra.mxu0 0.0
    %455 = vmatprep.subr.mxu0 0.0
    %456 = vmatpush1.msra.mxu0 0.0
    %457 = vmatprep.subr.mxu0 0.0
    %458 = vmatpush1.msra.mxu0 0.0
    %459 = vmatprep.subr.mxu0 0.0
    %460 = vmatpush1.msra.mxu0 0.0
    %461 = vmatprep.subr.mxu0 0.0
    %462 = vmatpush1.msra.mxu0 0.0
    %463 = vmatprep.subr.mxu0 0.0
    %464 = vmatpush1.msra.mxu0 0.0
    %465 = vmatprep.subr.mxu0 0.0
    %466 = vmatpush1.msra.mxu0 0.0
    %467 = vmatprep.subr.mxu0 0.0
    %468 = vmatpush1.msra.mxu0 0.0
    %469 = vmatprep.subr.mxu0 0.0
    %470 = vmatpush1.msra.mxu0 0.0
    %471 = vmatprep.subr.mxu0 0.0
    %472 = vmatpush1.msra.mxu0 0.0
    %473 = vmatprep.subr.mxu0 0.0
    %474 = vmatpush1.msra.mxu0 0.0
    %475 = vmatprep.subr.mxu0 0.0
    %476 = vmatpush1.msra.mxu0 0.0
    %477 = vmatprep.subr.mxu0 0.0
    %478 = vmatpush1.msra.mxu0 0.0
    %479 = vmatprep.subr.mxu0 0.0
    %480 = vmatpush1.msra.mxu0 0.0
    %481 = vmatprep.subr.mxu0 0.0
    %482 = vmatpush1.msra.mxu0 0.0
    %483 = vmatprep.subr.mxu0 0.0
    %484 = vmatpush1.msra.mxu0 0.0
    %485 = vmatprep.subr.mxu0 0.0
    %486 = vmatpush1.msra.mxu0 0.0
    %487 = vmatprep.subr.mxu0 0.0
    %488 = vmatpush1.msra.mxu0 0.0
    %489 = vmatprep.subr.mxu0 0.0
    %490 = vmatpush1.msra.mxu0 0.0
    %491 = vmatprep.subr.mxu0 0.0
    %492 = vmatpush1.msra.mxu0 0.0
    %493 = vmatprep.subr.mxu0 0.0
    %494 = vmatpush1.msra.mxu0 0.0
    %495 = vmatprep.subr.mxu0 0.0
    %496 = vmatpush1.msra.mxu0 0.0
    %497 = vmatprep.subr.mxu0 0.0
    %498 = vmatpush1.msra.mxu0 0.0
    %499 = vmatprep.subr.mxu0 0.0
    %500 = vmatpush1.msra.mxu0 0.0
    %501 = vmatprep.mubr.f32.mxu0 0.0
    %502 = vmatmul.mubr.f32.gmra.mrb[0].mxu0 %v342
    %v503 = vpop.f32.mrb[0].mxu0
    %v504 = vadd.f32 0.0, %v503
    %v505 = vpop.f32.mrb[0].mxu0
    %v506 = vadd.f32 0.0, %v505
    %507 = vmatprep.mubr.f32.mxu0 0.0
    %508 = vmatmul.mubr.f32.gmra.mrb[0].mxu0 %v345
    %v509 = vpop.f32.mrb[0].mxu0
    %v510 = vadd.f32 0.0, %v509
    %v511 = vpop.f32.mrb[0].mxu0
    %v512 = vadd.f32 0.0, %v511
    %513 = vmatprep.mubr.f32.mxu0 0.0
    %514 = vmatmul.mubr.f32.gmra.mrb[0].mxu0 %v348
    %v515 = vpop.f32.mrb[0].mxu0
    %v516 = vadd.f32 0.0, %v515
    %v517 = vpop.f32.mrb[0].mxu0
    %v518 = vadd.f32 0.0, %v517
    %519 = vmatprep.mubr.f32.mxu0 0.0
    %520 = vmatmul.mubr.f32.gmra.mrb[0].mxu0 %v351
    %v521 = vpop.f32.mrb[0].mxu0
    %v522 = vadd.f32 0.0, %v521
    %v523 = vpop.f32.mrb[0].mxu0
    %v524 = vadd.f32 0.0, %v523
    %525 = vmatprep.mubr.f32.mxu0 0.0
    %526 = vmatmul.mubr.f32.gmra.mrb[0].mxu0 %v354
    %v527 = vpop.f32.mrb[0].mxu0
    %v528 = vadd.f32 0.0, %v527
    %v529 = vpop.f32.mrb[0].mxu0
    %v530 = vadd.f32 0.0, %v529
    %531 = vmatprep.mubr.f32.mxu0 0.0
    %532 = vmatmul.mubr.f32.gmra.mrb[0].mxu0 %v357
    %v533 = vpop.f32.mrb[0].mxu0
    %v534 = vadd.f32 0.0, %v533
    %v535 = vpop.f32.mrb[0].mxu0
    %v536 = vadd.f32 0.0, %v535
    %537 = vmatprep.mubr.f32.mxu0 0.0
    %538 = vmatmul.mubr.f32.gmra.mrb[0].mxu0 %v360
    %v539 = vpop.f32.mrb[0].mxu0
    %v540 = vadd.f32 0.0, %v539
    %v541 = vpop.f32.mrb[0].mxu0
    %v542 = vadd.f32 0.0, %v541
    %543 = vmatprep.mubr.f32.mxu0 0.0
    %544 = vmatmul.mubr.f32.gmra.mrb[0].mxu0 %v363
    %v545 = vpop.f32.mrb[0].mxu0
    %v546 = vadd.f32 0.0, %v545
    %v547 = vpop.f32.mrb[0].mxu0
    %v548 = vadd.f32 0.0, %v547
    %549 = vmatprep.mubr.f32.mxu0 0.0
    %550 = vmatmul.mubr.f32.gmra.mrb[0].mxu0 %v366
    %v551 = vpop.f32.mrb[0].mxu0
    %v552 = vadd.f32 0.0, %v551
    %v553 = vpop.f32.mrb[0].mxu0
    %v554 = vadd.f32 0.0, %v553
    %555 = vmatprep.mubr.f32.mxu0 0.0
    %556 = vmatmul.mubr.f32.gmra.mrb[0].mxu0 %v369
    %v557 = vpop.f32.mrb[0].mxu0
    %v558 = vadd.f32 0.0, %v557
    %v559 = vpop.f32.mrb[0].mxu0
    %v560 = vadd.f32 0.0, %v559
    %561 = vmatprep.mubr.f32.mxu0 0.0
    %562 = vmatmul.mubr.f32.gmra.mrb[0].mxu0 %v372
    %v563 = vpop.f32.mrb[0].mxu0
    %v564 = vadd.f32 0.0, %v563
    %v565 = vpop.f32.mrb[0].mxu0
    %v566 = vadd.f32 0.0, %v565
    %567 = vmatprep.mubr.f32.mxu0 0.0
    %568 = vmatmul.mubr.f32.gmra.mrb[0].mxu0 %v375
    %v569 = vpop.f32.mrb[0].mxu0
    %v570 = vadd.f32 0.0, %v569
    %v571 = vpop.f32.mrb[0].mxu0
    %v572 = vadd.f32 0.0, %v571
    %573 = vmatprep.mubr.f32.mxu0 0.0
    %574 = vmatmul.mubr.f32.gmra.mrb[0].mxu0 %v378
    %v575 = vpop.f32.mrb[0].mxu0
    %v576 = vadd.f32 0.0, %v575
    %v577 = vpop.f32.mrb[0].mxu0
    %v578 = vadd.f32 0.0, %v577
    %579 = vmatprep.mubr.f32.mxu0 0.0
    %580 = vmatmul.mubr.f32.gmra.mrb[0].mxu0 %v381
    %v581 = vpop.f32.mrb[0].mxu0
    %v582 = vadd.f32 0.0, %v581
    %v583 = vpop.f32.mrb[0].mxu0
    %v584 = vadd.f32 0.0, %v583
    %585 = vmatprep.mubr.f32.mxu0 0.0
    %586 = vmatmul.mubr.f32.gmra.mrb[0].mxu0 %v384
    %v587 = vpop.f32.mrb[0].mxu0
    %v588 = vadd.f32 0.0, %v587
    %v589 = vpop.f32.mrb[0].mxu0
    %v590 = vadd.f32 0.0, %v589
    %591 = vmatprep.mubr.f32.mxu0 0.0
    %592 = vmatmul.mubr.f32.gmra.mrb[0].mxu0 %v387
    %v593 = vpop.f32.mrb[0].mxu0
    %v594 = vadd.f32 0.0, %v593
    %v595 = vpop.f32.mrb[0].mxu0
    %v596 = vadd.f32 0.0, %v595
    %597 = vmatprep.mubr.f32.mxu0 0.0
    %598 = vmatmul.mubr.f32.gmra.mrb[0].mxu0 %v390
    %v599 = vpop.f32.mrb[0].mxu0
    %v600 = vadd.f32 0.0, %v599
    %v601 = vpop.f32.mrb[0].mxu0
    %v602 = vadd.f32 0.0, %v601
    %603 = vmatprep.mubr.f32.mxu0 0.0
    %604 = vmatmul.mubr.f32.gmra.mrb[0].mxu0 %v393
    %v605 = vpop.f32.mrb[0].mxu0
    %v606 = vadd.f32 0.0, %v605
    %v607 = vpop.f32.mrb[0].mxu0
    %v608 = vadd.f32 0.0, %v607
    %609 = vmatprep.mubr.f32.mxu0 0.0
    %610 = vmatmul.mubr.f32.gmra.mrb[0].mxu0 %v396
    %v611 = vpop.f32.mrb[0].mxu0
    %v612 = vadd.f32 0.0, %v611
    %v613 = vpop.f32.mrb[0].mxu0
    %v614 = vadd.f32 0.0, %v613
    %615 = vmatprep.mubr.f32.mxu0 0.0
    %616 = vmatmul.mubr.f32.gmra.mrb[0].mxu0 %v399
    %v617 = vpop.f32.mrb[0].mxu0
    %v618 = vadd.f32 0.0, %v617
    %v619 = vpop.f32.mrb[0].mxu0
    %v620 = vadd.f32 0.0, %v619
    %621 = vmatprep.mubr.f32.mxu0 0.0
    %622 = vmatmul.mubr.f32.gmra.mrb[0].mxu0 %v402
    %v623 = vpop.f32.mrb[0].mxu0
    %v624 = vadd.f32 0.0, %v623
    %v625 = vpop.f32.mrb[0].mxu0
    %v626 = vadd.f32 0.0, %v625
    %627 = vmatprep.mubr.f32.mxu0 0.0
    %628 = vmatmul.mubr.f32.gmra.mrb[0].mxu0 %v405
    %v629 = vpop.f32.mrb[0].mxu0
    %v630 = vadd.f32 0.0, %v629
    %v631 = vpop.f32.mrb[0].mxu0
    %v632 = vadd.f32 0.0, %v631
    %633 = vmatprep.mubr.f32.mxu0 0.0
    %634 = vmatmul.mubr.f32.gmra.mrb[0].mxu0 %v408
    %v635 = vpop.f32.mrb[0].mxu0
    %v636 = vadd.f32 0.0, %v635
    %v637 = vpop.f32.mrb[0].mxu0
    %v638 = vadd.f32 0.0, %v637
    %639 = vmatprep.mubr.f32.mxu0 0.0
    %640 = vmatmul.mubr.f32.gmra.mrb[0].mxu0 %v411
    %v641 = vpop.f32.mrb[0].mxu0
    %v642 = vadd.f32 0.0, %v641
    %v643 = vpop.f32.mrb[0].mxu0
    %v644 = vadd.f32 0.0, %v643
    %645 = vmatprep.mubr.f32.mxu0 0.0
    %646 = vmatmul.mubr.f32.gmra.mrb[0].mxu0 %v414
    %v647 = vpop.f32.mrb[0].mxu0
    %v648 = vadd.f32 0.0, %v647
    %v649 = vpop.f32.mrb[0].mxu0
    %v650 = vadd.f32 0.0, %v649
    %651 = vmatprep.mubr.f32.mxu0 0.0
    %652 = vmatmul.mubr.f32.gmra.mrb[0].mxu0 %v417
    %v653 = vpop.f32.mrb[0].mxu0
    %v654 = vadd.f32 0.0, %v653
    %v655 = vpop.f32.mrb[0].mxu0
    %v656 = vadd.f32 0.0, %v655
    %657 = vmatprep.mubr.f32.mxu0 0.0
    %658 = vmatmul.mubr.f32.gmra.mrb[0].mxu0 %v420
    %v659 = vpop.f32.mrb[0].mxu0
    %v660 = vadd.f32 0.0, %v659
    %v661 = vpop.f32.mrb[0].mxu0
    %v662 = vadd.f32 0.0, %v661
    %663 = vmatprep.mubr.f32.mxu0 0.0
    %664 = vmatmul.mubr.f32.gmra.mrb[0].mxu0 %v423
    %v665 = vpop.f32.mrb[0].mxu0
    %v666 = vadd.f32 0.0, %v665
    %v667 = vpop.f32.mrb[0].mxu0
    %v668 = vadd.f32 0.0, %v667
    %669 = vmatprep.mubr.f32.mxu0 0.0
    %670 = vmatmul.mubr.f32.gmra.mrb[0].mxu0 %v426
    %v671 = vpop.f32.mrb[0].mxu0
    %v672 = vadd.f32 0.0, %v671
    %v673 = vpop.f32.mrb[0].mxu0
    %v674 = vadd.f32 0.0, %v673
    %675 = vmatprep.mubr.f32.mxu0 0.0
    %676 = vmatmul.mubr.f32.gmra.mrb[0].mxu0 %v429
    %v677 = vpop.f32.mrb[0].mxu0
    %v678 = vadd.f32 0.0, %v677
    %v679 = vpop.f32.mrb[0].mxu0
    %v680 = vadd.f32 0.0, %v679
    %681 = vmatprep.mubr.f32.mxu0 0.0
    %682 = vmatmul.mubr.f32.gmra.mrb[0].mxu0 %v432
    %v683 = vpop.f32.mrb[0].mxu0
    %v684 = vadd.f32 0.0, %v683
    %v685 = vpop.f32.mrb[0].mxu0
    %v686 = vadd.f32 0.0, %v685
    %687 = vmatprep.mubr.f32.mxu0 0.0
    %688 = vmatmul.mubr.f32.gmra.mrb[0].mxu0 %v435
    %v689 = vpop.f32.mrb[0].mxu0
    %v690 = vadd.f32 0.0, %v689
    %v691 = vpop.f32.mrb[0].mxu0
    %v692 = vadd.f32 0.0, %v691
    %693 = vdwg.mxu0
    %v694 = vmax.f32 %v504, %v506
    %695 = vmax.xlane.f32.xlu0 %v694
    %v696 = vpop.xlane.xlu0 %695
    %v697 = vmax.f32 %v510, %v512
    %698 = vmax.xlane.f32.xlu0 %v697
    %v699 = vpop.xlane.xlu0 %698
    %v700 = vmax.f32 %v516, %v518
    %701 = vmax.xlane.f32.xlu0 %v700
    %v702 = vpop.xlane.xlu0 %701
    %v703 = vmax.f32 %v522, %v524
    %704 = vmax.xlane.f32.xlu0 %v703
    %v705 = vpop.xlane.xlu0 %704
    %v706 = vmax.f32 %v528, %v530
    %707 = vmax.xlane.f32.xlu0 %v706
    %v708 = vpop.xlane.xlu0 %707
    %v709 = vmax.f32 %v534, %v536
    %710 = vmax.xlane.f32.xlu0 %v709
    %v711 = vpop.xlane.xlu0 %710
    %v712 = vmax.f32 %v540, %v542
    %713 = vmax.xlane.f32.xlu0 %v712
    %v714 = vpop.xlane.xlu0 %713
    %v715 = vmax.f32 %v546, %v548
    %716 = vmax.xlane.f32.xlu0 %v715
    %v717 = vpop.xlane.xlu0 %716
    %v718 = vmax.f32 %v552, %v554
    %719 = vmax.xlane.f32.xlu0 %v718
    %v720 = vpop.xlane.xlu0 %719
    %v721 = vmax.f32 %v558, %v560
    %722 = vmax.xlane.f32.xlu0 %v721
    %v723 = vpop.xlane.xlu0 %722
    %v724 = vmax.f32 %v564, %v566
    %725 = vmax.xlane.f32.xlu0 %v724
    %v726 = vpop.xlane.xlu0 %725
    %v727 = vmax.f32 %v570, %v572
    %728 = vmax.xlane.f32.xlu0 %v727
    %v729 = vpop.xlane.xlu0 %728
    %v730 = vmax.f32 %v576, %v578
    %731 = vmax.xlane.f32.xlu0 %v730
    %v732 = vpop.xlane.xlu0 %731
    %v733 = vmax.f32 %v582, %v584
    %734 = vmax.xlane.f32.xlu0 %v733
    %v735 = vpop.xlane.xlu0 %734
    %v736 = vmax.f32 %v588, %v590
    %737 = vmax.xlane.f32.xlu0 %v736
    %v738 = vpop.xlane.xlu0 %737
    %v739 = vmax.f32 %v594, %v596
    %740 = vmax.xlane.f32.xlu0 %v739
    %v741 = vpop.xlane.xlu0 %740
    %v742 = vmax.f32 %v600, %v602
    %743 = vmax.xlane.f32.xlu0 %v742
    %v744 = vpop.xlane.xlu0 %743
    %v745 = vmax.f32 %v606, %v608
    %746 = vmax.xlane.f32.xlu0 %v745
    %v747 = vpop.xlane.xlu0 %746
    %v748 = vmax.f32 %v612, %v614
    %749 = vmax.xlane.f32.xlu0 %v748
    %v750 = vpop.xlane.xlu0 %749
    %v751 = vmax.f32 %v618, %v620
    %752 = vmax.xlane.f32.xlu0 %v751
    %v753 = vpop.xlane.xlu0 %752
    %v754 = vmax.f32 %v624, %v626
    %755 = vmax.xlane.f32.xlu0 %v754
    %v756 = vpop.xlane.xlu0 %755
    %v757 = vmax.f32 %v630, %v632
    %758 = vmax.xlane.f32.xlu0 %v757
    %v759 = vpop.xlane.xlu0 %758
    %v760 = vmax.f32 %v636, %v638
    %761 = vmax.xlane.f32.xlu0 %v760
    %v762 = vpop.xlane.xlu0 %761
    %v763 = vmax.f32 %v642, %v644
    %764 = vmax.xlane.f32.xlu0 %v763
    %v765 = vpop.xlane.xlu0 %764
    %v766 = vmax.f32 %v648, %v650
    %767 = vmax.xlane.f32.xlu0 %v766
    %v768 = vpop.xlane.xlu0 %767
    %v769 = vmax.f32 %v654, %v656
    %770 = vmax.xlane.f32.xlu0 %v769
    %v771 = vpop.xlane.xlu0 %770
    %v772 = vmax.f32 %v660, %v662
    %773 = vmax.xlane.f32.xlu0 %v772
    %v774 = vpop.xlane.xlu0 %773
    %v775 = vmax.f32 %v666, %v668
    %776 = vmax.xlane.f32.xlu0 %v775
    %v777 = vpop.xlane.xlu0 %776
    %v778 = vmax.f32 %v672, %v674
    %779 = vmax.xlane.f32.xlu0 %v778
    %v780 = vpop.xlane.xlu0 %779
    %v781 = vmax.f32 %v678, %v680
    %782 = vmax.xlane.f32.xlu0 %v781
    %v783 = vpop.xlane.xlu0 %782
    %v784 = vmax.f32 %v684, %v686
    %785 = vmax.xlane.f32.xlu0 %v784
    %v786 = vpop.xlane.xlu0 %785
    %v787 = vmax.f32 %v690, %v692
    %788 = vmax.xlane.f32.xlu0 %v787
    %v789 = vpop.xlane.xlu0 %788
    %v790 = vsub.f32 %v504, %v696
    %v791 = vsub.f32 %v506, %v696
    %v792 = vsub.f32 %v510, %v699
    %v793 = vsub.f32 %v512, %v699
    %v794 = vsub.f32 %v516, %v702
    %v795 = vsub.f32 %v518, %v702
    %v796 = vsub.f32 %v522, %v705
    %v797 = vsub.f32 %v524, %v705
    %v798 = vsub.f32 %v528, %v708
    %v799 = vsub.f32 %v530, %v708
    %v800 = vsub.f32 %v534, %v711
    %v801 = vsub.f32 %v536, %v711
    %v802 = vsub.f32 %v540, %v714
    %v803 = vsub.f32 %v542, %v714
    %v804 = vsub.f32 %v546, %v717
    %v805 = vsub.f32 %v548, %v717
    %v806 = vsub.f32 %v552, %v720
    %v807 = vsub.f32 %v554, %v720
    %v808 = vsub.f32 %v558, %v723
    %v809 = vsub.f32 %v560, %v723
    %v810 = vsub.f32 %v564, %v726
    %v811 = vsub.f32 %v566, %v726
    %v812 = vsub.f32 %v570, %v729
    %v813 = vsub.f32 %v572, %v729
    %v814 = vsub.f32 %v576, %v732
    %v815 = vsub.f32 %v578, %v732
    %v816 = vsub.f32 %v582, %v735
    %v817 = vsub.f32 %v584, %v735
    %v818 = vsub.f32 %v588, %v738
    %v819 = vsub.f32 %v590, %v738
    %v820 = vsub.f32 %v594, %v741
    %v821 = vsub.f32 %v596, %v741
    %v822 = vsub.f32 %v600, %v744
    %v823 = vsub.f32 %v602, %v744
    %v824 = vsub.f32 %v606, %v747
    %v825 = vsub.f32 %v608, %v747
    %v826 = vsub.f32 %v612, %v750
    %v827 = vsub.f32 %v614, %v750
    %v828 = vsub.f32 %v618, %v753
    %v829 = vsub.f32 %v620, %v753
    %v830 = vsub.f32 %v624, %v756
    %v831 = vsub.f32 %v626, %v756
    %v832 = vsub.f32 %v630, %v759
    %v833 = vsub.f32 %v632, %v759
    %v834 = vsub.f32 %v636, %v762
    %v835 = vsub.f32 %v638, %v762
    %v836 = vsub.f32 %v642, %v765
    %v837 = vsub.f32 %v644, %v765
    %v838 = vsub.f32 %v648, %v768
    %v839 = vsub.f32 %v650, %v768
    %v840 = vsub.f32 %v654, %v771
    %v841 = vsub.f32 %v656, %v771
    %v842 = vsub.f32 %v660, %v774
    %v843 = vsub.f32 %v662, %v774
    %v844 = vsub.f32 %v666, %v777
    %v845 = vsub.f32 %v668, %v777
    %v846 = vsub.f32 %v672, %v780
    %v847 = vsub.f32 %v674, %v780
    %v848 = vsub.f32 %v678, %v783
    %v849 = vsub.f32 %v680, %v783
    %v850 = vsub.f32 %v684, %v786
    %v851 = vsub.f32 %v686, %v786
    %v852 = vsub.f32 %v690, %v789
    %v853 = vsub.f32 %v692, %v789
    %v854 = vmul.f32 %v790, 1.442695
    %v855 = vpow.pop %v854
    %v856 = vmul.f32 %v791, 1.442695
    %v857 = vpow.pop %v856
    %v858 = vmul.f32 %v792, 1.442695
    %v859 = vpow.pop %v858
    %v860 = vmul.f32 %v793, 1.442695
    %v861 = vpow.pop %v860
    %v862 = vmul.f32 %v794, 1.442695
    %v863 = vpow.pop %v862
    %v864 = vmul.f32 %v795, 1.442695
    %v865 = vpow.pop %v864
    %v866 = vmul.f32 %v796, 1.442695
    %v867 = vpow.pop %v866
    %v868 = vmul.f32 %v797, 1.442695
    %v869 = vpow.pop %v868
    %v870 = vmul.f32 %v798, 1.442695
    %v871 = vpow.pop %v870
    %v872 = vmul.f32 %v799, 1.442695
    %v873 = vpow.pop %v872
    %v874 = vmul.f32 %v800, 1.442695
    %v875 = vpow.pop %v874
    %v876 = vmul.f32 %v801, 1.442695
    %v877 = vpow.pop %v876
    %v878 = vmul.f32 %v802, 1.442695
    %v879 = vpow.pop %v878
    %v880 = vmul.f32 %v803, 1.442695
    %v881 = vpow.pop %v880
    %v882 = vmul.f32 %v804, 1.442695
    %v883 = vpow.pop %v882
    %v884 = vmul.f32 %v805, 1.442695
    %v885 = vpow.pop %v884
    %v886 = vmul.f32 %v806, 1.442695
    %v887 = vpow.pop %v886
    %v888 = vmul.f32 %v807, 1.442695
    %v889 = vpow.pop %v888
    %v890 = vmul.f32 %v808, 1.442695
    %v891 = vpow.pop %v890
    %v892 = vmul.f32 %v809, 1.442695
    %v893 = vpow.pop %v892
    %v894 = vmul.f32 %v810, 1.442695
    %v895 = vpow.pop %v894
    %v896 = vmul.f32 %v811, 1.442695
    %v897 = vpow.pop %v896
    %v898 = vmul.f32 %v812, 1.442695
    %v899 = vpow.pop %v898
    %v900 = vmul.f32 %v813, 1.442695
    %v901 = vpow.pop %v900
    %v902 = vmul.f32 %v814, 1.442695
    %v903 = vpow.pop %v902
    %v904 = vmul.f32 %v815, 1.442695
    %v905 = vpow.pop %v904
    %v906 = vmul.f32 %v816, 1.442695
    %v907 = vpow.pop %v906
    %v908 = vmul.f32 %v817, 1.442695
    %v909 = vpow.pop %v908
    %v910 = vmul.f32 %v818, 1.442695
    %v911 = vpow.pop %v910
    %v912 = vmul.f32 %v819, 1.442695
    %v913 = vpow.pop %v912
    %v914 = vmul.f32 %v820, 1.442695
    %v915 = vpow.pop %v914
    %v916 = vmul.f32 %v821, 1.442695
    %v917 = vpow.pop %v916
    %v918 = vmul.f32 %v822, 1.442695
    %v919 = vpow.pop %v918
    %v920 = vmul.f32 %v823, 1.442695
    %v921 = vpow.pop %v920
    %v922 = vmul.f32 %v824, 1.442695
    %v923 = vpow.pop %v922
    %v924 = vmul.f32 %v825, 1.442695
    %v925 = vpow.pop %v924
    %v926 = vmul.f32 %v826, 1.442695
    %v927 = vpow.pop %v926
    %v928 = vmul.f32 %v827, 1.442695
    %v929 = vpow.pop %v928
    %v930 = vmul.f32 %v828, 1.442695
    %v931 = vpow.pop %v930
    %v932 = vmul.f32 %v829, 1.442695
    %v933 = vpow.pop %v932
    %v934 = vmul.f32 %v830, 1.442695
    %v935 = vpow.pop %v934
    %v936 = vmul.f32 %v831, 1.442695
    %v937 = vpow.pop %v936
    %v938 = vmul.f32 %v832, 1.442695
    %v939 = vpow.pop %v938
    %v940 = vmul.f32 %v833, 1.442695
    %v941 = vpow.pop %v940
    %v942 = vmul.f32 %v834, 1.442695
    %v943 = vpow.pop %v942
    %v944 = vmul.f32 %v835, 1.442695
    %v945 = vpow.pop %v944
    %v946 = vmul.f32 %v836, 1.442695
    %v947 = vpow.pop %v946
    %v948 = vmul.f32 %v837, 1.442695
    %v949 = vpow.pop %v948
    %v950 = vmul.f32 %v838, 1.442695
    %v951 = vpow.pop %v950
    %v952 = vmul.f32 %v839, 1.442695
    %v953 = vpow.pop %v952
    %v954 = vmul.f32 %v840, 1.442695
    %v955 = vpow.pop %v954
    %v956 = vmul.f32 %v841, 1.442695
    %v957 = vpow.pop %v956
    %v958 = vmul.f32 %v842, 1.442695
    %v959 = vpow.pop %v958
    %v960 = vmul.f32 %v843, 1.442695
    %v961 = vpow.pop %v960
    %v962 = vmul.f32 %v844, 1.442695
    %v963 = vpow.pop %v962
    %v964 = vmul.f32 %v845, 1.442695
    %v965 = vpow.pop %v964
    %v966 = vmul.f32 %v846, 1.442695
    %v967 = vpow.pop %v966
    %v968 = vmul.f32 %v847, 1.442695
    %v969 = vpow.pop %v968
    %v970 = vmul.f32 %v848, 1.442695
    %v971 = vpow.pop %v970
    %v972 = vmul.f32 %v849, 1.442695
    %v973 = vpow.pop %v972
    %v974 = vmul.f32 %v850, 1.442695
    %v975 = vpow.pop %v974
    %v976 = vmul.f32 %v851, 1.442695
    %v977 = vpow.pop %v976
    %v978 = vmul.f32 %v852, 1.442695
    %v979 = vpow.pop %v978
    %v980 = vmul.f32 %v853, 1.442695
    %v981 = vpow.pop %v980
    %v982 = vadd.f32 %v855, %v857
    %983 = vadd.xlane.f32.xlu0 %v982
    %v984 = vpop.xlane.xlu0 %983
    %v985 = vadd.f32 %v859, %v861
    %986 = vadd.xlane.f32.xlu0 %v985
    %v987 = vpop.xlane.xlu0 %986
    %v988 = vadd.f32 %v863, %v865
    %989 = vadd.xlane.f32.xlu0 %v988
    %v990 = vpop.xlane.xlu0 %989
    %v991 = vadd.f32 %v867, %v869
    %992 = vadd.xlane.f32.xlu0 %v991
    %v993 = vpop.xlane.xlu0 %992
    %v994 = vadd.f32 %v871, %v873
    %995 = vadd.xlane.f32.xlu0 %v994
    %v996 = vpop.xlane.xlu0 %995
    %v997 = vadd.f32 %v875, %v877
    %998 = vadd.xlane.f32.xlu0 %v997
    %v999 = vpop.xlane.xlu0 %998
    %v1000 = vadd.f32 %v879, %v881
    %1001 = vadd.xlane.f32.xlu0 %v1000
    %v1002 = vpop.xlane.xlu0 %1001
    %v1003 = vadd.f32 %v883, %v885
    %1004 = vadd.xlane.f32.xlu0 %v1003
    %v1005 = vpop.xlane.xlu0 %1004
    %v1006 = vadd.f32 %v887, %v889
    %1007 = vadd.xlane.f32.xlu0 %v1006
    %v1008 = vpop.xlane.xlu0 %1007
    %v1009 = vadd.f32 %v891, %v893
    %1010 = vadd.xlane.f32.xlu0 %v1009
    %v1011 = vpop.xlane.xlu0 %1010
    %v1012 = vadd.f32 %v895, %v897
    %1013 = vadd.xlane.f32.xlu0 %v1012
    %v1014 = vpop.xlane.xlu0 %1013
    %v1015 = vadd.f32 %v899, %v901
    %1016 = vadd.xlane.f32.xlu0 %v1015
    %v1017 = vpop.xlane.xlu0 %1016
    %v1018 = vadd.f32 %v903, %v905
    %1019 = vadd.xlane.f32.xlu0 %v1018
    %v1020 = vpop.xlane.xlu0 %1019
    %v1021 = vadd.f32 %v907, %v909
    %1022 = vadd.xlane.f32.xlu0 %v1021
    %v1023 = vpop.xlane.xlu0 %1022
    %v1024 = vadd.f32 %v911, %v913
    %1025 = vadd.xlane.f32.xlu0 %v1024
    %v1026 = vpop.xlane.xlu0 %1025
    %v1027 = vadd.f32 %v915, %v917
    %1028 = vadd.xlane.f32.xlu0 %v1027
    %v1029 = vpop.xlane.xlu0 %1028
    %v1030 = vadd.f32 %v919, %v921
    %1031 = vadd.xlane.f32.xlu0 %v1030
    %v1032 = vpop.xlane.xlu0 %1031
    %v1033 = vadd.f32 %v923, %v925
    %1034 = vadd.xlane.f32.xlu0 %v1033
    %v1035 = vpop.xlane.xlu0 %1034
    %v1036 = vadd.f32 %v927, %v929
    %1037 = vadd.xlane.f32.xlu0 %v1036
    %v1038 = vpop.xlane.xlu0 %1037
    %v1039 = vadd.f32 %v931, %v933
    %1040 = vadd.xlane.f32.xlu0 %v1039
    %v1041 = vpop.xlane.xlu0 %1040
    %v1042 = vadd.f32 %v935, %v937
    %1043 = vadd.xlane.f32.xlu0 %v1042
    %v1044 = vpop.xlane.xlu0 %1043
    %v1045 = vadd.f32 %v939, %v941
    %1046 = vadd.xlane.f32.xlu0 %v1045
    %v1047 = vpop.xlane.xlu0 %1046
    %v1048 = vadd.f32 %v943, %v945
    %1049 = vadd.xlane.f32.xlu0 %v1048
    %v1050 = vpop.xlane.xlu0 %1049
    %v1051 = vadd.f32 %v947, %v949
    %1052 = vadd.xlane.f32.xlu0 %v1051
    %v1053 = vpop.xlane.xlu0 %1052
    %v1054 = vadd.f32 %v951, %v953
    %1055 = vadd.xlane.f32.xlu0 %v1054
    %v1056 = vpop.xlane.xlu0 %1055
    %v1057 = vadd.f32 %v955, %v957
    %1058 = vadd.xlane.f32.xlu0 %v1057
    %v1059 = vpop.xlane.xlu0 %1058
    %v1060 = vadd.f32 %v959, %v961
    %1061 = vadd.xlane.f32.xlu0 %v1060
    %v1062 = vpop.xlane.xlu0 %1061
    %v1063 = vadd.f32 %v963, %v965
    %1064 = vadd.xlane.f32.xlu0 %v1063
    %v1065 = vpop.xlane.xlu0 %1064
    %v1066 = vadd.f32 %v967, %v969
    %1067 = vadd.xlane.f32.xlu0 %v1066
    %v1068 = vpop.xlane.xlu0 %1067
    %v1069 = vadd.f32 %v971, %v973
    %1070 = vadd.xlane.f32.xlu0 %v1069
    %v1071 = vpop.xlane.xlu0 %1070
    %v1072 = vadd.f32 %v975, %v977
    %1073 = vadd.xlane.f32.xlu0 %v1072
    %v1074 = vpop.xlane.xlu0 %1073
    %v1075 = vadd.f32 %v979, %v981
    %1076 = vadd.xlane.f32.xlu0 %v1075
    %v1077 = vpop.xlane.xlu0 %1076
    %v1078 = vrcp.pop %v984
    %v1079 = vmul.f32 %v855, %v1078
    %v1080 = vmul.f32 %v857, %v1078
    %v1081 = vrcp.pop %v987
    %v1082 = vmul.f32 %v859, %v1081
    %v1083 = vmul.f32 %v861, %v1081
    %v1084 = vrcp.pop %v990
    %v1085 = vmul.f32 %v863, %v1084
    %v1086 = vmul.f32 %v865, %v1084
    %v1087 = vrcp.pop %v993
    %v1088 = vmul.f32 %v867, %v1087
    %v1089 = vmul.f32 %v869, %v1087
    %v1090 = vrcp.pop %v996
    %v1091 = vmul.f32 %v871, %v1090
    %v1092 = vmul.f32 %v873, %v1090
    %v1093 = vrcp.pop %v999
    %v1094 = vmul.f32 %v875, %v1093
    %v1095 = vmul.f32 %v877, %v1093
    %v1096 = vrcp.pop %v1002
    %v1097 = vmul.f32 %v879, %v1096
    %v1098 = vmul.f32 %v881, %v1096
    %v1099 = vrcp.pop %v1005
    %v1100 = vmul.f32 %v883, %v1099
    %v1101 = vmul.f32 %v885, %v1099
    %v1102 = vrcp.pop %v1008
    %v1103 = vmul.f32 %v887, %v1102
    %v1104 = vmul.f32 %v889, %v1102
    %v1105 = vrcp.pop %v1011
    %v1106 = vmul.f32 %v891, %v1105
    %v1107 = vmul.f32 %v893, %v1105
    %v1108 = vrcp.pop %v1014
    %v1109 = vmul.f32 %v895, %v1108
    %v1110 = vmul.f32 %v897, %v1108
    %v1111 = vrcp.pop %v1017
    %v1112 = vmul.f32 %v899, %v1111
    %v1113 = vmul.f32 %v901, %v1111
    %v1114 = vrcp.pop %v1020
    %v1115 = vmul.f32 %v903, %v1114
    %v1116 = vmul.f32 %v905, %v1114
    %v1117 = vrcp.pop %v1023
    %v1118 = vmul.f32 %v907, %v1117
    %v1119 = vmul.f32 %v909, %v1117
    %v1120 = vrcp.pop %v1026
    %v1121 = vmul.f32 %v911, %v1120
    %v1122 = vmul.f32 %v913, %v1120
    %v1123 = vrcp.pop %v1029
    %v1124 = vmul.f32 %v915, %v1123
    %v1125 = vmul.f32 %v917, %v1123
    %v1126 = vrcp.pop %v1032
    %v1127 = vmul.f32 %v919, %v1126
    %v1128 = vmul.f32 %v921, %v1126
    %v1129 = vrcp.pop %v1035
    %v1130 = vmul.f32 %v923, %v1129
    %v1131 = vmul.f32 %v925, %v1129
    %v1132 = vrcp.pop %v1038
    %v1133 = vmul.f32 %v927, %v1132
    %v1134 = vmul.f32 %v929, %v1132
    %v1135 = vrcp.pop %v1041
    %v1136 = vmul.f32 %v931, %v1135
    %v1137 = vmul.f32 %v933, %v1135
    %v1138 = vrcp.pop %v1044
    %v1139 = vmul.f32 %v935, %v1138
    %v1140 = vmul.f32 %v937, %v1138
    %v1141 = vrcp.pop %v1047
    %v1142 = vmul.f32 %v939, %v1141
    %v1143 = vmul.f32 %v941, %v1141
    %v1144 = vrcp.pop %v1050
    %v1145 = vmul.f32 %v943, %v1144
    %v1146 = vmul.f32 %v945, %v1144
    %v1147 = vrcp.pop %v1053
    %v1148 = vmul.f32 %v947, %v1147
    %v1149 = vmul.f32 %v949, %v1147
    %v1150 = vrcp.pop %v1056
    %v1151 = vmul.f32 %v951, %v1150
    %v1152 = vmul.f32 %v953, %v1150
    %v1153 = vrcp.pop %v1059
    %v1154 = vmul.f32 %v955, %v1153
    %v1155 = vmul.f32 %v957, %v1153
    %v1156 = vrcp.pop %v1062
    %v1157 = vmul.f32 %v959, %v1156
    %v1158 = vmul.f32 %v961, %v1156
    %v1159 = vrcp.pop %v1065
    %v1160 = vmul.f32 %v963, %v1159
    %v1161 = vmul.f32 %v965, %v1159
    %v1162 = vrcp.pop %v1068
    %v1163 = vmul.f32 %v967, %v1162
    %v1164 = vmul.f32 %v969, %v1162
    %v1165 = vrcp.pop %v1071
    %v1166 = vmul.f32 %v971, %v1165
    %v1167 = vmul.f32 %v973, %v1165
    %v1168 = vrcp.pop %v1074
    %v1169 = vmul.f32 %v975, %v1168
    %v1170 = vmul.f32 %v977, %v1168
    %v1171 = vrcp.pop %v1077
    %v1172 = vmul.f32 %v979, %v1171
    %v1173 = vmul.f32 %v981, %v1171
    %1174 = vmatprep.subr.mxu0 %v1080
    %1175 = vmatpush1.xpose.msra.mxu0 %v1079
    %1176 = vmatprep.subr.mxu0 %v1083
    %1177 = vmatpush1.xpose.msra.mxu0 %v1082
    %1178 = vmatprep.subr.mxu0 %v1086
    %1179 = vmatpush1.xpose.msra.mxu0 %v1085
    %1180 = vmatprep.subr.mxu0 %v1089
    %1181 = vmatpush1.xpose.msra.mxu0 %v1088
    %1182 = vmatprep.subr.mxu0 %v1092
    %1183 = vmatpush1.xpose.msra.mxu0 %v1091
    %1184 = vmatprep.subr.mxu0 %v1095
    %1185 = vmatpush1.xpose.msra.mxu0 %v1094
    %1186 = vmatprep.subr.mxu0 %v1098
    %1187 = vmatpush1.xpose.msra.mxu0 %v1097
    %1188 = vmatprep.subr.mxu0 %v1101
    %1189 = vmatpush1.xpose.msra.mxu0 %v1100
    %1190 = vmatprep.subr.mxu0 %v1104
    %1191 = vmatpush1.xpose.msra.mxu0 %v1103
    %1192 = vmatprep.subr.mxu0 %v1107
    %1193 = vmatpush1.xpose.msra.mxu0 %v1106
    %1194 = vmatprep.subr.mxu0 %v1110
    %1195 = vmatpush1.xpose.msra.mxu0 %v1109
    %1196 = vmatprep.subr.mxu0 %v1113
    %1197 = vmatpush1.xpose.msra.mxu0 %v1112
    %1198 = vmatprep.subr.mxu0 %v1116
    %1199 = vmatpush1.xpose.msra.mxu0 %v1115
    %1200 = vmatprep.subr.mxu0 %v1119
    %1201 = vmatpush1.xpose.msra.mxu0 %v1118
    %1202 = vmatprep.subr.mxu0 %v1122
    %1203 = vmatpush1.xpose.msra.mxu0 %v1121
    %1204 = vmatprep.subr.mxu0 %v1125
    %1205 = vmatpush1.xpose.msra.mxu0 %v1124
    %1206 = vmatprep.subr.mxu0 %v1128
    %1207 = vmatpush1.xpose.msra.mxu0 %v1127
    %1208 = vmatprep.subr.mxu0 %v1131
    %1209 = vmatpush1.xpose.msra.mxu0 %v1130
    %1210 = vmatprep.subr.mxu0 %v1134
    %1211 = vmatpush1.xpose.msra.mxu0 %v1133
    %1212 = vmatprep.subr.mxu0 %v1137
    %1213 = vmatpush1.xpose.msra.mxu0 %v1136
    %1214 = vmatprep.subr.mxu0 %v1140
    %1215 = vmatpush1.xpose.msra.mxu0 %v1139
    %1216 = vmatprep.subr.mxu0 %v1143
    %1217 = vmatpush1.xpose.msra.mxu0 %v1142
    %1218 = vmatprep.subr.mxu0 %v1146
    %1219 = vmatpush1.xpose.msra.mxu0 %v1145
    %1220 = vmatprep.subr.mxu0 %v1149
    %1221 = vmatpush1.xpose.msra.mxu0 %v1148
    %1222 = vmatprep.subr.mxu0 %v1152
    %1223 = vmatpush1.xpose.msra.mxu0 %v1151
    %1224 = vmatprep.subr.mxu0 %v1155
    %1225 = vmatpush1.xpose.msra.mxu0 %v1154
    %1226 = vmatprep.subr.mxu0 %v1158
    %1227 = vmatpush1.xpose.msra.mxu0 %v1157
    %1228 = vmatprep.subr.mxu0 %v1161
    %1229 = vmatpush1.xpose.msra.mxu0 %v1160
    %1230 = vmatprep.subr.mxu0 %v1164
    %1231 = vmatpush1.xpose.msra.mxu0 %v1163
    %1232 = vmatprep.subr.mxu0 %v1167
    %1233 = vmatpush1.xpose.msra.mxu0 %v1166
    %1234 = vmatprep.subr.mxu0 %v1170
    %1235 = vmatpush1.xpose.msra.mxu0 %v1169
    %1236 = vmatprep.subr.mxu0 %v1173
    %1237 = vmatpush1.xpose.msra.mxu0 %v1172
    %1238 = vmatprep.mubr.f32.mxu0 %v232
    %1239 = vmatmul.mubr.f32.gmra.mrb[0].mxu0 %v230
    %v1240 = vpop.f32.mrb[0].mxu0
    %v1241 = vadd.f32 0.0, %v1240
    %v1242 = vpop.f32.mrb[0].mxu0
    %v1243 = vadd.f32 0.0, %v1242
    %1244 = vmatprep.mubr.f32.mxu0 %v238
    %1245 = vmatmul.mubr.f32.gmra.mrb[0].mxu0 %v236
    %v1246 = vpop.f32.mrb[0].mxu0
    %v1247 = vadd.f32 0.0, %v1246
    %v1248 = vpop.f32.mrb[0].mxu0
    %v1249 = vadd.f32 0.0, %v1248
    %1250 = vmatprep.mubr.f32.mxu0 %v244
    %1251 = vmatmul.mubr.f32.gmra.mrb[0].mxu0 %v242
    %v1252 = vpop.f32.mrb[0].mxu0
    %v1253 = vadd.f32 0.0, %v1252
    %v1254 = vpop.f32.mrb[0].mxu0
    %v1255 = vadd.f32 0.0, %v1254
    %1256 = vmatprep.mubr.f32.mxu0 %v250
    %1257 = vmatmul.mubr.f32.gmra.mrb[0].mxu0 %v248
    %v1258 = vpop.f32.mrb[0].mxu0
    %v1259 = vadd.f32 0.0, %v1258
    %v1260 = vpop.f32.mrb[0].mxu0
    %v1261 = vadd.f32 0.0, %v1260
    %1262 = vmatprep.mubr.f32.mxu0 %v256
    %1263 = vmatmul.mubr.f32.gmra.mrb[0].mxu0 %v254
    %v1264 = vpop.f32.mrb[0].mxu0
    %v1265 = vadd.f32 0.0, %v1264
    %v1266 = vpop.f32.mrb[0].mxu0
    %v1267 = vadd.f32 0.0, %v1266
    %1268 = vmatprep.mubr.f32.mxu0 %v262
    %1269 = vmatmul.mubr.f32.gmra.mrb[0].mxu0 %v260
    %v1270 = vpop.f32.mrb[0].mxu0
    %v1271 = vadd.f32 0.0, %v1270
    %v1272 = vpop.f32.mrb[0].mxu0
    %v1273 = vadd.f32 0.0, %v1272
    %1274 = vmatprep.mubr.f32.mxu0 %v268
    %1275 = vmatmul.mubr.f32.gmra.mrb[0].mxu0 %v266
    %v1276 = vpop.f32.mrb[0].mxu0
    %v1277 = vadd.f32 0.0, %v1276
    %v1278 = vpop.f32.mrb[0].mxu0
    %v1279 = vadd.f32 0.0, %v1278
    %1280 = vmatprep.mubr.f32.mxu0 %v274
    %1281 = vmatmul.mubr.f32.gmra.mrb[0].mxu0 %v272
    %v1282 = vpop.f32.mrb[0].mxu0
    %v1283 = vadd.f32 0.0, %v1282
    %v1284 = vpop.f32.mrb[0].mxu0
    %v1285 = vadd.f32 0.0, %v1284
    %1286 = vdwg.mxu0
    %v1287 = vstv %s33
    %v1288 = vmul.f32 %v1287, %v1241
    %v1289 = vmul.f32 %v1287, %v1243
    %v1290 = vmul.f32 %v1287, %v1247
    %v1291 = vmul.f32 %v1287, %v1249
    %v1292 = vmul.f32 %v1287, %v1253
    %v1293 = vmul.f32 %v1287, %v1255
    %v1294 = vmul.f32 %v1287, %v1259
    %v1295 = vmul.f32 %v1287, %v1261
    %v1296 = vmul.f32 %v1287, %v1265
    %v1297 = vmul.f32 %v1287, %v1267
    %v1298 = vmul.f32 %v1287, %v1271
    %v1299 = vmul.f32 %v1287, %v1273
    %v1300 = vmul.f32 %v1287, %v1277
    %v1301 = vmul.f32 %v1287, %v1279
    %v1302 = vmul.f32 %v1287, %v1283
    %v1303 = vmul.f32 %v1287, %v1285
    %v1304 = vadd.f32 %v1288, %v54
    %v1305 = vadd.f32 %v1289, %v55
    %v1306 = vadd.f32 %v1290, %v56
    %v1307 = vadd.f32 %v1291, %v57
    %v1308 = vadd.f32 %v1292, %v58
    %v1309 = vadd.f32 %v1293, %v59
    %v1310 = vadd.f32 %v1294, %v60
    %v1311 = vadd.f32 %v1295, %v61
    %v1312 = vadd.f32 %v1296, %v62
    %v1313 = vadd.f32 %v1297, %v63
    %v1314 = vadd.f32 %v1298, %v64
    %v1315 = vadd.f32 %v1299, %v65
    %v1316 = vadd.f32 %v1300, %v66
    %v1317 = vadd.f32 %v1301, %v67
    %v1318 = vadd.f32 %v1302, %v68
    %v1319 = vadd.f32 %v1303, %v69
    %1320 = vst [vmem:[#allocation6] sm:$0xff] %v1304
    %1321 = vst [vmem:[#allocation6 + $0x8] sm:$0xff] %v1305
    %1322 = vst [vmem:[#allocation6 + $0x10] sm:$0xff] %v1306
    %1323 = vst [vmem:[#allocation6 + $0x18] sm:$0xff] %v1307
    %1324 = vst [vmem:[#allocation6 + $0x20] sm:$0xff] %v1308
    %1325 = vst [vmem:[#allocation6 + $0x28] sm:$0xff] %v1309
    %1326 = vst [vmem:[#allocation6 + $0x30] sm:$0xff] %v1310
    %1327 = vst [vmem:[#allocation6 + $0x38] sm:$0xff] %v1311
    %1328 = vst [vmem:[#allocation6 + $0x40] sm:$0xff] %v1312
    %1329 = vst [vmem:[#allocation6 + $0x48] sm:$0xff] %v1313
    %1330 = vst [vmem:[#allocation6 + $0x50] sm:$0xff] %v1314
    %1331 = vst [vmem:[#allocation6 + $0x58] sm:$0xff] %v1315
    %1332 = vst [vmem:[#allocation6 + $0x60] sm:$0xff] %v1316
    %1333 = vst [vmem:[#allocation6 + $0x68] sm:$0xff] %v1317
    %1334 = vst [vmem:[#allocation6 + $0x70] sm:$0xff] %v1318
    %1335 = vst [vmem:[#allocation6 + $0x78] sm:$0xff] %v1319
    %s1336 = scalar_lea.vmem [#allocation3], 128
    %v1337 = vld [vmem:[%s1336] sm:$0xff]
    %v1338 = vld [vmem:[%s1336 + $0x8] sm:$0xff]
    %v1339 = vld [vmem:[%s1336 + $0x10] sm:$0xff]
    %v1340 = vld [vmem:[%s1336 + $0x18] sm:$0xff]
    %v1341 = vld [vmem:[%s1336 + $0x20] sm:$0xff]
    %v1342 = vld [vmem:[%s1336 + $0x28] sm:$0xff]
    %v1343 = vld [vmem:[%s1336 + $0x30] sm:$0xff]
    %v1344 = vld [vmem:[%s1336 + $0x38] sm:$0xff]
    %v1345 = vld [vmem:[%s1336 + $0x40] sm:$0xff]
    %v1346 = vld [vmem:[%s1336 + $0x48] sm:$0xff]
    %v1347 = vld [vmem:[%s1336 + $0x50] sm:$0xff]
    %v1348 = vld [vmem:[%s1336 + $0x58] sm:$0xff]
    %v1349 = vld [vmem:[%s1336 + $0x60] sm:$0xff]
    %v1350 = vld [vmem:[%s1336 + $0x68] sm:$0xff]
    %v1351 = vld [vmem:[%s1336 + $0x70] sm:$0xff]
    %v1352 = vld [vmem:[%s1336 + $0x78] sm:$0xff]
    %1353 = vmatprep.subr.mxu0 %v1338
    %1354 = vmatpush1.msra.mxu0 %v1337
    %1355 = vmatprep.subr.mxu0 %v1340
    %1356 = vmatpush1.msra.mxu0 %v1339
    %1357 = vmatprep.subr.mxu0 %v1342
    %1358 = vmatpush1.msra.mxu0 %v1341
    %1359 = vmatprep.subr.mxu0 %v1344
    %1360 = vmatpush1.msra.mxu0 %v1343
    %1361 = vmatprep.subr.mxu0 %v1346
    %1362 = vmatpush1.msra.mxu0 %v1345
    %1363 = vmatprep.subr.mxu0 %v1348
    %1364 = vmatpush1.msra.mxu0 %v1347
    %1365 = vmatprep.subr.mxu0 %v1350
    %1366 = vmatpush1.msra.mxu0 %v1349
    %1367 = vmatprep.subr.mxu0 %v1352
    %1368 = vmatpush1.msra.mxu0 %v1351
    %1369 = vmatprep.subr.mxu0 0.0
    %1370 = vmatpush1.msra.mxu0 0.0
    %1371 = vmatprep.subr.mxu0 0.0
    %1372 = vmatpush1.msra.mxu0 0.0
    %1373 = vmatprep.subr.mxu0 0.0
    %1374 = vmatpush1.msra.mxu0 0.0
    %1375 = vmatprep.subr.mxu0 0.0
    %1376 = vmatpush1.msra.mxu0 0.0
    %1377 = vmatprep.subr.mxu0 0.0
    %1378 = vmatpush1.msra.mxu0 0.0
    %1379 = vmatprep.subr.mxu0 0.0
    %1380 = vmatpush1.msra.mxu0 0.0
    %1381 = vmatprep.subr.mxu0 0.0
    %1382 = vmatpush1.msra.mxu0 0.0
    %1383 = vmatprep.subr.mxu0 0.0
    %1384 = vmatpush1.msra.mxu0 0.0
    %1385 = vmatprep.subr.mxu0 0.0
    %1386 = vmatpush1.msra.mxu0 0.0
    %1387 = vmatprep.subr.mxu0 0.0
    %1388 = vmatpush1.msra.mxu0 0.0
    %1389 = vmatprep.subr.mxu0 0.0
    %1390 = vmatpush1.msra.mxu0 0.0
    %1391 = vmatprep.subr.mxu0 0.0
    %1392 = vmatpush1.msra.mxu0 0.0
    %1393 = vmatprep.subr.mxu0 0.0
    %1394 = vmatpush1.msra.mxu0 0.0
    %1395 = vmatprep.subr.mxu0 0.0
    %1396 = vmatpush1.msra.mxu0 0.0
    %1397 = vmatprep.subr.mxu0 0.0
    %1398 = vmatpush1.msra.mxu0 0.0
    %1399 = vmatprep.subr.mxu0 0.0
    %1400 = vmatpush1.msra.mxu0 0.0
    %1401 = vmatprep.subr.mxu0 0.0
    %1402 = vmatpush1.msra.mxu0 0.0
    %1403 = vmatprep.subr.mxu0 0.0
    %1404 = vmatpush1.msra.mxu0 0.0
    %1405 = vmatprep.subr.mxu0 0.0
    %1406 = vmatpush1.msra.mxu0 0.0
    %1407 = vmatprep.subr.mxu0 0.0
    %1408 = vmatpush1.msra.mxu0 0.0
    %1409 = vmatprep.subr.mxu0 0.0
    %1410 = vmatpush1.msra.mxu0 0.0
    %1411 = vmatprep.subr.mxu0 0.0
    %1412 = vmatpush1.msra.mxu0 0.0
    %1413 = vmatprep.subr.mxu0 0.0
    %1414 = vmatpush1.msra.mxu0 0.0
    %1415 = vmatprep.subr.mxu0 0.0
    %1416 = vmatpush1.msra.mxu0 0.0
    %1417 = vmatprep.mubr.f32.mxu0 0.0
    %1418 = vmatmul.mubr.f32.gmra.mrb[0].mxu0 %v122
    %v1419 = vpop.f32.mrb[0].mxu0
    %v1420 = vadd.f32 %v73, %v1419
    %v1421 = vpop.f32.mrb[0].mxu0
    %v1422 = vadd.f32 %v73, %v1421
    %1423 = vmatprep.mubr.f32.mxu0 0.0
    %1424 = vmatmul.mubr.f32.gmra.mrb[0].mxu0 %v125
    %v1425 = vpop.f32.mrb[0].mxu0
    %v1426 = vadd.f32 %v78, %v1425
    %v1427 = vpop.f32.mrb[0].mxu0
    %v1428 = vadd.f32 %v78, %v1427
    %1429 = vmatprep.mubr.f32.mxu0 0.0
    %1430 = vmatmul.mubr.f32.gmra.mrb[0].mxu0 %v128
    %v1431 = vpop.f32.mrb[0].mxu0
    %v1432 = vadd.f32 %v83, %v1431
    %v1433 = vpop.f32.mrb[0].mxu0
    %v1434 = vadd.f32 %v83, %v1433
    %1435 = vmatprep.mubr.f32.mxu0 0.0
    %1436 = vmatmul.mubr.f32.gmra.mrb[0].mxu0 %v131
    %v1437 = vpop.f32.mrb[0].mxu0
    %v1438 = vadd.f32 %v88, %v1437
    %v1439 = vpop.f32.mrb[0].mxu0
    %v1440 = vadd.f32 %v88, %v1439
    %1441 = vmatprep.mubr.f32.mxu0 0.0
    %1442 = vmatmul.mubr.f32.gmra.mrb[0].mxu0 %v134
    %v1443 = vpop.f32.mrb[0].mxu0
    %v1444 = vadd.f32 %v93, %v1443
    %v1445 = vpop.f32.mrb[0].mxu0
    %v1446 = vadd.f32 %v93, %v1445
    %1447 = vmatprep.mubr.f32.mxu0 0.0
    %1448 = vmatmul.mubr.f32.gmra.mrb[0].mxu0 %v137
    %v1449 = vpop.f32.mrb[0].mxu0
    %v1450 = vadd.f32 %v98, %v1449
    %v1451 = vpop.f32.mrb[0].mxu0
    %v1452 = vadd.f32 %v98, %v1451
    %1453 = vmatprep.mubr.f32.mxu0 0.0
    %1454 = vmatmul.mubr.f32.gmra.mrb[0].mxu0 %v140
    %v1455 = vpop.f32.mrb[0].mxu0
    %v1456 = vadd.f32 %v103, %v1455
    %v1457 = vpop.f32.mrb[0].mxu0
    %v1458 = vadd.f32 %v103, %v1457
    %1459 = vmatprep.mubr.f32.mxu0 0.0
    %1460 = vmatmul.mubr.f32.gmra.mrb[0].mxu0 %v143
    %v1461 = vpop.f32.mrb[0].mxu0
    %v1462 = vadd.f32 %v108, %v1461
    %v1463 = vpop.f32.mrb[0].mxu0
    %v1464 = vadd.f32 %v108, %v1463
    %1465 = vmatprep.mubr.f32.mxu0 0.0
    %1466 = vmatmul.mubr.f32.gmra.mrb[0].mxu0 %v146
    %v1467 = vpop.f32.mrb[0].mxu0
    %v1468 = vadd.f32 %v113, %v1467
    %v1469 = vpop.f32.mrb[0].mxu0
    %v1470 = vadd.f32 %v113, %v1469
    %1471 = vmatprep.mubr.f32.mxu0 0.0
    %1472 = vmatmul.mubr.f32.gmra.mrb[0].mxu0 %v149
    %v1473 = vpop.f32.mrb[0].mxu0
    %v1474 = vadd.f32 %v118, %v1473
    %v1475 = vpop.f32.mrb[0].mxu0
    %v1476 = vadd.f32 %v118, %v1475
    %1477 = vdwg.mxu0
    %1478 = vxpose.xlu0.b32.start [1/16] %v1420, 128
    %1479 = vxpose.xlu0.b32.cont [2/16] 0.0, 128
    %1480 = vxpose.xlu0.b32.cont [3/16] 0.0, 128
    %1481 = vxpose.xlu0.b32.cont [4/16] 0.0, 128
    %1482 = vxpose.xlu0.b32.cont [5/16] 0.0, 128
    %1483 = vxpose.xlu0.b32.cont [6/16] 0.0, 128
    %1484 = vxpose.xlu0.b32.cont [7/16] 0.0, 128
    %1485 = vxpose.xlu0.b32.cont [8/16] 0.0, 128
    %1486 = vxpose.xlu0.b32.cont [9/16] 0.0, 128
    %1487 = vxpose.xlu0.b32.cont [10/16] 0.0, 128
    %1488 = vxpose.xlu0.b32.cont [11/16] 0.0, 128
    %1489 = vxpose.xlu0.b32.cont [12/16] 0.0, 128
    %1490 = vxpose.xlu0.b32.cont [13/16] 0.0, 128
    %1491 = vxpose.xlu0.b32.cont [14/16] 0.0, 128
    %1492 = vxpose.xlu0.b32.cont [15/16] 0.0, 128
    %1493 = vxpose.xlu0.b32.end [16/16] 0.0, 128
    %v1494 = vpop.trf.xlu0
    %v1495 = vpop.trf.xlu0
    %v1496 = vpop.trf.xlu0
    %v1497 = vpop.trf.xlu0
    %v1498 = vpop.trf.xlu0
    %v1499 = vpop.trf.xlu0
    %v1500 = vpop.trf.xlu0
    %v1501 = vpop.trf.xlu0
    %v1502 = vpop.trf.xlu0
    %v1503 = vpop.trf.xlu0
    %v1504 = vpop.trf.xlu0
    %v1505 = vpop.trf.xlu0
    %v1506 = vpop.trf.xlu0
    %v1507 = vpop.trf.xlu0
    %v1508 = vpop.trf.xlu0
    %v1509 = vpop.trf.xlu0
    %1510 = vxpose.xlu0.b32.start [1/16] %v1422, 128
    %1511 = vxpose.xlu0.b32.cont [2/16] 0.0, 128
    %1512 = vxpose.xlu0.b32.cont [3/16] 0.0, 128
    %1513 = vxpose.xlu0.b32.cont [4/16] 0.0, 128
    %1514 = vxpose.xlu0.b32.cont [5/16] 0.0, 128
    %1515 = vxpose.xlu0.b32.cont [6/16] 0.0, 128
    %1516 = vxpose.xlu0.b32.cont [7/16] 0.0, 128
    %1517 = vxpose.xlu0.b32.cont [8/16] 0.0, 128
    %1518 = vxpose.xlu0.b32.cont [9/16] 0.0, 128
    %1519 = vxpose.xlu0.b32.cont [10/16] 0.0, 128
    %1520 = vxpose.xlu0.b32.cont [11/16] 0.0, 128
    %1521 = vxpose.xlu0.b32.cont [12/16] 0.0, 128
    %1522 = vxpose.xlu0.b32.cont [13/16] 0.0, 128
    %1523 = vxpose.xlu0.b32.cont [14/16] 0.0, 128
    %1524 = vxpose.xlu0.b32.cont [15/16] 0.0, 128
    %1525 = vxpose.xlu0.b32.end [16/16] 0.0, 128
    %v1526 = vpop.trf.xlu0
    %v1527 = vpop.trf.xlu0
    %v1528 = vpop.trf.xlu0
    %v1529 = vpop.trf.xlu0
    %v1530 = vpop.trf.xlu0
    %v1531 = vpop.trf.xlu0
    %v1532 = vpop.trf.xlu0
    %v1533 = vpop.trf.xlu0
    %v1534 = vpop.trf.xlu0
    %v1535 = vpop.trf.xlu0
    %v1536 = vpop.trf.xlu0
    %v1537 = vpop.trf.xlu0
    %v1538 = vpop.trf.xlu0
    %v1539 = vpop.trf.xlu0
    %v1540 = vpop.trf.xlu0
    %v1541 = vpop.trf.xlu0
    %v1543 = vsel %vm340, %v1494, 0
    %v1546 = vsel %vm340, %v1495, 0
    %v1549 = vsel %vm340, %v1496, 0
    %v1552 = vsel %vm340, %v1497, 0
    %v1555 = vsel %vm340, %v1498, 0
    %v1558 = vsel %vm340, %v1499, 0
    %v1561 = vsel %vm340, %v1500, 0
    %v1564 = vsel %vm340, %v1501, 0
    %v1567 = vsel %vm340, %v1502, 0
    %v1570 = vsel %vm340, %v1503, 0
    %v1573 = vsel %vm340, %v1504, 0
    %v1576 = vsel %vm340, %v1505, 0
    %v1579 = vsel %vm340, %v1506, 0
    %v1582 = vsel %vm340, %v1507, 0
    %v1585 = vsel %vm340, %v1508, 0
    %v1588 = vsel %vm340, %v1509, 0
    %v1591 = vsel %vm340, %v1526, 0
    %v1594 = vsel %vm340, %v1527, 0
    %v1597 = vsel %vm340, %v1528, 0
    %v1600 = vsel %vm340, %v1529, 0
    %v1603 = vsel %vm340, %v1530, 0
    %v1606 = vsel %vm340, %v1531, 0
    %v1609 = vsel %vm340, %v1532, 0
    %v1612 = vsel %vm340, %v1533, 0
    %v1615 = vsel %vm340, %v1534, 0
    %v1618 = vsel %vm340, %v1535, 0
    %v1621 = vsel %vm340, %v1536, 0
    %v1624 = vsel %vm340, %v1537, 0
    %v1627 = vsel %vm340, %v1538, 0
    %v1630 = vsel %vm340, %v1539, 0
    %v1633 = vsel %vm340, %v1540, 0
    %v1636 = vsel %vm340, %v1541, 0
    %1638 = vmatprep.subr.mxu0 %v1428
    %1639 = vmatpush1.msra.mxu0 %v1426
    %1640 = vmatprep.subr.mxu0 0.0
    %1641 = vmatpush1.msra.mxu0 0.0
    %1642 = vmatprep.subr.mxu0 0.0
    %1643 = vmatpush1.msra.mxu0 0.0
    %1644 = vmatprep.subr.mxu0 0.0
    %1645 = vmatpush1.msra.mxu0 0.0
    %1646 = vmatprep.subr.mxu0 0.0
    %1647 = vmatpush1.msra.mxu0 0.0
    %1648 = vmatprep.subr.mxu0 0.0
    %1649 = vmatpush1.msra.mxu0 0.0
    %1650 = vmatprep.subr.mxu0 0.0
    %1651 = vmatpush1.msra.mxu0 0.0
    %1652 = vmatprep.subr.mxu0 0.0
    %1653 = vmatpush1.msra.mxu0 0.0
    %1654 = vmatprep.subr.mxu0 0.0
    %1655 = vmatpush1.msra.mxu0 0.0
    %1656 = vmatprep.subr.mxu0 0.0
    %1657 = vmatpush1.msra.mxu0 0.0
    %1658 = vmatprep.subr.mxu0 0.0
    %1659 = vmatpush1.msra.mxu0 0.0
    %1660 = vmatprep.subr.mxu0 0.0
    %1661 = vmatpush1.msra.mxu0 0.0
    %1662 = vmatprep.subr.mxu0 0.0
    %1663 = vmatpush1.msra.mxu0 0.0
    %1664 = vmatprep.subr.mxu0 0.0
    %1665 = vmatpush1.msra.mxu0 0.0
    %1666 = vmatprep.subr.mxu0 0.0
    %1667 = vmatpush1.msra.mxu0 0.0
    %1668 = vmatprep.subr.mxu0 0.0
    %1669 = vmatpush1.msra.mxu0 0.0
    %1670 = vmatprep.subr.mxu0 0.0
    %1671 = vmatpush1.msra.mxu0 0.0
    %1672 = vmatprep.subr.mxu0 0.0
    %1673 = vmatpush1.msra.mxu0 0.0
    %1674 = vmatprep.subr.mxu0 0.0
    %1675 = vmatpush1.msra.mxu0 0.0
    %1676 = vmatprep.subr.mxu0 0.0
    %1677 = vmatpush1.msra.mxu0 0.0
    %1678 = vmatprep.subr.mxu0 0.0
    %1679 = vmatpush1.msra.mxu0 0.0
    %1680 = vmatprep.subr.mxu0 0.0
    %1681 = vmatpush1.msra.mxu0 0.0
    %1682 = vmatprep.subr.mxu0 0.0
    %1683 = vmatpush1.msra.mxu0 0.0
    %1684 = vmatprep.subr.mxu0 0.0
    %1685 = vmatpush1.msra.mxu0 0.0
    %1686 = vmatprep.subr.mxu0 0.0
    %1687 = vmatpush1.msra.mxu0 0.0
    %1688 = vmatprep.subr.mxu0 0.0
    %1689 = vmatpush1.msra.mxu0 0.0
    %1690 = vmatprep.subr.mxu0 0.0
    %1691 = vmatpush1.msra.mxu0 0.0
    %1692 = vmatprep.subr.mxu0 0.0
    %1693 = vmatpush1.msra.mxu0 0.0
    %1694 = vmatprep.subr.mxu0 0.0
    %1695 = vmatpush1.msra.mxu0 0.0
    %1696 = vmatprep.subr.mxu0 0.0
    %1697 = vmatpush1.msra.mxu0 0.0
    %1698 = vmatprep.subr.mxu0 0.0
    %1699 = vmatpush1.msra.mxu0 0.0
    %1700 = vmatprep.subr.mxu0 0.0
    %1701 = vmatpush1.msra.mxu0 0.0
    %1702 = vmatprep.mubr.f32.mxu0 0.0
    %1703 = vmatmul.mubr.f32.gmra.mrb[0].mxu0 %v1543
    %v1704 = vpop.f32.mrb[0].mxu0
    %v1705 = vadd.f32 0.0, %v1704
    %v1706 = vpop.f32.mrb[0].mxu0
    %v1707 = vadd.f32 0.0, %v1706
    %1708 = vmatprep.mubr.f32.mxu0 0.0
    %1709 = vmatmul.mubr.f32.gmra.mrb[0].mxu0 %v1546
    %v1710 = vpop.f32.mrb[0].mxu0
    %v1711 = vadd.f32 0.0, %v1710
    %v1712 = vpop.f32.mrb[0].mxu0
    %v1713 = vadd.f32 0.0, %v1712
    %1714 = vmatprep.mubr.f32.mxu0 0.0
    %1715 = vmatmul.mubr.f32.gmra.mrb[0].mxu0 %v1549
    %v1716 = vpop.f32.mrb[0].mxu0
    %v1717 = vadd.f32 0.0, %v1716
    %v1718 = vpop.f32.mrb[0].mxu0
    %v1719 = vadd.f32 0.0, %v1718
    %1720 = vmatprep.mubr.f32.mxu0 0.0
    %1721 = vmatmul.mubr.f32.gmra.mrb[0].mxu0 %v1552
    %v1722 = vpop.f32.mrb[0].mxu0
    %v1723 = vadd.f32 0.0, %v1722
    %v1724 = vpop.f32.mrb[0].mxu0
    %v1725 = vadd.f32 0.0, %v1724
    %1726 = vmatprep.mubr.f32.mxu0 0.0
    %1727 = vmatmul.mubr.f32.gmra.mrb[0].mxu0 %v1555
    %v1728 = vpop.f32.mrb[0].mxu0
    %v1729 = vadd.f32 0.0, %v1728
    %v1730 = vpop.f32.mrb[0].mxu0
    %v1731 = vadd.f32 0.0, %v1730
    %1732 = vmatprep.mubr.f32.mxu0 0.0
    %1733 = vmatmul.mubr.f32.gmra.mrb[0].mxu0 %v1558
    %v1734 = vpop.f32.mrb[0].mxu0
    %v1735 = vadd.f32 0.0, %v1734
    %v1736 = vpop.f32.mrb[0].mxu0
    %v1737 = vadd.f32 0.0, %v1736
    %1738 = vmatprep.mubr.f32.mxu0 0.0
    %1739 = vmatmul.mubr.f32.gmra.mrb[0].mxu0 %v1561
    %v1740 = vpop.f32.mrb[0].mxu0
    %v1741 = vadd.f32 0.0, %v1740
    %v1742 = vpop.f32.mrb[0].mxu0
    %v1743 = vadd.f32 0.0, %v1742
    %1744 = vmatprep.mubr.f32.mxu0 0.0
    %1745 = vmatmul.mubr.f32.gmra.mrb[0].mxu0 %v1564
    %v1746 = vpop.f32.mrb[0].mxu0
    %v1747 = vadd.f32 0.0, %v1746
    %v1748 = vpop.f32.mrb[0].mxu0
    %v1749 = vadd.f32 0.0, %v1748
    %1750 = vmatprep.mubr.f32.mxu0 0.0
    %1751 = vmatmul.mubr.f32.gmra.mrb[0].mxu0 %v1567
    %v1752 = vpop.f32.mrb[0].mxu0
    %v1753 = vadd.f32 0.0, %v1752
    %v1754 = vpop.f32.mrb[0].mxu0
    %v1755 = vadd.f32 0.0, %v1754
    %1756 = vmatprep.mubr.f32.mxu0 0.0
    %1757 = vmatmul.mubr.f32.gmra.mrb[0].mxu0 %v1570
    %v1758 = vpop.f32.mrb[0].mxu0
    %v1759 = vadd.f32 0.0, %v1758
    %v1760 = vpop.f32.mrb[0].mxu0
    %v1761 = vadd.f32 0.0, %v1760
    %1762 = vmatprep.mubr.f32.mxu0 0.0
    %1763 = vmatmul.mubr.f32.gmra.mrb[0].mxu0 %v1573
    %v1764 = vpop.f32.mrb[0].mxu0
    %v1765 = vadd.f32 0.0, %v1764
    %v1766 = vpop.f32.mrb[0].mxu0
    %v1767 = vadd.f32 0.0, %v1766
    %1768 = vmatprep.mubr.f32.mxu0 0.0
    %1769 = vmatmul.mubr.f32.gmra.mrb[0].mxu0 %v1576
    %v1770 = vpop.f32.mrb[0].mxu0
    %v1771 = vadd.f32 0.0, %v1770
    %v1772 = vpop.f32.mrb[0].mxu0
    %v1773 = vadd.f32 0.0, %v1772
    %1774 = vmatprep.mubr.f32.mxu0 0.0
    %1775 = vmatmul.mubr.f32.gmra.mrb[0].mxu0 %v1579
    %v1776 = vpop.f32.mrb[0].mxu0
    %v1777 = vadd.f32 0.0, %v1776
    %v1778 = vpop.f32.mrb[0].mxu0
    %v1779 = vadd.f32 0.0, %v1778
    %1780 = vmatprep.mubr.f32.mxu0 0.0
    %1781 = vmatmul.mubr.f32.gmra.mrb[0].mxu0 %v1582
    %v1782 = vpop.f32.mrb[0].mxu0
    %v1783 = vadd.f32 0.0, %v1782
    %v1784 = vpop.f32.mrb[0].mxu0
    %v1785 = vadd.f32 0.0, %v1784
    %1786 = vmatprep.mubr.f32.mxu0 0.0
    %1787 = vmatmul.mubr.f32.gmra.mrb[0].mxu0 %v1585
    %v1788 = vpop.f32.mrb[0].mxu0
    %v1789 = vadd.f32 0.0, %v1788
    %v1790 = vpop.f32.mrb[0].mxu0
    %v1791 = vadd.f32 0.0, %v1790
    %1792 = vmatprep.mubr.f32.mxu0 0.0
    %1793 = vmatmul.mubr.f32.gmra.mrb[0].mxu0 %v1588
    %v1794 = vpop.f32.mrb[0].mxu0
    %v1795 = vadd.f32 0.0, %v1794
    %v1796 = vpop.f32.mrb[0].mxu0
    %v1797 = vadd.f32 0.0, %v1796
    %1798 = vmatprep.mubr.f32.mxu0 0.0
    %1799 = vmatmul.mubr.f32.gmra.mrb[0].mxu0 %v1591
    %v1800 = vpop.f32.mrb[0].mxu0
    %v1801 = vadd.f32 0.0, %v1800
    %v1802 = vpop.f32.mrb[0].mxu0
    %v1803 = vadd.f32 0.0, %v1802
    %1804 = vmatprep.mubr.f32.mxu0 0.0
    %1805 = vmatmul.mubr.f32.gmra.mrb[0].mxu0 %v1594
    %v1806 = vpop.f32.mrb[0].mxu0
    %v1807 = vadd.f32 0.0, %v1806
    %v1808 = vpop.f32.mrb[0].mxu0
    %v1809 = vadd.f32 0.0, %v1808
    %1810 = vmatprep.mubr.f32.mxu0 0.0
    %1811 = vmatmul.mubr.f32.gmra.mrb[0].mxu0 %v1597
    %v1812 = vpop.f32.mrb[0].mxu0
    %v1813 = vadd.f32 0.0, %v1812
    %v1814 = vpop.f32.mrb[0].mxu0
    %v1815 = vadd.f32 0.0, %v1814
    %1816 = vmatprep.mubr.f32.mxu0 0.0
    %1817 = vmatmul.mubr.f32.gmra.mrb[0].mxu0 %v1600
    %v1818 = vpop.f32.mrb[0].mxu0
    %v1819 = vadd.f32 0.0, %v1818
    %v1820 = vpop.f32.mrb[0].mxu0
    %v1821 = vadd.f32 0.0, %v1820
    %1822 = vmatprep.mubr.f32.mxu0 0.0
    %1823 = vmatmul.mubr.f32.gmra.mrb[0].mxu0 %v1603
    %v1824 = vpop.f32.mrb[0].mxu0
    %v1825 = vadd.f32 0.0, %v1824
    %v1826 = vpop.f32.mrb[0].mxu0
    %v1827 = vadd.f32 0.0, %v1826
    %1828 = vmatprep.mubr.f32.mxu0 0.0
    %1829 = vmatmul.mubr.f32.gmra.mrb[0].mxu0 %v1606
    %v1830 = vpop.f32.mrb[0].mxu0
    %v1831 = vadd.f32 0.0, %v1830
    %v1832 = vpop.f32.mrb[0].mxu0
    %v1833 = vadd.f32 0.0, %v1832
    %1834 = vmatprep.mubr.f32.mxu0 0.0
    %1835 = vmatmul.mubr.f32.gmra.mrb[0].mxu0 %v1609
    %v1836 = vpop.f32.mrb[0].mxu0
    %v1837 = vadd.f32 0.0, %v1836
    %v1838 = vpop.f32.mrb[0].mxu0
    %v1839 = vadd.f32 0.0, %v1838
    %1840 = vmatprep.mubr.f32.mxu0 0.0
    %1841 = vmatmul.mubr.f32.gmra.mrb[0].mxu0 %v1612
    %v1842 = vpop.f32.mrb[0].mxu0
    %v1843 = vadd.f32 0.0, %v1842
    %v1844 = vpop.f32.mrb[0].mxu0
    %v1845 = vadd.f32 0.0, %v1844
    %1846 = vmatprep.mubr.f32.mxu0 0.0
    %1847 = vmatmul.mubr.f32.gmra.mrb[0].mxu0 %v1615
    %v1848 = vpop.f32.mrb[0].mxu0
    %v1849 = vadd.f32 0.0, %v1848
    %v1850 = vpop.f32.mrb[0].mxu0
    %v1851 = vadd.f32 0.0, %v1850
    %1852 = vmatprep.mubr.f32.mxu0 0.0
    %1853 = vmatmul.mubr.f32.gmra.mrb[0].mxu0 %v1618
    %v1854 = vpop.f32.mrb[0].mxu0
    %v1855 = vadd.f32 0.0, %v1854
    %v1856 = vpop.f32.mrb[0].mxu0
    %v1857 = vadd.f32 0.0, %v1856
    %1858 = vmatprep.mubr.f32.mxu0 0.0
    %1859 = vmatmul.mubr.f32.gmra.mrb[0].mxu0 %v1621
    %v1860 = vpop.f32.mrb[0].mxu0
    %v1861 = vadd.f32 0.0, %v1860
    %v1862 = vpop.f32.mrb[0].mxu0
    %v1863 = vadd.f32 0.0, %v1862
    %1864 = vmatprep.mubr.f32.mxu0 0.0
    %1865 = vmatmul.mubr.f32.gmra.mrb[0].mxu0 %v1624
    %v1866 = vpop.f32.mrb[0].mxu0
    %v1867 = vadd.f32 0.0, %v1866
    %v1868 = vpop.f32.mrb[0].mxu0
    %v1869 = vadd.f32 0.0, %v1868
    %1870 = vmatprep.mubr.f32.mxu0 0.0
    %1871 = vmatmul.mubr.f32.gmra.mrb[0].mxu0 %v1627
    %v1872 = vpop.f32.mrb[0].mxu0
    %v1873 = vadd.f32 0.0, %v1872
    %v1874 = vpop.f32.mrb[0].mxu0
    %v1875 = vadd.f32 0.0, %v1874
    %1876 = vmatprep.mubr.f32.mxu0 0.0
    %1877 = vmatmul.mubr.f32.gmra.mrb[0].mxu0 %v1630
    %v1878 = vpop.f32.mrb[0].mxu0
    %v1879 = vadd.f32 0.0, %v1878
    %v1880 = vpop.f32.mrb[0].mxu0
    %v1881 = vadd.f32 0.0, %v1880
    %1882 = vmatprep.mubr.f32.mxu0 0.0
    %1883 = vmatmul.mubr.f32.gmra.mrb[0].mxu0 %v1633
    %v1884 = vpop.f32.mrb[0].mxu0
    %v1885 = vadd.f32 0.0, %v1884
    %v1886 = vpop.f32.mrb[0].mxu0
    %v1887 = vadd.f32 0.0, %v1886
    %1888 = vmatprep.mubr.f32.mxu0 0.0
    %1889 = vmatmul.mubr.f32.gmra.mrb[0].mxu0 %v1636
    %v1890 = vpop.f32.mrb[0].mxu0
    %v1891 = vadd.f32 0.0, %v1890
    %v1892 = vpop.f32.mrb[0].mxu0
    %v1893 = vadd.f32 0.0, %v1892
    %1894 = vdwg.mxu0
    %v1895 = vmax.f32 %v1705, %v1707
    %1896 = vmax.xlane.f32.xlu0 %v1895
    %v1897 = vpop.xlane.xlu0 %1896
    %v1898 = vmax.f32 %v1711, %v1713
    %1899 = vmax.xlane.f32.xlu0 %v1898
    %v1900 = vpop.xlane.xlu0 %1899
    %v1901 = vmax.f32 %v1717, %v1719
    %1902 = vmax.xlane.f32.xlu0 %v1901
    %v1903 = vpop.xlane.xlu0 %1902
    %v1904 = vmax.f32 %v1723, %v1725
    %1905 = vmax.xlane.f32.xlu0 %v1904
    %v1906 = vpop.xlane.xlu0 %1905
    %v1907 = vmax.f32 %v1729, %v1731
    %1908 = vmax.xlane.f32.xlu0 %v1907
    %v1909 = vpop.xlane.xlu0 %1908
    %v1910 = vmax.f32 %v1735, %v1737
    %1911 = vmax.xlane.f32.xlu0 %v1910
    %v1912 = vpop.xlane.xlu0 %1911
    %v1913 = vmax.f32 %v1741, %v1743
    %1914 = vmax.xlane.f32.xlu0 %v1913
    %v1915 = vpop.xlane.xlu0 %1914
    %v1916 = vmax.f32 %v1747, %v1749
    %1917 = vmax.xlane.f32.xlu0 %v1916
    %v1918 = vpop.xlane.xlu0 %1917
    %v1919 = vmax.f32 %v1753, %v1755
    %1920 = vmax.xlane.f32.xlu0 %v1919
    %v1921 = vpop.xlane.xlu0 %1920
    %v1922 = vmax.f32 %v1759, %v1761
    %1923 = vmax.xlane.f32.xlu0 %v1922
    %v1924 = vpop.xlane.xlu0 %1923
    %v1925 = vmax.f32 %v1765, %v1767
    %1926 = vmax.xlane.f32.xlu0 %v1925
    %v1927 = vpop.xlane.xlu0 %1926
    %v1928 = vmax.f32 %v1771, %v1773
    %1929 = vmax.xlane.f32.xlu0 %v1928
    %v1930 = vpop.xlane.xlu0 %1929
    %v1931 = vmax.f32 %v1777, %v1779
    %1932 = vmax.xlane.f32.xlu0 %v1931
    %v1933 = vpop.xlane.xlu0 %1932
    %v1934 = vmax.f32 %v1783, %v1785
    %1935 = vmax.xlane.f32.xlu0 %v1934
    %v1936 = vpop.xlane.xlu0 %1935
    %v1937 = vmax.f32 %v1789, %v1791
    %1938 = vmax.xlane.f32.xlu0 %v1937
    %v1939 = vpop.xlane.xlu0 %1938
    %v1940 = vmax.f32 %v1795, %v1797
    %1941 = vmax.xlane.f32.xlu0 %v1940
    %v1942 = vpop.xlane.xlu0 %1941
    %v1943 = vmax.f32 %v1801, %v1803
    %1944 = vmax.xlane.f32.xlu0 %v1943
    %v1945 = vpop.xlane.xlu0 %1944
    %v1946 = vmax.f32 %v1807, %v1809
    %1947 = vmax.xlane.f32.xlu0 %v1946
    %v1948 = vpop.xlane.xlu0 %1947
    %v1949 = vmax.f32 %v1813, %v1815
    %1950 = vmax.xlane.f32.xlu0 %v1949
    %v1951 = vpop.xlane.xlu0 %1950
    %v1952 = vmax.f32 %v1819, %v1821
    %1953 = vmax.xlane.f32.xlu0 %v1952
    %v1954 = vpop.xlane.xlu0 %1953
    %v1955 = vmax.f32 %v1825, %v1827
    %1956 = vmax.xlane.f32.xlu0 %v1955
    %v1957 = vpop.xlane.xlu0 %1956
    %v1958 = vmax.f32 %v1831, %v1833
    %1959 = vmax.xlane.f32.xlu0 %v1958
    %v1960 = vpop.xlane.xlu0 %1959
    %v1961 = vmax.f32 %v1837, %v1839
    %1962 = vmax.xlane.f32.xlu0 %v1961
    %v1963 = vpop.xlane.xlu0 %1962
    %v1964 = vmax.f32 %v1843, %v1845
    %1965 = vmax.xlane.f32.xlu0 %v1964
    %v1966 = vpop.xlane.xlu0 %1965
    %v1967 = vmax.f32 %v1849, %v1851
    %1968 = vmax.xlane.f32.xlu0 %v1967
    %v1969 = vpop.xlane.xlu0 %1968
    %v1970 = vmax.f32 %v1855, %v1857
    %1971 = vmax.xlane.f32.xlu0 %v1970
    %v1972 = vpop.xlane.xlu0 %1971
    %v1973 = vmax.f32 %v1861, %v1863
    %1974 = vmax.xlane.f32.xlu0 %v1973
    %v1975 = vpop.xlane.xlu0 %1974
    %v1976 = vmax.f32 %v1867, %v1869
    %1977 = vmax.xlane.f32.xlu0 %v1976
    %v1978 = vpop.xlane.xlu0 %1977
    %v1979 = vmax.f32 %v1873, %v1875
    %1980 = vmax.xlane.f32.xlu0 %v1979
    %v1981 = vpop.xlane.xlu0 %1980
    %v1982 = vmax.f32 %v1879, %v1881
    %1983 = vmax.xlane.f32.xlu0 %v1982
    %v1984 = vpop.xlane.xlu0 %1983
    %v1985 = vmax.f32 %v1885, %v1887
    %1986 = vmax.xlane.f32.xlu0 %v1985
    %v1987 = vpop.xlane.xlu0 %1986
    %v1988 = vmax.f32 %v1891, %v1893
    %1989 = vmax.xlane.f32.xlu0 %v1988
    %v1990 = vpop.xlane.xlu0 %1989
    %v1991 = vsub.f32 %v1705, %v1897
    %v1992 = vsub.f32 %v1707, %v1897
    %v1993 = vsub.f32 %v1711, %v1900
    %v1994 = vsub.f32 %v1713, %v1900
    %v1995 = vsub.f32 %v1717, %v1903
    %v1996 = vsub.f32 %v1719, %v1903
    %v1997 = vsub.f32 %v1723, %v1906
    %v1998 = vsub.f32 %v1725, %v1906
    %v1999 = vsub.f32 %v1729, %v1909
    %v2000 = vsub.f32 %v1731, %v1909
    %v2001 = vsub.f32 %v1735, %v1912
    %v2002 = vsub.f32 %v1737, %v1912
    %v2003 = vsub.f32 %v1741, %v1915
    %v2004 = vsub.f32 %v1743, %v1915
    %v2005 = vsub.f32 %v1747, %v1918
    %v2006 = vsub.f32 %v1749, %v1918
    %v2007 = vsub.f32 %v1753, %v1921
    %v2008 = vsub.f32 %v1755, %v1921
    %v2009 = vsub.f32 %v1759, %v1924
    %v2010 = vsub.f32 %v1761, %v1924
    %v2011 = vsub.f32 %v1765, %v1927
    %v2012 = vsub.f32 %v1767, %v1927
    %v2013 = vsub.f32 %v1771, %v1930
    %v2014 = vsub.f32 %v1773, %v1930
    %v2015 = vsub.f32 %v1777, %v1933
    %v2016 = vsub.f32 %v1779, %v1933
    %v2017 = vsub.f32 %v1783, %v1936
    %v2018 = vsub.f32 %v1785, %v1936
    %v2019 = vsub.f32 %v1789, %v1939
    %v2020 = vsub.f32 %v1791, %v1939
    %v2021 = vsub.f32 %v1795, %v1942
    %v2022 = vsub.f32 %v1797, %v1942
    %v2023 = vsub.f32 %v1801, %v1945
    %v2024 = vsub.f32 %v1803, %v1945
    %v2025 = vsub.f32 %v1807, %v1948
    %v2026 = vsub.f32 %v1809, %v1948
    %v2027 = vsub.f32 %v1813, %v1951
    %v2028 = vsub.f32 %v1815, %v1951
    %v2029 = vsub.f32 %v1819, %v1954
    %v2030 = vsub.f32 %v1821, %v1954
    %v2031 = vsub.f32 %v1825, %v1957
    %v2032 = vsub.f32 %v1827, %v1957
    %v2033 = vsub.f32 %v1831, %v1960
    %v2034 = vsub.f32 %v1833, %v1960
    %v2035 = vsub.f32 %v1837, %v1963
    %v2036 = vsub.f32 %v1839, %v1963
    %v2037 = vsub.f32 %v1843, %v1966
    %v2038 = vsub.f32 %v1845, %v1966
    %v2039 = vsub.f32 %v1849, %v1969
    %v2040 = vsub.f32 %v1851, %v1969
    %v2041 = vsub.f32 %v1855, %v1972
    %v2042 = vsub.f32 %v1857, %v1972
    %v2043 = vsub.f32 %v1861, %v1975
    %v2044 = vsub.f32 %v1863, %v1975
    %v2045 = vsub.f32 %v1867, %v1978
    %v2046 = vsub.f32 %v1869, %v1978
    %v2047 = vsub.f32 %v1873, %v1981
    %v2048 = vsub.f32 %v1875, %v1981
    %v2049 = vsub.f32 %v1879, %v1984
    %v2050 = vsub.f32 %v1881, %v1984
    %v2051 = vsub.f32 %v1885, %v1987
    %v2052 = vsub.f32 %v1887, %v1987
    %v2053 = vsub.f32 %v1891, %v1990
    %v2054 = vsub.f32 %v1893, %v1990
    %v2055 = vmul.f32 %v1991, 1.442695
    %v2056 = vpow.pop %v2055
    %v2057 = vmul.f32 %v1992, 1.442695
    %v2058 = vpow.pop %v2057
    %v2059 = vmul.f32 %v1993, 1.442695
    %v2060 = vpow.pop %v2059
    %v2061 = vmul.f32 %v1994, 1.442695
    %v2062 = vpow.pop %v2061
    %v2063 = vmul.f32 %v1995, 1.442695
    %v2064 = vpow.pop %v2063
    %v2065 = vmul.f32 %v1996, 1.442695
    %v2066 = vpow.pop %v2065
    %v2067 = vmul.f32 %v1997, 1.442695
    %v2068 = vpow.pop %v2067
    %v2069 = vmul.f32 %v1998, 1.442695
    %v2070 = vpow.pop %v2069
    %v2071 = vmul.f32 %v1999, 1.442695
    %v2072 = vpow.pop %v2071
    %v2073 = vmul.f32 %v2000, 1.442695
    %v2074 = vpow.pop %v2073
    %v2075 = vmul.f32 %v2001, 1.442695
    %v2076 = vpow.pop %v2075
    %v2077 = vmul.f32 %v2002, 1.442695
    %v2078 = vpow.pop %v2077
    %v2079 = vmul.f32 %v2003, 1.442695
    %v2080 = vpow.pop %v2079
    %v2081 = vmul.f32 %v2004, 1.442695
    %v2082 = vpow.pop %v2081
    %v2083 = vmul.f32 %v2005, 1.442695
    %v2084 = vpow.pop %v2083
    %v2085 = vmul.f32 %v2006, 1.442695
    %v2086 = vpow.pop %v2085
    %v2087 = vmul.f32 %v2007, 1.442695
    %v2088 = vpow.pop %v2087
    %v2089 = vmul.f32 %v2008, 1.442695
    %v2090 = vpow.pop %v2089
    %v2091 = vmul.f32 %v2009, 1.442695
    %v2092 = vpow.pop %v2091
    %v2093 = vmul.f32 %v2010, 1.442695
    %v2094 = vpow.pop %v2093
    %v2095 = vmul.f32 %v2011, 1.442695
    %v2096 = vpow.pop %v2095
    %v2097 = vmul.f32 %v2012, 1.442695
    %v2098 = vpow.pop %v2097
    %v2099 = vmul.f32 %v2013, 1.442695
    %v2100 = vpow.pop %v2099
    %v2101 = vmul.f32 %v2014, 1.442695
    %v2102 = vpow.pop %v2101
    %v2103 = vmul.f32 %v2015, 1.442695
    %v2104 = vpow.pop %v2103
    %v2105 = vmul.f32 %v2016, 1.442695
    %v2106 = vpow.pop %v2105
    %v2107 = vmul.f32 %v2017, 1.442695
    %v2108 = vpow.pop %v2107
    %v2109 = vmul.f32 %v2018, 1.442695
    %v2110 = vpow.pop %v2109
    %v2111 = vmul.f32 %v2019, 1.442695
    %v2112 = vpow.pop %v2111
    %v2113 = vmul.f32 %v2020, 1.442695
    %v2114 = vpow.pop %v2113
    %v2115 = vmul.f32 %v2021, 1.442695
    %v2116 = vpow.pop %v2115
    %v2117 = vmul.f32 %v2022, 1.442695
    %v2118 = vpow.pop %v2117
    %v2119 = vmul.f32 %v2023, 1.442695
    %v2120 = vpow.pop %v2119
    %v2121 = vmul.f32 %v2024, 1.442695
    %v2122 = vpow.pop %v2121
    %v2123 = vmul.f32 %v2025, 1.442695
    %v2124 = vpow.pop %v2123
    %v2125 = vmul.f32 %v2026, 1.442695
    %v2126 = vpow.pop %v2125
    %v2127 = vmul.f32 %v2027, 1.442695
    %v2128 = vpow.pop %v2127
    %v2129 = vmul.f32 %v2028, 1.442695
    %v2130 = vpow.pop %v2129
    %v2131 = vmul.f32 %v2029, 1.442695
    %v2132 = vpow.pop %v2131
    %v2133 = vmul.f32 %v2030, 1.442695
    %v2134 = vpow.pop %v2133
    %v2135 = vmul.f32 %v2031, 1.442695
    %v2136 = vpow.pop %v2135
    %v2137 = vmul.f32 %v2032, 1.442695
    %v2138 = vpow.pop %v2137
    %v2139 = vmul.f32 %v2033, 1.442695
    %v2140 = vpow.pop %v2139
    %v2141 = vmul.f32 %v2034, 1.442695
    %v2142 = vpow.pop %v2141
    %v2143 = vmul.f32 %v2035, 1.442695
    %v2144 = vpow.pop %v2143
    %v2145 = vmul.f32 %v2036, 1.442695
    %v2146 = vpow.pop %v2145
    %v2147 = vmul.f32 %v2037, 1.442695
    %v2148 = vpow.pop %v2147
    %v2149 = vmul.f32 %v2038, 1.442695
    %v2150 = vpow.pop %v2149
    %v2151 = vmul.f32 %v2039, 1.442695
    %v2152 = vpow.pop %v2151
    %v2153 = vmul.f32 %v2040, 1.442695
    %v2154 = vpow.pop %v2153
    %v2155 = vmul.f32 %v2041, 1.442695
    %v2156 = vpow.pop %v2155
    %v2157 = vmul.f32 %v2042, 1.442695
    %v2158 = vpow.pop %v2157
    %v2159 = vmul.f32 %v2043, 1.442695
    %v2160 = vpow.pop %v2159
    %v2161 = vmul.f32 %v2044, 1.442695
    %v2162 = vpow.pop %v2161
    %v2163 = vmul.f32 %v2045, 1.442695
    %v2164 = vpow.pop %v2163
    %v2165 = vmul.f32 %v2046, 1.442695
    %v2166 = vpow.pop %v2165
    %v2167 = vmul.f32 %v2047, 1.442695
    %v2168 = vpow.pop %v2167
    %v2169 = vmul.f32 %v2048, 1.442695
    %v2170 = vpow.pop %v2169
    %v2171 = vmul.f32 %v2049, 1.442695
    %v2172 = vpow.pop %v2171
    %v2173 = vmul.f32 %v2050, 1.442695
    %v2174 = vpow.pop %v2173
    %v2175 = vmul.f32 %v2051, 1.442695
    %v2176 = vpow.pop %v2175
    %v2177 = vmul.f32 %v2052, 1.442695
    %v2178 = vpow.pop %v2177
    %v2179 = vmul.f32 %v2053, 1.442695
    %v2180 = vpow.pop %v2179
    %v2181 = vmul.f32 %v2054, 1.442695
    %v2182 = vpow.pop %v2181
    %v2183 = vadd.f32 %v2056, %v2058
    %2184 = vadd.xlane.f32.xlu0 %v2183
    %v2185 = vpop.xlane.xlu0 %2184
    %v2186 = vadd.f32 %v2060, %v2062
    %2187 = vadd.xlane.f32.xlu0 %v2186
    %v2188 = vpop.xlane.xlu0 %2187
    %v2189 = vadd.f32 %v2064, %v2066
    %2190 = vadd.xlane.f32.xlu0 %v2189
    %v2191 = vpop.xlane.xlu0 %2190
    %v2192 = vadd.f32 %v2068, %v2070
    %2193 = vadd.xlane.f32.xlu0 %v2192
    %v2194 = vpop.xlane.xlu0 %2193
    %v2195 = vadd.f32 %v2072, %v2074
    %2196 = vadd.xlane.f32.xlu0 %v2195
    %v2197 = vpop.xlane.xlu0 %2196
    %v2198 = vadd.f32 %v2076, %v2078
    %2199 = vadd.xlane.f32.xlu0 %v2198
    %v2200 = vpop.xlane.xlu0 %2199
    %v2201 = vadd.f32 %v2080, %v2082
    %2202 = vadd.xlane.f32.xlu0 %v2201
    %v2203 = vpop.xlane.xlu0 %2202
    %v2204 = vadd.f32 %v2084, %v2086
    %2205 = vadd.xlane.f32.xlu0 %v2204
    %v2206 = vpop.xlane.xlu0 %2205
    %v2207 = vadd.f32 %v2088, %v2090
    %2208 = vadd.xlane.f32.xlu0 %v2207
    %v2209 = vpop.xlane.xlu0 %2208
    %v2210 = vadd.f32 %v2092, %v2094
    %2211 = vadd.xlane.f32.xlu0 %v2210
    %v2212 = vpop.xlane.xlu0 %2211
    %v2213 = vadd.f32 %v2096, %v2098
    %2214 = vadd.xlane.f32.xlu0 %v2213
    %v2215 = vpop.xlane.xlu0 %2214
    %v2216 = vadd.f32 %v2100, %v2102
    %2217 = vadd.xlane.f32.xlu0 %v2216
    %v2218 = vpop.xlane.xlu0 %2217
    %v2219 = vadd.f32 %v2104, %v2106
    %2220 = vadd.xlane.f32.xlu0 %v2219
    %v2221 = vpop.xlane.xlu0 %2220
    %v2222 = vadd.f32 %v2108, %v2110
    %2223 = vadd.xlane.f32.xlu0 %v2222
    %v2224 = vpop.xlane.xlu0 %2223
    %v2225 = vadd.f32 %v2112, %v2114
    %2226 = vadd.xlane.f32.xlu0 %v2225
    %v2227 = vpop.xlane.xlu0 %2226
    %v2228 = vadd.f32 %v2116, %v2118
    %2229 = vadd.xlane.f32.xlu0 %v2228
    %v2230 = vpop.xlane.xlu0 %2229
    %v2231 = vadd.f32 %v2120, %v2122
    %2232 = vadd.xlane.f32.xlu0 %v2231
    %v2233 = vpop.xlane.xlu0 %2232
    %v2234 = vadd.f32 %v2124, %v2126
    %2235 = vadd.xlane.f32.xlu0 %v2234
    %v2236 = vpop.xlane.xlu0 %2235
    %v2237 = vadd.f32 %v2128, %v2130
    %2238 = vadd.xlane.f32.xlu0 %v2237
    %v2239 = vpop.xlane.xlu0 %2238
    %v2240 = vadd.f32 %v2132, %v2134
    %2241 = vadd.xlane.f32.xlu0 %v2240
    %v2242 = vpop.xlane.xlu0 %2241
    %v2243 = vadd.f32 %v2136, %v2138
    %2244 = vadd.xlane.f32.xlu0 %v2243
    %v2245 = vpop.xlane.xlu0 %2244
    %v2246 = vadd.f32 %v2140, %v2142
    %2247 = vadd.xlane.f32.xlu0 %v2246
    %v2248 = vpop.xlane.xlu0 %2247
    %v2249 = vadd.f32 %v2144, %v2146
    %2250 = vadd.xlane.f32.xlu0 %v2249
    %v2251 = vpop.xlane.xlu0 %2250
    %v2252 = vadd.f32 %v2148, %v2150
    %2253 = vadd.xlane.f32.xlu0 %v2252
    %v2254 = vpop.xlane.xlu0 %2253
    %v2255 = vadd.f32 %v2152, %v2154
    %2256 = vadd.xlane.f32.xlu0 %v2255
    %v2257 = vpop.xlane.xlu0 %2256
    %v2258 = vadd.f32 %v2156, %v2158
    %2259 = vadd.xlane.f32.xlu0 %v2258
    %v2260 = vpop.xlane.xlu0 %2259
    %v2261 = vadd.f32 %v2160, %v2162
    %2262 = vadd.xlane.f32.xlu0 %v2261
    %v2263 = vpop.xlane.xlu0 %2262
    %v2264 = vadd.f32 %v2164, %v2166
    %2265 = vadd.xlane.f32.xlu0 %v2264
    %v2266 = vpop.xlane.xlu0 %2265
    %v2267 = vadd.f32 %v2168, %v2170
    %2268 = vadd.xlane.f32.xlu0 %v2267
    %v2269 = vpop.xlane.xlu0 %2268
    %v2270 = vadd.f32 %v2172, %v2174
    %2271 = vadd.xlane.f32.xlu0 %v2270
    %v2272 = vpop.xlane.xlu0 %2271
    %v2273 = vadd.f32 %v2176, %v2178
    %2274 = vadd.xlane.f32.xlu0 %v2273
    %v2275 = vpop.xlane.xlu0 %2274
    %v2276 = vadd.f32 %v2180, %v2182
    %2277 = vadd.xlane.f32.xlu0 %v2276
    %v2278 = vpop.xlane.xlu0 %2277
    %v2279 = vrcp.pop %v2185
    %v2280 = vmul.f32 %v2056, %v2279
    %v2281 = vmul.f32 %v2058, %v2279
    %v2282 = vrcp.pop %v2188
    %v2283 = vmul.f32 %v2060, %v2282
    %v2284 = vmul.f32 %v2062, %v2282
    %v2285 = vrcp.pop %v2191
    %v2286 = vmul.f32 %v2064, %v2285
    %v2287 = vmul.f32 %v2066, %v2285
    %v2288 = vrcp.pop %v2194
    %v2289 = vmul.f32 %v2068, %v2288
    %v2290 = vmul.f32 %v2070, %v2288
    %v2291 = vrcp.pop %v2197
    %v2292 = vmul.f32 %v2072, %v2291
    %v2293 = vmul.f32 %v2074, %v2291
    %v2294 = vrcp.pop %v2200
    %v2295 = vmul.f32 %v2076, %v2294
    %v2296 = vmul.f32 %v2078, %v2294
    %v2297 = vrcp.pop %v2203
    %v2298 = vmul.f32 %v2080, %v2297
    %v2299 = vmul.f32 %v2082, %v2297
    %v2300 = vrcp.pop %v2206
    %v2301 = vmul.f32 %v2084, %v2300
    %v2302 = vmul.f32 %v2086, %v2300
    %v2303 = vrcp.pop %v2209
    %v2304 = vmul.f32 %v2088, %v2303
    %v2305 = vmul.f32 %v2090, %v2303
    %v2306 = vrcp.pop %v2212
    %v2307 = vmul.f32 %v2092, %v2306
    %v2308 = vmul.f32 %v2094, %v2306
    %v2309 = vrcp.pop %v2215
    %v2310 = vmul.f32 %v2096, %v2309
    %v2311 = vmul.f32 %v2098, %v2309
    %v2312 = vrcp.pop %v2218
    %v2313 = vmul.f32 %v2100, %v2312
    %v2314 = vmul.f32 %v2102, %v2312
    %v2315 = vrcp.pop %v2221
    %v2316 = vmul.f32 %v2104, %v2315
    %v2317 = vmul.f32 %v2106, %v2315
    %v2318 = vrcp.pop %v2224
    %v2319 = vmul.f32 %v2108, %v2318
    %v2320 = vmul.f32 %v2110, %v2318
    %v2321 = vrcp.pop %v2227
    %v2322 = vmul.f32 %v2112, %v2321
    %v2323 = vmul.f32 %v2114, %v2321
    %v2324 = vrcp.pop %v2230
    %v2325 = vmul.f32 %v2116, %v2324
    %v2326 = vmul.f32 %v2118, %v2324
    %v2327 = vrcp.pop %v2233
    %v2328 = vmul.f32 %v2120, %v2327
    %v2329 = vmul.f32 %v2122, %v2327
    %v2330 = vrcp.pop %v2236
    %v2331 = vmul.f32 %v2124, %v2330
    %v2332 = vmul.f32 %v2126, %v2330
    %v2333 = vrcp.pop %v2239
    %v2334 = vmul.f32 %v2128, %v2333
    %v2335 = vmul.f32 %v2130, %v2333
    %v2336 = vrcp.pop %v2242
    %v2337 = vmul.f32 %v2132, %v2336
    %v2338 = vmul.f32 %v2134, %v2336
    %v2339 = vrcp.pop %v2245
    %v2340 = vmul.f32 %v2136, %v2339
    %v2341 = vmul.f32 %v2138, %v2339
    %v2342 = vrcp.pop %v2248
    %v2343 = vmul.f32 %v2140, %v2342
    %v2344 = vmul.f32 %v2142, %v2342
    %v2345 = vrcp.pop %v2251
    %v2346 = vmul.f32 %v2144, %v2345
    %v2347 = vmul.f32 %v2146, %v2345
    %v2348 = vrcp.pop %v2254
    %v2349 = vmul.f32 %v2148, %v2348
    %v2350 = vmul.f32 %v2150, %v2348
    %v2351 = vrcp.pop %v2257
    %v2352 = vmul.f32 %v2152, %v2351
    %v2353 = vmul.f32 %v2154, %v2351
    %v2354 = vrcp.pop %v2260
    %v2355 = vmul.f32 %v2156, %v2354
    %v2356 = vmul.f32 %v2158, %v2354
    %v2357 = vrcp.pop %v2263
    %v2358 = vmul.f32 %v2160, %v2357
    %v2359 = vmul.f32 %v2162, %v2357
    %v2360 = vrcp.pop %v2266
    %v2361 = vmul.f32 %v2164, %v2360
    %v2362 = vmul.f32 %v2166, %v2360
    %v2363 = vrcp.pop %v2269
    %v2364 = vmul.f32 %v2168, %v2363
    %v2365 = vmul.f32 %v2170, %v2363
    %v2366 = vrcp.pop %v2272
    %v2367 = vmul.f32 %v2172, %v2366
    %v2368 = vmul.f32 %v2174, %v2366
    %v2369 = vrcp.pop %v2275
    %v2370 = vmul.f32 %v2176, %v2369
    %v2371 = vmul.f32 %v2178, %v2369
    %v2372 = vrcp.pop %v2278
    %v2373 = vmul.f32 %v2180, %v2372
    %v2374 = vmul.f32 %v2182, %v2372
    %2375 = vmatprep.subr.mxu0 %v2281
    %2376 = vmatpush1.xpose.msra.mxu0 %v2280
    %2377 = vmatprep.subr.mxu0 %v2284
    %2378 = vmatpush1.xpose.msra.mxu0 %v2283
    %2379 = vmatprep.subr.mxu0 %v2287
    %2380 = vmatpush1.xpose.msra.mxu0 %v2286
    %2381 = vmatprep.subr.mxu0 %v2290
    %2382 = vmatpush1.xpose.msra.mxu0 %v2289
    %2383 = vmatprep.subr.mxu0 %v2293
    %2384 = vmatpush1.xpose.msra.mxu0 %v2292
    %2385 = vmatprep.subr.mxu0 %v2296
    %2386 = vmatpush1.xpose.msra.mxu0 %v2295
    %2387 = vmatprep.subr.mxu0 %v2299
    %2388 = vmatpush1.xpose.msra.mxu0 %v2298
    %2389 = vmatprep.subr.mxu0 %v2302
    %2390 = vmatpush1.xpose.msra.mxu0 %v2301
    %2391 = vmatprep.subr.mxu0 %v2305
    %2392 = vmatpush1.xpose.msra.mxu0 %v2304
    %2393 = vmatprep.subr.mxu0 %v2308
    %2394 = vmatpush1.xpose.msra.mxu0 %v2307
    %2395 = vmatprep.subr.mxu0 %v2311
    %2396 = vmatpush1.xpose.msra.mxu0 %v2310
    %2397 = vmatprep.subr.mxu0 %v2314
    %2398 = vmatpush1.xpose.msra.mxu0 %v2313
    %2399 = vmatprep.subr.mxu0 %v2317
    %2400 = vmatpush1.xpose.msra.mxu0 %v2316
    %2401 = vmatprep.subr.mxu0 %v2320
    %2402 = vmatpush1.xpose.msra.mxu0 %v2319
    %2403 = vmatprep.subr.mxu0 %v2323
    %2404 = vmatpush1.xpose.msra.mxu0 %v2322
    %2405 = vmatprep.subr.mxu0 %v2326
    %2406 = vmatpush1.xpose.msra.mxu0 %v2325
    %2407 = vmatprep.subr.mxu0 %v2329
    %2408 = vmatpush1.xpose.msra.mxu0 %v2328
    %2409 = vmatprep.subr.mxu0 %v2332
    %2410 = vmatpush1.xpose.msra.mxu0 %v2331
    %2411 = vmatprep.subr.mxu0 %v2335
    %2412 = vmatpush1.xpose.msra.mxu0 %v2334
    %2413 = vmatprep.subr.mxu0 %v2338
    %2414 = vmatpush1.xpose.msra.mxu0 %v2337
    %2415 = vmatprep.subr.mxu0 %v2341
    %2416 = vmatpush1.xpose.msra.mxu0 %v2340
    %2417 = vmatprep.subr.mxu0 %v2344
    %2418 = vmatpush1.xpose.msra.mxu0 %v2343
    %2419 = vmatprep.subr.mxu0 %v2347
    %2420 = vmatpush1.xpose.msra.mxu0 %v2346
    %2421 = vmatprep.subr.mxu0 %v2350
    %2422 = vmatpush1.xpose.msra.mxu0 %v2349
    %2423 = vmatprep.subr.mxu0 %v2353
    %2424 = vmatpush1.xpose.msra.mxu0 %v2352
    %2425 = vmatprep.subr.mxu0 %v2356
    %2426 = vmatpush1.xpose.msra.mxu0 %v2355
    %2427 = vmatprep.subr.mxu0 %v2359
    %2428 = vmatpush1.xpose.msra.mxu0 %v2358
    %2429 = vmatprep.subr.mxu0 %v2362
    %2430 = vmatpush1.xpose.msra.mxu0 %v2361
    %2431 = vmatprep.subr.mxu0 %v2365
    %2432 = vmatpush1.xpose.msra.mxu0 %v2364
    %2433 = vmatprep.subr.mxu0 %v2368
    %2434 = vmatpush1.xpose.msra.mxu0 %v2367
    %2435 = vmatprep.subr.mxu0 %v2371
    %2436 = vmatpush1.xpose.msra.mxu0 %v2370
    %2437 = vmatprep.subr.mxu0 %v2374
    %2438 = vmatpush1.xpose.msra.mxu0 %v2373
    %2439 = vmatprep.mubr.f32.mxu0 %v1434
    %2440 = vmatmul.mubr.f32.gmra.mrb[0].mxu0 %v1432
    %v2441 = vpop.f32.mrb[0].mxu0
    %v2442 = vadd.f32 0.0, %v2441
    %v2443 = vpop.f32.mrb[0].mxu0
    %v2444 = vadd.f32 0.0, %v2443
    %2445 = vmatprep.mubr.f32.mxu0 %v1440
    %2446 = vmatmul.mubr.f32.gmra.mrb[0].mxu0 %v1438
    %v2447 = vpop.f32.mrb[0].mxu0
    %v2448 = vadd.f32 0.0, %v2447
    %v2449 = vpop.f32.mrb[0].mxu0
    %v2450 = vadd.f32 0.0, %v2449
    %2451 = vmatprep.mubr.f32.mxu0 %v1446
    %2452 = vmatmul.mubr.f32.gmra.mrb[0].mxu0 %v1444
    %v2453 = vpop.f32.mrb[0].mxu0
    %v2454 = vadd.f32 0.0, %v2453
    %v2455 = vpop.f32.mrb[0].mxu0
    %v2456 = vadd.f32 0.0, %v2455
    %2457 = vmatprep.mubr.f32.mxu0 %v1452
    %2458 = vmatmul.mubr.f32.gmra.mrb[0].mxu0 %v1450
    %v2459 = vpop.f32.mrb[0].mxu0
    %v2460 = vadd.f32 0.0, %v2459
    %v2461 = vpop.f32.mrb[0].mxu0
    %v2462 = vadd.f32 0.0, %v2461
    %2463 = vmatprep.mubr.f32.mxu0 %v1458
    %2464 = vmatmul.mubr.f32.gmra.mrb[0].mxu0 %v1456
    %v2465 = vpop.f32.mrb[0].mxu0
    %v2466 = vadd.f32 0.0, %v2465
    %v2467 = vpop.f32.mrb[0].mxu0
    %v2468 = vadd.f32 0.0, %v2467
    %2469 = vmatprep.mubr.f32.mxu0 %v1464
    %2470 = vmatmul.mubr.f32.gmra.mrb[0].mxu0 %v1462
    %v2471 = vpop.f32.mrb[0].mxu0
    %v2472 = vadd.f32 0.0, %v2471
    %v2473 = vpop.f32.mrb[0].mxu0
    %v2474 = vadd.f32 0.0, %v2473
    %2475 = vmatprep.mubr.f32.mxu0 %v1470
    %2476 = vmatmul.mubr.f32.gmra.mrb[0].mxu0 %v1468
    %v2477 = vpop.f32.mrb[0].mxu0
    %v2478 = vadd.f32 0.0, %v2477
    %v2479 = vpop.f32.mrb[0].mxu0
    %v2480 = vadd.f32 0.0, %v2479
    %2481 = vmatprep.mubr.f32.mxu0 %v1476
    %2482 = vmatmul.mubr.f32.gmra.mrb[0].mxu0 %v1474
    %v2483 = vpop.f32.mrb[0].mxu0
    %v2484 = vadd.f32 0.0, %v2483
    %v2485 = vpop.f32.mrb[0].mxu0
    %v2486 = vadd.f32 0.0, %v2485
    %2487 = vdwg.mxu0
    %v2488 = vmul.f32 %v1287, %v2442
    %v2489 = vmul.f32 %v1287, %v2444
    %v2490 = vmul.f32 %v1287, %v2448
    %v2491 = vmul.f32 %v1287, %v2450
    %v2492 = vmul.f32 %v1287, %v2454
    %v2493 = vmul.f32 %v1287, %v2456
    %v2494 = vmul.f32 %v1287, %v2460
    %v2495 = vmul.f32 %v1287, %v2462
    %v2496 = vmul.f32 %v1287, %v2466
    %v2497 = vmul.f32 %v1287, %v2468
    %v2498 = vmul.f32 %v1287, %v2472
    %v2499 = vmul.f32 %v1287, %v2474
    %v2500 = vmul.f32 %v1287, %v2478
    %v2501 = vmul.f32 %v1287, %v2480
    %v2502 = vmul.f32 %v1287, %v2484
    %v2503 = vmul.f32 %v1287, %v2486
    %v2504 = vadd.f32 %v2488, %v1337
    %v2505 = vadd.f32 %v2489, %v1338
    %v2506 = vadd.f32 %v2490, %v1339
    %v2507 = vadd.f32 %v2491, %v1340
    %v2508 = vadd.f32 %v2492, %v1341
    %v2509 = vadd.f32 %v2493, %v1342
    %v2510 = vadd.f32 %v2494, %v1343
    %v2511 = vadd.f32 %v2495, %v1344
    %v2512 = vadd.f32 %v2496, %v1345
    %v2513 = vadd.f32 %v2497, %v1346
    %v2514 = vadd.f32 %v2498, %v1347
    %v2515 = vadd.f32 %v2499, %v1348
    %v2516 = vadd.f32 %v2500, %v1349
    %v2517 = vadd.f32 %v2501, %v1350
    %v2518 = vadd.f32 %v2502, %v1351
    %v2519 = vadd.f32 %v2503, %v1352
    %s2520 = scalar_lea.vmem [#allocation6], 128
    %2521 = vst [vmem:[%s2520] sm:$0xff] %v2504
    %2522 = vst [vmem:[%s2520 + $0x8] sm:$0xff] %v2505
    %2523 = vst [vmem:[%s2520 + $0x10] sm:$0xff] %v2506
    %2524 = vst [vmem:[%s2520 + $0x18] sm:$0xff] %v2507
    %2525 = vst [vmem:[%s2520 + $0x20] sm:$0xff] %v2508
    %2526 = vst [vmem:[%s2520 + $0x28] sm:$0xff] %v2509
    %2527 = vst [vmem:[%s2520 + $0x30] sm:$0xff] %v2510
    %2528 = vst [vmem:[%s2520 + $0x38] sm:$0xff] %v2511
    %2529 = vst [vmem:[%s2520 + $0x40] sm:$0xff] %v2512
    %2530 = vst [vmem:[%s2520 + $0x48] sm:$0xff] %v2513
    %2531 = vst [vmem:[%s2520 + $0x50] sm:$0xff] %v2514
    %2532 = vst [vmem:[%s2520 + $0x58] sm:$0xff] %v2515
    %2533 = vst [vmem:[%s2520 + $0x60] sm:$0xff] %v2516
    %2534 = vst [vmem:[%s2520 + $0x68] sm:$0xff] %v2517
    %2535 = vst [vmem:[%s2520 + $0x70] sm:$0xff] %v2518
    %2536 = vst [vmem:[%s2520 + $0x78] sm:$0xff] %v2519
    %s2537 = scalar_lea.vmem [#allocation3], 256
    %v2538 = vld [vmem:[%s2537] sm:$0xff]
    %v2539 = vld [vmem:[%s2537 + $0x8] sm:$0xff]
    %v2540 = vld [vmem:[%s2537 + $0x10] sm:$0xff]
    %v2541 = vld [vmem:[%s2537 + $0x18] sm:$0xff]
    %v2542 = vld [vmem:[%s2537 + $0x20] sm:$0xff]
    %v2543 = vld [vmem:[%s2537 + $0x28] sm:$0xff]
    %v2544 = vld [vmem:[%s2537 + $0x30] sm:$0xff]
    %v2545 = vld [vmem:[%s2537 + $0x38] sm:$0xff]
    %v2546 = vld [vmem:[%s2537 + $0x40] sm:$0xff]
    %v2547 = vld [vmem:[%s2537 + $0x48] sm:$0xff]
    %v2548 = vld [vmem:[%s2537 + $0x50] sm:$0xff]
    %v2549 = vld [vmem:[%s2537 + $0x58] sm:$0xff]
    %v2550 = vld [vmem:[%s2537 + $0x60] sm:$0xff]
    %v2551 = vld [vmem:[%s2537 + $0x68] sm:$0xff]
    %v2552 = vld [vmem:[%s2537 + $0x70] sm:$0xff]
    %v2553 = vld [vmem:[%s2537 + $0x78] sm:$0xff]
    %2554 = vmatprep.subr.mxu0 %v2539
    %2555 = vmatpush1.msra.mxu0 %v2538
    %2556 = vmatprep.subr.mxu0 %v2541
    %2557 = vmatpush1.msra.mxu0 %v2540
    %2558 = vmatprep.subr.mxu0 %v2543
    %2559 = vmatpush1.msra.mxu0 %v2542
    %2560 = vmatprep.subr.mxu0 %v2545
    %2561 = vmatpush1.msra.mxu0 %v2544
    %2562 = vmatprep.subr.mxu0 %v2547
    %2563 = vmatpush1.msra.mxu0 %v2546
    %2564 = vmatprep.subr.mxu0 %v2549
    %2565 = vmatpush1.msra.mxu0 %v2548
    %2566 = vmatprep.subr.mxu0 %v2551
    %2567 = vmatpush1.msra.mxu0 %v2550
    %2568 = vmatprep.subr.mxu0 %v2553
    %2569 = vmatpush1.msra.mxu0 %v2552
    %2570 = vmatprep.subr.mxu0 0.0
    %2571 = vmatpush1.msra.mxu0 0.0
    %2572 = vmatprep.subr.mxu0 0.0
    %2573 = vmatpush1.msra.mxu0 0.0
    %2574 = vmatprep.subr.mxu0 0.0
    %2575 = vmatpush1.msra.mxu0 0.0
    %2576 = vmatprep.subr.mxu0 0.0
    %2577 = vmatpush1.msra.mxu0 0.0
    %2578 = vmatprep.subr.mxu0 0.0
    %2579 = vmatpush1.msra.mxu0 0.0
    %2580 = vmatprep.subr.mxu0 0.0
    %2581 = vmatpush1.msra.mxu0 0.0
    %2582 = vmatprep.subr.mxu0 0.0
    %2583 = vmatpush1.msra.mxu0 0.0
    %2584 = vmatprep.subr.mxu0 0.0
    %2585 = vmatpush1.msra.mxu0 0.0
    %2586 = vmatprep.subr.mxu0 0.0
    %2587 = vmatpush1.msra.mxu0 0.0
    %2588 = vmatprep.subr.mxu0 0.0
    %2589 = vmatpush1.msra.mxu0 0.0
    %2590 = vmatprep.subr.mxu0 0.0
    %2591 = vmatpush1.msra.mxu0 0.0
    %2592 = vmatprep.subr.mxu0 0.0
    %2593 = vmatpush1.msra.mxu0 0.0
    %2594 = vmatprep.subr.mxu0 0.0
    %2595 = vmatpush1.msra.mxu0 0.0
    %2596 = vmatprep.subr.mxu0 0.0
    %2597 = vmatpush1.msra.mxu0 0.0
    %2598 = vmatprep.subr.mxu0 0.0
    %2599 = vmatpush1.msra.mxu0 0.0
    %2600 = vmatprep.subr.mxu0 0.0
    %2601 = vmatpush1.msra.mxu0 0.0
    %2602 = vmatprep.subr.mxu0 0.0
    %2603 = vmatpush1.msra.mxu0 0.0
    %2604 = vmatprep.subr.mxu0 0.0
    %2605 = vmatpush1.msra.mxu0 0.0
    %2606 = vmatprep.subr.mxu0 0.0
    %2607 = vmatpush1.msra.mxu0 0.0
    %2608 = vmatprep.subr.mxu0 0.0
    %2609 = vmatpush1.msra.mxu0 0.0
    %2610 = vmatprep.subr.mxu0 0.0
    %2611 = vmatpush1.msra.mxu0 0.0
    %2612 = vmatprep.subr.mxu0 0.0
    %2613 = vmatpush1.msra.mxu0 0.0
    %2614 = vmatprep.subr.mxu0 0.0
    %2615 = vmatpush1.msra.mxu0 0.0
    %2616 = vmatprep.subr.mxu0 0.0
    %2617 = vmatpush1.msra.mxu0 0.0
    %2618 = vmatprep.mubr.f32.mxu0 0.0
    %2619 = vmatmul.mubr.f32.gmra.mrb[0].mxu0 %v122
    %v2620 = vpop.f32.mrb[0].mxu0
    %v2621 = vadd.f32 %v73, %v2620
    %v2622 = vpop.f32.mrb[0].mxu0
    %v2623 = vadd.f32 %v73, %v2622
    %2624 = vmatprep.mubr.f32.mxu0 0.0
    %2625 = vmatmul.mubr.f32.gmra.mrb[0].mxu0 %v125
    %v2626 = vpop.f32.mrb[0].mxu0
    %v2627 = vadd.f32 %v78, %v2626
    %v2628 = vpop.f32.mrb[0].mxu0
    %v2629 = vadd.f32 %v78, %v2628
    %2630 = vmatprep.mubr.f32.mxu0 0.0
    %2631 = vmatmul.mubr.f32.gmra.mrb[0].mxu0 %v128
    %v2632 = vpop.f32.mrb[0].mxu0
    %v2633 = vadd.f32 %v83, %v2632
    %v2634 = vpop.f32.mrb[0].mxu0
    %v2635 = vadd.f32 %v83, %v2634
    %2636 = vmatprep.mubr.f32.mxu0 0.0
    %2637 = vmatmul.mubr.f32.gmra.mrb[0].mxu0 %v131
    %v2638 = vpop.f32.mrb[0].mxu0
    %v2639 = vadd.f32 %v88, %v2638
    %v2640 = vpop.f32.mrb[0].mxu0
    %v2641 = vadd.f32 %v88, %v2640
    %2642 = vmatprep.mubr.f32.mxu0 0.0
    %2643 = vmatmul.mubr.f32.gmra.mrb[0].mxu0 %v134
    %v2644 = vpop.f32.mrb[0].mxu0
    %v2645 = vadd.f32 %v93, %v2644
    %v2646 = vpop.f32.mrb[0].mxu0
    %v2647 = vadd.f32 %v93, %v2646
    %2648 = vmatprep.mubr.f32.mxu0 0.0
    %2649 = vmatmul.mubr.f32.gmra.mrb[0].mxu0 %v137
    %v2650 = vpop.f32.mrb[0].mxu0
    %v2651 = vadd.f32 %v98, %v2650
    %v2652 = vpop.f32.mrb[0].mxu0
    %v2653 = vadd.f32 %v98, %v2652
    %2654 = vmatprep.mubr.f32.mxu0 0.0
    %2655 = vmatmul.mubr.f32.gmra.mrb[0].mxu0 %v140
    %v2656 = vpop.f32.mrb[0].mxu0
    %v2657 = vadd.f32 %v103, %v2656
    %v2658 = vpop.f32.mrb[0].mxu0
    %v2659 = vadd.f32 %v103, %v2658
    %2660 = vmatprep.mubr.f32.mxu0 0.0
    %2661 = vmatmul.mubr.f32.gmra.mrb[0].mxu0 %v143
    %v2662 = vpop.f32.mrb[0].mxu0
    %v2663 = vadd.f32 %v108, %v2662
    %v2664 = vpop.f32.mrb[0].mxu0
    %v2665 = vadd.f32 %v108, %v2664
    %2666 = vmatprep.mubr.f32.mxu0 0.0
    %2667 = vmatmul.mubr.f32.gmra.mrb[0].mxu0 %v146
    %v2668 = vpop.f32.mrb[0].mxu0
    %v2669 = vadd.f32 %v113, %v2668
    %v2670 = vpop.f32.mrb[0].mxu0
    %v2671 = vadd.f32 %v113, %v2670
    %2672 = vmatprep.mubr.f32.mxu0 0.0
    %2673 = vmatmul.mubr.f32.gmra.mrb[0].mxu0 %v149
    %v2674 = vpop.f32.mrb[0].mxu0
    %v2675 = vadd.f32 %v118, %v2674
    %v2676 = vpop.f32.mrb[0].mxu0
    %v2677 = vadd.f32 %v118, %v2676
    %2678 = vdwg.mxu0
    %2679 = vxpose.xlu0.b32.start [1/16] %v2621, 128
    %2680 = vxpose.xlu0.b32.cont [2/16] 0.0, 128
    %2681 = vxpose.xlu0.b32.cont [3/16] 0.0, 128
    %2682 = vxpose.xlu0.b32.cont [4/16] 0.0, 128
    %2683 = vxpose.xlu0.b32.cont [5/16] 0.0, 128
    %2684 = vxpose.xlu0.b32.cont [6/16] 0.0, 128
    %2685 = vxpose.xlu0.b32.cont [7/16] 0.0, 128
    %2686 = vxpose.xlu0.b32.cont [8/16] 0.0, 128
    %2687 = vxpose.xlu0.b32.cont [9/16] 0.0, 128
    %2688 = vxpose.xlu0.b32.cont [10/16] 0.0, 128
    %2689 = vxpose.xlu0.b32.cont [11/16] 0.0, 128
    %2690 = vxpose.xlu0.b32.cont [12/16] 0.0, 128
    %2691 = vxpose.xlu0.b32.cont [13/16] 0.0, 128
    %2692 = vxpose.xlu0.b32.cont [14/16] 0.0, 128
    %2693 = vxpose.xlu0.b32.cont [15/16] 0.0, 128
    %2694 = vxpose.xlu0.b32.end [16/16] 0.0, 128
    %v2695 = vpop.trf.xlu0
    %v2696 = vpop.trf.xlu0
    %v2697 = vpop.trf.xlu0
    %v2698 = vpop.trf.xlu0
    %v2699 = vpop.trf.xlu0
    %v2700 = vpop.trf.xlu0
    %v2701 = vpop.trf.xlu0
    %v2702 = vpop.trf.xlu0
    %v2703 = vpop.trf.xlu0
    %v2704 = vpop.trf.xlu0
    %v2705 = vpop.trf.xlu0
    %v2706 = vpop.trf.xlu0
    %v2707 = vpop.trf.xlu0
    %v2708 = vpop.trf.xlu0
    %v2709 = vpop.trf.xlu0
    %v2710 = vpop.trf.xlu0
    %2711 = vxpose.xlu0.b32.start [1/16] %v2623, 128
    %2712 = vxpose.xlu0.b32.cont [2/16] 0.0, 128
    %2713 = vxpose.xlu0.b32.cont [3/16] 0.0, 128
    %2714 = vxpose.xlu0.b32.cont [4/16] 0.0, 128
    %2715 = vxpose.xlu0.b32.cont [5/16] 0.0, 128
    %2716 = vxpose.xlu0.b32.cont [6/16] 0.0, 128
    %2717 = vxpose.xlu0.b32.cont [7/16] 0.0, 128
    %2718 = vxpose.xlu0.b32.cont [8/16] 0.0, 128
    %2719 = vxpose.xlu0.b32.cont [9/16] 0.0, 128
    %2720 = vxpose.xlu0.b32.cont [10/16] 0.0, 128
    %2721 = vxpose.xlu0.b32.cont [11/16] 0.0, 128
    %2722 = vxpose.xlu0.b32.cont [12/16] 0.0, 128
    %2723 = vxpose.xlu0.b32.cont [13/16] 0.0, 128
    %2724 = vxpose.xlu0.b32.cont [14/16] 0.0, 128
    %2725 = vxpose.xlu0.b32.cont [15/16] 0.0, 128
    %2726 = vxpose.xlu0.b32.end [16/16] 0.0, 128
    %v2727 = vpop.trf.xlu0
    %v2728 = vpop.trf.xlu0
    %v2729 = vpop.trf.xlu0
    %v2730 = vpop.trf.xlu0
    %v2731 = vpop.trf.xlu0
    %v2732 = vpop.trf.xlu0
    %v2733 = vpop.trf.xlu0
    %v2734 = vpop.trf.xlu0
    %v2735 = vpop.trf.xlu0
    %v2736 = vpop.trf.xlu0
    %v2737 = vpop.trf.xlu0
    %v2738 = vpop.trf.xlu0
    %v2739 = vpop.trf.xlu0
    %v2740 = vpop.trf.xlu0
    %v2741 = vpop.trf.xlu0
    %v2742 = vpop.trf.xlu0
    %v2744 = vsel %vm340, %v2695, 0
    %v2747 = vsel %vm340, %v2696, 0
    %v2750 = vsel %vm340, %v2697, 0
    %v2753 = vsel %vm340, %v2698, 0
    %v2756 = vsel %vm340, %v2699, 0
    %v2759 = vsel %vm340, %v2700, 0
    %v2762 = vsel %vm340, %v2701, 0
    %v2765 = vsel %vm340, %v2702, 0
    %v2768 = vsel %vm340, %v2703, 0
    %v2771 = vsel %vm340, %v2704, 0
    %v2774 = vsel %vm340, %v2705, 0
    %v2777 = vsel %vm340, %v2706, 0
    %v2780 = vsel %vm340, %v2707, 0
    %v2783 = vsel %vm340, %v2708, 0
    %v2786 = vsel %vm340, %v2709, 0
    %v2789 = vsel %vm340, %v2710, 0
    %v2792 = vsel %vm340, %v2727, 0
    %v2795 = vsel %vm340, %v2728, 0
    %v2798 = vsel %vm340, %v2729, 0
    %v2801 = vsel %vm340, %v2730, 0
    %v2804 = vsel %vm340, %v2731, 0
    %v2807 = vsel %vm340, %v2732, 0
    %v2810 = vsel %vm340, %v2733, 0
    %v2813 = vsel %vm340, %v2734, 0
    %v2816 = vsel %vm340, %v2735, 0
    %v2819 = vsel %vm340, %v2736, 0
    %v2822 = vsel %vm340, %v2737, 0
    %v2825 = vsel %vm340, %v2738, 0
    %v2828 = vsel %vm340, %v2739, 0
    %v2831 = vsel %vm340, %v2740, 0
    %v2834 = vsel %vm340, %v2741, 0
    %v2837 = vsel %vm340, %v2742, 0
    %2839 = vmatprep.subr.mxu0 %v2629
    %2840 = vmatpush1.msra.mxu0 %v2627
    %2841 = vmatprep.subr.mxu0 0.0
    %2842 = vmatpush1.msra.mxu0 0.0
    %2843 = vmatprep.subr.mxu0 0.0
    %2844 = vmatpush1.msra.mxu0 0.0
    %2845 = vmatprep.subr.mxu0 0.0
    %2846 = vmatpush1.msra.mxu0 0.0
    %2847 = vmatprep.subr.mxu0 0.0
    %2848 = vmatpush1.msra.mxu0 0.0
    %2849 = vmatprep.subr.mxu0 0.0
    %2850 = vmatpush1.msra.mxu0 0.0
    %2851 = vmatprep.subr.mxu0 0.0
    %2852 = vmatpush1.msra.mxu0 0.0
    %2853 = vmatprep.subr.mxu0 0.0
    %2854 = vmatpush1.msra.mxu0 0.0
    %2855 = vmatprep.subr.mxu0 0.0
    %2856 = vmatpush1.msra.mxu0 0.0
    %2857 = vmatprep.subr.mxu0 0.0
    %2858 = vmatpush1.msra.mxu0 0.0
    %2859 = vmatprep.subr.mxu0 0.0
    %2860 = vmatpush1.msra.mxu0 0.0
    %2861 = vmatprep.subr.mxu0 0.0
    %2862 = vmatpush1.msra.mxu0 0.0
    %2863 = vmatprep.subr.mxu0 0.0
    %2864 = vmatpush1.msra.mxu0 0.0
    %2865 = vmatprep.subr.mxu0 0.0
    %2866 = vmatpush1.msra.mxu0 0.0
    %2867 = vmatprep.subr.mxu0 0.0
    %2868 = vmatpush1.msra.mxu0 0.0
    %2869 = vmatprep.subr.mxu0 0.0
    %2870 = vmatpush1.msra.mxu0 0.0
    %2871 = vmatprep.subr.mxu0 0.0
    %2872 = vmatpush1.msra.mxu0 0.0
    %2873 = vmatprep.subr.mxu0 0.0
    %2874 = vmatpush1.msra.mxu0 0.0
    %2875 = vmatprep.subr.mxu0 0.0
    %2876 = vmatpush1.msra.mxu0 0.0
    %2877 = vmatprep.subr.mxu0 0.0
    %2878 = vmatpush1.msra.mxu0 0.0
    %2879 = vmatprep.subr.mxu0 0.0
    %2880 = vmatpush1.msra.mxu0 0.0
    %2881 = vmatprep.subr.mxu0 0.0
    %2882 = vmatpush1.msra.mxu0 0.0
    %2883 = vmatprep.subr.mxu0 0.0
    %2884 = vmatpush1.msra.mxu0 0.0
    %2885 = vmatprep.subr.mxu0 0.0
    %2886 = vmatpush1.msra.mxu0 0.0
    %2887 = vmatprep.subr.mxu0 0.0
    %2888 = vmatpush1.msra.mxu0 0.0
    %2889 = vmatprep.subr.mxu0 0.0
    %2890 = vmatpush1.msra.mxu0 0.0
    %2891 = vmatprep.subr.mxu0 0.0
    %2892 = vmatpush1.msra.mxu0 0.0
    %2893 = vmatprep.subr.mxu0 0.0
    %2894 = vmatpush1.msra.mxu0 0.0
    %2895 = vmatprep.subr.mxu0 0.0
    %2896 = vmatpush1.msra.mxu0 0.0
    %2897 = vmatprep.subr.mxu0 0.0
    %2898 = vmatpush1.msra.mxu0 0.0
    %2899 = vmatprep.subr.mxu0 0.0
    %2900 = vmatpush1.msra.mxu0 0.0
    %2901 = vmatprep.subr.mxu0 0.0
    %2902 = vmatpush1.msra.mxu0 0.0
    %2903 = vmatprep.mubr.f32.mxu0 0.0
    %2904 = vmatmul.mubr.f32.gmra.mrb[0].mxu0 %v2744
    %v2905 = vpop.f32.mrb[0].mxu0
    %v2906 = vadd.f32 0.0, %v2905
    %v2907 = vpop.f32.mrb[0].mxu0
    %v2908 = vadd.f32 0.0, %v2907
    %2909 = vmatprep.mubr.f32.mxu0 0.0
    %2910 = vmatmul.mubr.f32.gmra.mrb[0].mxu0 %v2747
    %v2911 = vpop.f32.mrb[0].mxu0
    %v2912 = vadd.f32 0.0, %v2911
    %v2913 = vpop.f32.mrb[0].mxu0
    %v2914 = vadd.f32 0.0, %v2913
    %2915 = vmatprep.mubr.f32.mxu0 0.0
    %2916 = vmatmul.mubr.f32.gmra.mrb[0].mxu0 %v2750
    %v2917 = vpop.f32.mrb[0].mxu0
    %v2918 = vadd.f32 0.0, %v2917
    %v2919 = vpop.f32.mrb[0].mxu0
    %v2920 = vadd.f32 0.0, %v2919
    %2921 = vmatprep.mubr.f32.mxu0 0.0
    %2922 = vmatmul.mubr.f32.gmra.mrb[0].mxu0 %v2753
    %v2923 = vpop.f32.mrb[0].mxu0
    %v2924 = vadd.f32 0.0, %v2923
    %v2925 = vpop.f32.mrb[0].mxu0
    %v2926 = vadd.f32 0.0, %v2925
    %2927 = vmatprep.mubr.f32.mxu0 0.0
    %2928 = vmatmul.mubr.f32.gmra.mrb[0].mxu0 %v2756
    %v2929 = vpop.f32.mrb[0].mxu0
    %v2930 = vadd.f32 0.0, %v2929
    %v2931 = vpop.f32.mrb[0].mxu0
    %v2932 = vadd.f32 0.0, %v2931
    %2933 = vmatprep.mubr.f32.mxu0 0.0
    %2934 = vmatmul.mubr.f32.gmra.mrb[0].mxu0 %v2759
    %v2935 = vpop.f32.mrb[0].mxu0
    %v2936 = vadd.f32 0.0, %v2935
    %v2937 = vpop.f32.mrb[0].mxu0
    %v2938 = vadd.f32 0.0, %v2937
    %2939 = vmatprep.mubr.f32.mxu0 0.0
    %2940 = vmatmul.mubr.f32.gmra.mrb[0].mxu0 %v2762
    %v2941 = vpop.f32.mrb[0].mxu0
    %v2942 = vadd.f32 0.0, %v2941
    %v2943 = vpop.f32.mrb[0].mxu0
    %v2944 = vadd.f32 0.0, %v2943
    %2945 = vmatprep.mubr.f32.mxu0 0.0
    %2946 = vmatmul.mubr.f32.gmra.mrb[0].mxu0 %v2765
    %v2947 = vpop.f32.mrb[0].mxu0
    %v2948 = vadd.f32 0.0, %v2947
    %v2949 = vpop.f32.mrb[0].mxu0
    %v2950 = vadd.f32 0.0, %v2949
    %2951 = vmatprep.mubr.f32.mxu0 0.0
    %2952 = vmatmul.mubr.f32.gmra.mrb[0].mxu0 %v2768
    %v2953 = vpop.f32.mrb[0].mxu0
    %v2954 = vadd.f32 0.0, %v2953
    %v2955 = vpop.f32.mrb[0].mxu0
    %v2956 = vadd.f32 0.0, %v2955
    %2957 = vmatprep.mubr.f32.mxu0 0.0
    %2958 = vmatmul.mubr.f32.gmra.mrb[0].mxu0 %v2771
    %v2959 = vpop.f32.mrb[0].mxu0
    %v2960 = vadd.f32 0.0, %v2959
    %v2961 = vpop.f32.mrb[0].mxu0
    %v2962 = vadd.f32 0.0, %v2961
    %2963 = vmatprep.mubr.f32.mxu0 0.0
    %2964 = vmatmul.mubr.f32.gmra.mrb[0].mxu0 %v2774
    %v2965 = vpop.f32.mrb[0].mxu0
    %v2966 = vadd.f32 0.0, %v2965
    %v2967 = vpop.f32.mrb[0].mxu0
    %v2968 = vadd.f32 0.0, %v2967
    %2969 = vmatprep.mubr.f32.mxu0 0.0
    %2970 = vmatmul.mubr.f32.gmra.mrb[0].mxu0 %v2777
    %v2971 = vpop.f32.mrb[0].mxu0
    %v2972 = vadd.f32 0.0, %v2971
    %v2973 = vpop.f32.mrb[0].mxu0
    %v2974 = vadd.f32 0.0, %v2973
    %2975 = vmatprep.mubr.f32.mxu0 0.0
    %2976 = vmatmul.mubr.f32.gmra.mrb[0].mxu0 %v2780
    %v2977 = vpop.f32.mrb[0].mxu0
    %v2978 = vadd.f32 0.0, %v2977
    %v2979 = vpop.f32.mrb[0].mxu0
    %v2980 = vadd.f32 0.0, %v2979
    %2981 = vmatprep.mubr.f32.mxu0 0.0
    %2982 = vmatmul.mubr.f32.gmra.mrb[0].mxu0 %v2783
    %v2983 = vpop.f32.mrb[0].mxu0
    %v2984 = vadd.f32 0.0, %v2983
    %v2985 = vpop.f32.mrb[0].mxu0
    %v2986 = vadd.f32 0.0, %v2985
    %2987 = vmatprep.mubr.f32.mxu0 0.0
    %2988 = vmatmul.mubr.f32.gmra.mrb[0].mxu0 %v2786
    %v2989 = vpop.f32.mrb[0].mxu0
    %v2990 = vadd.f32 0.0, %v2989
    %v2991 = vpop.f32.mrb[0].mxu0
    %v2992 = vadd.f32 0.0, %v2991
    %2993 = vmatprep.mubr.f32.mxu0 0.0
    %2994 = vmatmul.mubr.f32.gmra.mrb[0].mxu0 %v2789
    %v2995 = vpop.f32.mrb[0].mxu0
    %v2996 = vadd.f32 0.0, %v2995
    %v2997 = vpop.f32.mrb[0].mxu0
    %v2998 = vadd.f32 0.0, %v2997
    %2999 = vmatprep.mubr.f32.mxu0 0.0
    %3000 = vmatmul.mubr.f32.gmra.mrb[0].mxu0 %v2792
    %v3001 = vpop.f32.mrb[0].mxu0
    %v3002 = vadd.f32 0.0, %v3001
    %v3003 = vpop.f32.mrb[0].mxu0
    %v3004 = vadd.f32 0.0, %v3003
    %3005 = vmatprep.mubr.f32.mxu0 0.0
    %3006 = vmatmul.mubr.f32.gmra.mrb[0].mxu0 %v2795
    %v3007 = vpop.f32.mrb[0].mxu0
    %v3008 = vadd.f32 0.0, %v3007
    %v3009 = vpop.f32.mrb[0].mxu0
    %v3010 = vadd.f32 0.0, %v3009
    %3011 = vmatprep.mubr.f32.mxu0 0.0
    %3012 = vmatmul.mubr.f32.gmra.mrb[0].mxu0 %v2798
    %v3013 = vpop.f32.mrb[0].mxu0
    %v3014 = vadd.f32 0.0, %v3013
    %v3015 = vpop.f32.mrb[0].mxu0
    %v3016 = vadd.f32 0.0, %v3015
    %3017 = vmatprep.mubr.f32.mxu0 0.0
    %3018 = vmatmul.mubr.f32.gmra.mrb[0].mxu0 %v2801
    %v3019 = vpop.f32.mrb[0].mxu0
    %v3020 = vadd.f32 0.0, %v3019
    %v3021 = vpop.f32.mrb[0].mxu0
    %v3022 = vadd.f32 0.0, %v3021
    %3023 = vmatprep.mubr.f32.mxu0 0.0
    %3024 = vmatmul.mubr.f32.gmra.mrb[0].mxu0 %v2804
    %v3025 = vpop.f32.mrb[0].mxu0
    %v3026 = vadd.f32 0.0, %v3025
    %v3027 = vpop.f32.mrb[0].mxu0
    %v3028 = vadd.f32 0.0, %v3027
    %3029 = vmatprep.mubr.f32.mxu0 0.0
    %3030 = vmatmul.mubr.f32.gmra.mrb[0].mxu0 %v2807
    %v3031 = vpop.f32.mrb[0].mxu0
    %v3032 = vadd.f32 0.0, %v3031
    %v3033 = vpop.f32.mrb[0].mxu0
    %v3034 = vadd.f32 0.0, %v3033
    %3035 = vmatprep.mubr.f32.mxu0 0.0
    %3036 = vmatmul.mubr.f32.gmra.mrb[0].mxu0 %v2810
    %v3037 = vpop.f32.mrb[0].mxu0
    %v3038 = vadd.f32 0.0, %v3037
    %v3039 = vpop.f32.mrb[0].mxu0
    %v3040 = vadd.f32 0.0, %v3039
    %3041 = vmatprep.mubr.f32.mxu0 0.0
    %3042 = vmatmul.mubr.f32.gmra.mrb[0].mxu0 %v2813
    %v3043 = vpop.f32.mrb[0].mxu0
    %v3044 = vadd.f32 0.0, %v3043
    %v3045 = vpop.f32.mrb[0].mxu0
    %v3046 = vadd.f32 0.0, %v3045
    %3047 = vmatprep.mubr.f32.mxu0 0.0
    %3048 = vmatmul.mubr.f32.gmra.mrb[0].mxu0 %v2816
    %v3049 = vpop.f32.mrb[0].mxu0
    %v3050 = vadd.f32 0.0, %v3049
    %v3051 = vpop.f32.mrb[0].mxu0
    %v3052 = vadd.f32 0.0, %v3051
    %3053 = vmatprep.mubr.f32.mxu0 0.0
    %3054 = vmatmul.mubr.f32.gmra.mrb[0].mxu0 %v2819
    %v3055 = vpop.f32.mrb[0].mxu0
    %v3056 = vadd.f32 0.0, %v3055
    %v3057 = vpop.f32.mrb[0].mxu0
    %v3058 = vadd.f32 0.0, %v3057
    %3059 = vmatprep.mubr.f32.mxu0 0.0
    %3060 = vmatmul.mubr.f32.gmra.mrb[0].mxu0 %v2822
    %v3061 = vpop.f32.mrb[0].mxu0
    %v3062 = vadd.f32 0.0, %v3061
    %v3063 = vpop.f32.mrb[0].mxu0
    %v3064 = vadd.f32 0.0, %v3063
    %3065 = vmatprep.mubr.f32.mxu0 0.0
    %3066 = vmatmul.mubr.f32.gmra.mrb[0].mxu0 %v2825
    %v3067 = vpop.f32.mrb[0].mxu0
    %v3068 = vadd.f32 0.0, %v3067
    %v3069 = vpop.f32.mrb[0].mxu0
    %v3070 = vadd.f32 0.0, %v3069
    %3071 = vmatprep.mubr.f32.mxu0 0.0
    %3072 = vmatmul.mubr.f32.gmra.mrb[0].mxu0 %v2828
    %v3073 = vpop.f32.mrb[0].mxu0
    %v3074 = vadd.f32 0.0, %v3073
    %v3075 = vpop.f32.mrb[0].mxu0
    %v3076 = vadd.f32 0.0, %v3075
    %3077 = vmatprep.mubr.f32.mxu0 0.0
    %3078 = vmatmul.mubr.f32.gmra.mrb[0].mxu0 %v2831
    %v3079 = vpop.f32.mrb[0].mxu0
    %v3080 = vadd.f32 0.0, %v3079
    %v3081 = vpop.f32.mrb[0].mxu0
    %v3082 = vadd.f32 0.0, %v3081
    %3083 = vmatprep.mubr.f32.mxu0 0.0
    %3084 = vmatmul.mubr.f32.gmra.mrb[0].mxu0 %v2834
    %v3085 = vpop.f32.mrb[0].mxu0
    %v3086 = vadd.f32 0.0, %v3085
    %v3087 = vpop.f32.mrb[0].mxu0
    %v3088 = vadd.f32 0.0, %v3087
    %3089 = vmatprep.mubr.f32.mxu0 0.0
    %3090 = vmatmul.mubr.f32.gmra.mrb[0].mxu0 %v2837
    %v3091 = vpop.f32.mrb[0].mxu0
    %v3092 = vadd.f32 0.0, %v3091
    %v3093 = vpop.f32.mrb[0].mxu0
    %v3094 = vadd.f32 0.0, %v3093
    %3095 = vdwg.mxu0
    %v3096 = vmax.f32 %v2906, %v2908
    %3097 = vmax.xlane.f32.xlu0 %v3096
    %v3098 = vpop.xlane.xlu0 %3097
    %v3099 = vmax.f32 %v2912, %v2914
    %3100 = vmax.xlane.f32.xlu0 %v3099
    %v3101 = vpop.xlane.xlu0 %3100
    %v3102 = vmax.f32 %v2918, %v2920
    %3103 = vmax.xlane.f32.xlu0 %v3102
    %v3104 = vpop.xlane.xlu0 %3103
    %v3105 = vmax.f32 %v2924, %v2926
    %3106 = vmax.xlane.f32.xlu0 %v3105
    %v3107 = vpop.xlane.xlu0 %3106
    %v3108 = vmax.f32 %v2930, %v2932
    %3109 = vmax.xlane.f32.xlu0 %v3108
    %v3110 = vpop.xlane.xlu0 %3109
    %v3111 = vmax.f32 %v2936, %v2938
    %3112 = vmax.xlane.f32.xlu0 %v3111
    %v3113 = vpop.xlane.xlu0 %3112
    %v3114 = vmax.f32 %v2942, %v2944
    %3115 = vmax.xlane.f32.xlu0 %v3114
    %v3116 = vpop.xlane.xlu0 %3115
    %v3117 = vmax.f32 %v2948, %v2950
    %3118 = vmax.xlane.f32.xlu0 %v3117
    %v3119 = vpop.xlane.xlu0 %3118
    %v3120 = vmax.f32 %v2954, %v2956
    %3121 = vmax.xlane.f32.xlu0 %v3120
    %v3122 = vpop.xlane.xlu0 %3121
    %v3123 = vmax.f32 %v2960, %v2962
    %3124 = vmax.xlane.f32.xlu0 %v3123
    %v3125 = vpop.xlane.xlu0 %3124
    %v3126 = vmax.f32 %v2966, %v2968
    %3127 = vmax.xlane.f32.xlu0 %v3126
    %v3128 = vpop.xlane.xlu0 %3127
    %v3129 = vmax.f32 %v2972, %v2974
    %3130 = vmax.xlane.f32.xlu0 %v3129
    %v3131 = vpop.xlane.xlu0 %3130
    %v3132 = vmax.f32 %v2978, %v2980
    %3133 = vmax.xlane.f32.xlu0 %v3132
    %v3134 = vpop.xlane.xlu0 %3133
    %v3135 = vmax.f32 %v2984, %v2986
    %3136 = vmax.xlane.f32.xlu0 %v3135
    %v3137 = vpop.xlane.xlu0 %3136
    %v3138 = vmax.f32 %v2990, %v2992
    %3139 = vmax.xlane.f32.xlu0 %v3138
    %v3140 = vpop.xlane.xlu0 %3139
    %v3141 = vmax.f32 %v2996, %v2998
    %3142 = vmax.xlane.f32.xlu0 %v3141
    %v3143 = vpop.xlane.xlu0 %3142
    %v3144 = vmax.f32 %v3002, %v3004
    %3145 = vmax.xlane.f32.xlu0 %v3144
    %v3146 = vpop.xlane.xlu0 %3145
    %v3147 = vmax.f32 %v3008, %v3010
    %3148 = vmax.xlane.f32.xlu0 %v3147
    %v3149 = vpop.xlane.xlu0 %3148
    %v3150 = vmax.f32 %v3014, %v3016
    %3151 = vmax.xlane.f32.xlu0 %v3150
    %v3152 = vpop.xlane.xlu0 %3151
    %v3153 = vmax.f32 %v3020, %v3022
    %3154 = vmax.xlane.f32.xlu0 %v3153
    %v3155 = vpop.xlane.xlu0 %3154
    %v3156 = vmax.f32 %v3026, %v3028
    %3157 = vmax.xlane.f32.xlu0 %v3156
    %v3158 = vpop.xlane.xlu0 %3157
    %v3159 = vmax.f32 %v3032, %v3034
    %3160 = vmax.xlane.f32.xlu0 %v3159
    %v3161 = vpop.xlane.xlu0 %3160
    %v3162 = vmax.f32 %v3038, %v3040
    %3163 = vmax.xlane.f32.xlu0 %v3162
    %v3164 = vpop.xlane.xlu0 %3163
    %v3165 = vmax.f32 %v3044, %v3046
    %3166 = vmax.xlane.f32.xlu0 %v3165
    %v3167 = vpop.xlane.xlu0 %3166
    %v3168 = vmax.f32 %v3050, %v3052
    %3169 = vmax.xlane.f32.xlu0 %v3168
    %v3170 = vpop.xlane.xlu0 %3169
    %v3171 = vmax.f32 %v3056, %v3058
    %3172 = vmax.xlane.f32.xlu0 %v3171
    %v3173 = vpop.xlane.xlu0 %3172
    %v3174 = vmax.f32 %v3062, %v3064
    %3175 = vmax.xlane.f32.xlu0 %v3174
    %v3176 = vpop.xlane.xlu0 %3175
    %v3177 = vmax.f32 %v3068, %v3070
    %3178 = vmax.xlane.f32.xlu0 %v3177
    %v3179 = vpop.xlane.xlu0 %3178
    %v3180 = vmax.f32 %v3074, %v3076
    %3181 = vmax.xlane.f32.xlu0 %v3180
    %v3182 = vpop.xlane.xlu0 %3181
    %v3183 = vmax.f32 %v3080, %v3082
    %3184 = vmax.xlane.f32.xlu0 %v3183
    %v3185 = vpop.xlane.xlu0 %3184
    %v3186 = vmax.f32 %v3086, %v3088
    %3187 = vmax.xlane.f32.xlu0 %v3186
    %v3188 = vpop.xlane.xlu0 %3187
    %v3189 = vmax.f32 %v3092, %v3094
    %3190 = vmax.xlane.f32.xlu0 %v3189
    %v3191 = vpop.xlane.xlu0 %3190
    %v3192 = vsub.f32 %v2906, %v3098
    %v3193 = vsub.f32 %v2908, %v3098
    %v3194 = vsub.f32 %v2912, %v3101
    %v3195 = vsub.f32 %v2914, %v3101
    %v3196 = vsub.f32 %v2918, %v3104
    %v3197 = vsub.f32 %v2920, %v3104
    %v3198 = vsub.f32 %v2924, %v3107
    %v3199 = vsub.f32 %v2926, %v3107
    %v3200 = vsub.f32 %v2930, %v3110
    %v3201 = vsub.f32 %v2932, %v3110
    %v3202 = vsub.f32 %v2936, %v3113
    %v3203 = vsub.f32 %v2938, %v3113
    %v3204 = vsub.f32 %v2942, %v3116
    %v3205 = vsub.f32 %v2944, %v3116
    %v3206 = vsub.f32 %v2948, %v3119
    %v3207 = vsub.f32 %v2950, %v3119
    %v3208 = vsub.f32 %v2954, %v3122
    %v3209 = vsub.f32 %v2956, %v3122
    %v3210 = vsub.f32 %v2960, %v3125
    %v3211 = vsub.f32 %v2962, %v3125
    %v3212 = vsub.f32 %v2966, %v3128
    %v3213 = vsub.f32 %v2968, %v3128
    %v3214 = vsub.f32 %v2972, %v3131
    %v3215 = vsub.f32 %v2974, %v3131
    %v3216 = vsub.f32 %v2978, %v3134
    %v3217 = vsub.f32 %v2980, %v3134
    %v3218 = vsub.f32 %v2984, %v3137
    %v3219 = vsub.f32 %v2986, %v3137
    %v3220 = vsub.f32 %v2990, %v3140
    %v3221 = vsub.f32 %v2992, %v3140
    %v3222 = vsub.f32 %v2996, %v3143
    %v3223 = vsub.f32 %v2998, %v3143
    %v3224 = vsub.f32 %v3002, %v3146
    %v3225 = vsub.f32 %v3004, %v3146
    %v3226 = vsub.f32 %v3008, %v3149
    %v3227 = vsub.f32 %v3010, %v3149
    %v3228 = vsub.f32 %v3014, %v3152
    %v3229 = vsub.f32 %v3016, %v3152
    %v3230 = vsub.f32 %v3020, %v3155
    %v3231 = vsub.f32 %v3022, %v3155
    %v3232 = vsub.f32 %v3026, %v3158
    %v3233 = vsub.f32 %v3028, %v3158
    %v3234 = vsub.f32 %v3032, %v3161
    %v3235 = vsub.f32 %v3034, %v3161
    %v3236 = vsub.f32 %v3038, %v3164
    %v3237 = vsub.f32 %v3040, %v3164
    %v3238 = vsub.f32 %v3044, %v3167
    %v3239 = vsub.f32 %v3046, %v3167
    %v3240 = vsub.f32 %v3050, %v3170
    %v3241 = vsub.f32 %v3052, %v3170
    %v3242 = vsub.f32 %v3056, %v3173
    %v3243 = vsub.f32 %v3058, %v3173
    %v3244 = vsub.f32 %v3062, %v3176
    %v3245 = vsub.f32 %v3064, %v3176
    %v3246 = vsub.f32 %v3068, %v3179
    %v3247 = vsub.f32 %v3070, %v3179
    %v3248 = vsub.f32 %v3074, %v3182
    %v3249 = vsub.f32 %v3076, %v3182
    %v3250 = vsub.f32 %v3080, %v3185
    %v3251 = vsub.f32 %v3082, %v3185
    %v3252 = vsub.f32 %v3086, %v3188
    %v3253 = vsub.f32 %v3088, %v3188
    %v3254 = vsub.f32 %v3092, %v3191
    %v3255 = vsub.f32 %v3094, %v3191
    %v3256 = vmul.f32 %v3192, 1.442695
    %v3257 = vpow.pop %v3256
    %v3258 = vmul.f32 %v3193, 1.442695
    %v3259 = vpow.pop %v3258
    %v3260 = vmul.f32 %v3194, 1.442695
    %v3261 = vpow.pop %v3260
    %v3262 = vmul.f32 %v3195, 1.442695
    %v3263 = vpow.pop %v3262
    %v3264 = vmul.f32 %v3196, 1.442695
    %v3265 = vpow.pop %v3264
    %v3266 = vmul.f32 %v3197, 1.442695
    %v3267 = vpow.pop %v3266
    %v3268 = vmul.f32 %v3198, 1.442695
    %v3269 = vpow.pop %v3268
    %v3270 = vmul.f32 %v3199, 1.442695
    %v3271 = vpow.pop %v3270
    %v3272 = vmul.f32 %v3200, 1.442695
    %v3273 = vpow.pop %v3272
    %v3274 = vmul.f32 %v3201, 1.442695
    %v3275 = vpow.pop %v3274
    %v3276 = vmul.f32 %v3202, 1.442695
    %v3277 = vpow.pop %v3276
    %v3278 = vmul.f32 %v3203, 1.442695
    %v3279 = vpow.pop %v3278
    %v3280 = vmul.f32 %v3204, 1.442695
    %v3281 = vpow.pop %v3280
    %v3282 = vmul.f32 %v3205, 1.442695
    %v3283 = vpow.pop %v3282
    %v3284 = vmul.f32 %v3206, 1.442695
    %v3285 = vpow.pop %v3284
    %v3286 = vmul.f32 %v3207, 1.442695
    %v3287 = vpow.pop %v3286
    %v3288 = vmul.f32 %v3208, 1.442695
    %v3289 = vpow.pop %v3288
    %v3290 = vmul.f32 %v3209, 1.442695
    %v3291 = vpow.pop %v3290
    %v3292 = vmul.f32 %v3210, 1.442695
    %v3293 = vpow.pop %v3292
    %v3294 = vmul.f32 %v3211, 1.442695
    %v3295 = vpow.pop %v3294
    %v3296 = vmul.f32 %v3212, 1.442695
    %v3297 = vpow.pop %v3296
    %v3298 = vmul.f32 %v3213, 1.442695
    %v3299 = vpow.pop %v3298
    %v3300 = vmul.f32 %v3214, 1.442695
    %v3301 = vpow.pop %v3300
    %v3302 = vmul.f32 %v3215, 1.442695
    %v3303 = vpow.pop %v3302
    %v3304 = vmul.f32 %v3216, 1.442695
    %v3305 = vpow.pop %v3304
    %v3306 = vmul.f32 %v3217, 1.442695
    %v3307 = vpow.pop %v3306
    %v3308 = vmul.f32 %v3218, 1.442695
    %v3309 = vpow.pop %v3308
    %v3310 = vmul.f32 %v3219, 1.442695
    %v3311 = vpow.pop %v3310
    %v3312 = vmul.f32 %v3220, 1.442695
    %v3313 = vpow.pop %v3312
    %v3314 = vmul.f32 %v3221, 1.442695
    %v3315 = vpow.pop %v3314
    %v3316 = vmul.f32 %v3222, 1.442695
    %v3317 = vpow.pop %v3316
    %v3318 = vmul.f32 %v3223, 1.442695
    %v3319 = vpow.pop %v3318
    %v3320 = vmul.f32 %v3224, 1.442695
    %v3321 = vpow.pop %v3320
    %v3322 = vmul.f32 %v3225, 1.442695
    %v3323 = vpow.pop %v3322
    %v3324 = vmul.f32 %v3226, 1.442695
    %v3325 = vpow.pop %v3324
    %v3326 = vmul.f32 %v3227, 1.442695
    %v3327 = vpow.pop %v3326
    %v3328 = vmul.f32 %v3228, 1.442695
    %v3329 = vpow.pop %v3328
    %v3330 = vmul.f32 %v3229, 1.442695
    %v3331 = vpow.pop %v3330
    %v3332 = vmul.f32 %v3230, 1.442695
    %v3333 = vpow.pop %v3332
    %v3334 = vmul.f32 %v3231, 1.442695
    %v3335 = vpow.pop %v3334
    %v3336 = vmul.f32 %v3232, 1.442695
    %v3337 = vpow.pop %v3336
    %v3338 = vmul.f32 %v3233, 1.442695
    %v3339 = vpow.pop %v3338
    %v3340 = vmul.f32 %v3234, 1.442695
    %v3341 = vpow.pop %v3340
    %v3342 = vmul.f32 %v3235, 1.442695
    %v3343 = vpow.pop %v3342
    %v3344 = vmul.f32 %v3236, 1.442695
    %v3345 = vpow.pop %v3344
    %v3346 = vmul.f32 %v3237, 1.442695
    %v3347 = vpow.pop %v3346
    %v3348 = vmul.f32 %v3238, 1.442695
    %v3349 = vpow.pop %v3348
    %v3350 = vmul.f32 %v3239, 1.442695
    %v3351 = vpow.pop %v3350
    %v3352 = vmul.f32 %v3240, 1.442695
    %v3353 = vpow.pop %v3352
    %v3354 = vmul.f32 %v3241, 1.442695
    %v3355 = vpow.pop %v3354
    %v3356 = vmul.f32 %v3242, 1.442695
    %v3357 = vpow.pop %v3356
    %v3358 = vmul.f32 %v3243, 1.442695
    %v3359 = vpow.pop %v3358
    %v3360 = vmul.f32 %v3244, 1.442695
    %v3361 = vpow.pop %v3360
    %v3362 = vmul.f32 %v3245, 1.442695
    %v3363 = vpow.pop %v3362
    %v3364 = vmul.f32 %v3246, 1.442695
    %v3365 = vpow.pop %v3364
    %v3366 = vmul.f32 %v3247, 1.442695
    %v3367 = vpow.pop %v3366
    %v3368 = vmul.f32 %v3248, 1.442695
    %v3369 = vpow.pop %v3368
    %v3370 = vmul.f32 %v3249, 1.442695
    %v3371 = vpow.pop %v3370
    %v3372 = vmul.f32 %v3250, 1.442695
    %v3373 = vpow.pop %v3372
    %v3374 = vmul.f32 %v3251, 1.442695
    %v3375 = vpow.pop %v3374
    %v3376 = vmul.f32 %v3252, 1.442695
    %v3377 = vpow.pop %v3376
    %v3378 = vmul.f32 %v3253, 1.442695
    %v3379 = vpow.pop %v3378
    %v3380 = vmul.f32 %v3254, 1.442695
    %v3381 = vpow.pop %v3380
    %v3382 = vmul.f32 %v3255, 1.442695
    %v3383 = vpow.pop %v3382
    %v3384 = vadd.f32 %v3257, %v3259
    %3385 = vadd.xlane.f32.xlu0 %v3384
    %v3386 = vpop.xlane.xlu0 %3385
    %v3387 = vadd.f32 %v3261, %v3263
    %3388 = vadd.xlane.f32.xlu0 %v3387
    %v3389 = vpop.xlane.xlu0 %3388
    %v3390 = vadd.f32 %v3265, %v3267
    %3391 = vadd.xlane.f32.xlu0 %v3390
    %v3392 = vpop.xlane.xlu0 %3391
    %v3393 = vadd.f32 %v3269, %v3271
    %3394 = vadd.xlane.f32.xlu0 %v3393
    %v3395 = vpop.xlane.xlu0 %3394
    %v3396 = vadd.f32 %v3273, %v3275
    %3397 = vadd.xlane.f32.xlu0 %v3396
    %v3398 = vpop.xlane.xlu0 %3397
    %v3399 = vadd.f32 %v3277, %v3279
    %3400 = vadd.xlane.f32.xlu0 %v3399
    %v3401 = vpop.xlane.xlu0 %3400
    %v3402 = vadd.f32 %v3281, %v3283
    %3403 = vadd.xlane.f32.xlu0 %v3402
    %v3404 = vpop.xlane.xlu0 %3403
    %v3405 = vadd.f32 %v3285, %v3287
    %3406 = vadd.xlane.f32.xlu0 %v3405
    %v3407 = vpop.xlane.xlu0 %3406
    %v3408 = vadd.f32 %v3289, %v3291
    %3409 = vadd.xlane.f32.xlu0 %v3408
    %v3410 = vpop.xlane.xlu0 %3409
    %v3411 = vadd.f32 %v3293, %v3295
    %3412 = vadd.xlane.f32.xlu0 %v3411
    %v3413 = vpop.xlane.xlu0 %3412
    %v3414 = vadd.f32 %v3297, %v3299
    %3415 = vadd.xlane.f32.xlu0 %v3414
    %v3416 = vpop.xlane.xlu0 %3415
    %v3417 = vadd.f32 %v3301, %v3303
    %3418 = vadd.xlane.f32.xlu0 %v3417
    %v3419 = vpop.xlane.xlu0 %3418
    %v3420 = vadd.f32 %v3305, %v3307
    %3421 = vadd.xlane.f32.xlu0 %v3420
    %v3422 = vpop.xlane.xlu0 %3421
    %v3423 = vadd.f32 %v3309, %v3311
    %3424 = vadd.xlane.f32.xlu0 %v3423
    %v3425 = vpop.xlane.xlu0 %3424
    %v3426 = vadd.f32 %v3313, %v3315
    %3427 = vadd.xlane.f32.xlu0 %v3426
    %v3428 = vpop.xlane.xlu0 %3427
    %v3429 = vadd.f32 %v3317, %v3319
    %3430 = vadd.xlane.f32.xlu0 %v3429
    %v3431 = vpop.xlane.xlu0 %3430
    %v3432 = vadd.f32 %v3321, %v3323
    %3433 = vadd.xlane.f32.xlu0 %v3432
    %v3434 = vpop.xlane.xlu0 %3433
    %v3435 = vadd.f32 %v3325, %v3327
    %3436 = vadd.xlane.f32.xlu0 %v3435
    %v3437 = vpop.xlane.xlu0 %3436
    %v3438 = vadd.f32 %v3329, %v3331
    %3439 = vadd.xlane.f32.xlu0 %v3438
    %v3440 = vpop.xlane.xlu0 %3439
    %v3441 = vadd.f32 %v3333, %v3335
    %3442 = vadd.xlane.f32.xlu0 %v3441
    %v3443 = vpop.xlane.xlu0 %3442
    %v3444 = vadd.f32 %v3337, %v3339
    %3445 = vadd.xlane.f32.xlu0 %v3444
    %v3446 = vpop.xlane.xlu0 %3445
    %v3447 = vadd.f32 %v3341, %v3343
    %3448 = vadd.xlane.f32.xlu0 %v3447
    %v3449 = vpop.xlane.xlu0 %3448
    %v3450 = vadd.f32 %v3345, %v3347
    %3451 = vadd.xlane.f32.xlu0 %v3450
    %v3452 = vpop.xlane.xlu0 %3451
    %v3453 = vadd.f32 %v3349, %v3351
    %3454 = vadd.xlane.f32.xlu0 %v3453
    %v3455 = vpop.xlane.xlu0 %3454
    %v3456 = vadd.f32 %v3353, %v3355
    %3457 = vadd.xlane.f32.xlu0 %v3456
    %v3458 = vpop.xlane.xlu0 %3457
    %v3459 = vadd.f32 %v3357, %v3359
    %3460 = vadd.xlane.f32.xlu0 %v3459
    %v3461 = vpop.xlane.xlu0 %3460
    %v3462 = vadd.f32 %v3361, %v3363
    %3463 = vadd.xlane.f32.xlu0 %v3462
    %v3464 = vpop.xlane.xlu0 %3463
    %v3465 = vadd.f32 %v3365, %v3367
    %3466 = vadd.xlane.f32.xlu0 %v3465
    %v3467 = vpop.xlane.xlu0 %3466
    %v3468 = vadd.f32 %v3369, %v3371
    %3469 = vadd.xlane.f32.xlu0 %v3468
    %v3470 = vpop.xlane.xlu0 %3469
    %v3471 = vadd.f32 %v3373, %v3375
    %3472 = vadd.xlane.f32.xlu0 %v3471
    %v3473 = vpop.xlane.xlu0 %3472
    %v3474 = vadd.f32 %v3377, %v3379
    %3475 = vadd.xlane.f32.xlu0 %v3474
    %v3476 = vpop.xlane.xlu0 %3475
    %v3477 = vadd.f32 %v3381, %v3383
    %3478 = vadd.xlane.f32.xlu0 %v3477
    %v3479 = vpop.xlane.xlu0 %3478
    %v3480 = vrcp.pop %v3386
    %v3481 = vmul.f32 %v3257, %v3480
    %v3482 = vmul.f32 %v3259, %v3480
    %v3483 = vrcp.pop %v3389
    %v3484 = vmul.f32 %v3261, %v3483
    %v3485 = vmul.f32 %v3263, %v3483
    %v3486 = vrcp.pop %v3392
    %v3487 = vmul.f32 %v3265, %v3486
    %v3488 = vmul.f32 %v3267, %v3486
    %v3489 = vrcp.pop %v3395
    %v3490 = vmul.f32 %v3269, %v3489
    %v3491 = vmul.f32 %v3271, %v3489
    %v3492 = vrcp.pop %v3398
    %v3493 = vmul.f32 %v3273, %v3492
    %v3494 = vmul.f32 %v3275, %v3492
    %v3495 = vrcp.pop %v3401
    %v3496 = vmul.f32 %v3277, %v3495
    %v3497 = vmul.f32 %v3279, %v3495
    %v3498 = vrcp.pop %v3404
    %v3499 = vmul.f32 %v3281, %v3498
    %v3500 = vmul.f32 %v3283, %v3498
    %v3501 = vrcp.pop %v3407
    %v3502 = vmul.f32 %v3285, %v3501
    %v3503 = vmul.f32 %v3287, %v3501
    %v3504 = vrcp.pop %v3410
    %v3505 = vmul.f32 %v3289, %v3504
    %v3506 = vmul.f32 %v3291, %v3504
    %v3507 = vrcp.pop %v3413
    %v3508 = vmul.f32 %v3293, %v3507
    %v3509 = vmul.f32 %v3295, %v3507
    %v3510 = vrcp.pop %v3416
    %v3511 = vmul.f32 %v3297, %v3510
    %v3512 = vmul.f32 %v3299, %v3510
    %v3513 = vrcp.pop %v3419
    %v3514 = vmul.f32 %v3301, %v3513
    %v3515 = vmul.f32 %v3303, %v3513
    %v3516 = vrcp.pop %v3422
    %v3517 = vmul.f32 %v3305, %v3516
    %v3518 = vmul.f32 %v3307, %v3516
    %v3519 = vrcp.pop %v3425
    %v3520 = vmul.f32 %v3309, %v3519
    %v3521 = vmul.f32 %v3311, %v3519
    %v3522 = vrcp.pop %v3428
    %v3523 = vmul.f32 %v3313, %v3522
    %v3524 = vmul.f32 %v3315, %v3522
    %v3525 = vrcp.pop %v3431
    %v3526 = vmul.f32 %v3317, %v3525
    %v3527 = vmul.f32 %v3319, %v3525
    %v3528 = vrcp.pop %v3434
    %v3529 = vmul.f32 %v3321, %v3528
    %v3530 = vmul.f32 %v3323, %v3528
    %v3531 = vrcp.pop %v3437
    %v3532 = vmul.f32 %v3325, %v3531
    %v3533 = vmul.f32 %v3327, %v3531
    %v3534 = vrcp.pop %v3440
    %v3535 = vmul.f32 %v3329, %v3534
    %v3536 = vmul.f32 %v3331, %v3534
    %v3537 = vrcp.pop %v3443
    %v3538 = vmul.f32 %v3333, %v3537
    %v3539 = vmul.f32 %v3335, %v3537
    %v3540 = vrcp.pop %v3446
    %v3541 = vmul.f32 %v3337, %v3540
    %v3542 = vmul.f32 %v3339, %v3540
    %v3543 = vrcp.pop %v3449
    %v3544 = vmul.f32 %v3341, %v3543
    %v3545 = vmul.f32 %v3343, %v3543
    %v3546 = vrcp.pop %v3452
    %v3547 = vmul.f32 %v3345, %v3546
    %v3548 = vmul.f32 %v3347, %v3546
    %v3549 = vrcp.pop %v3455
    %v3550 = vmul.f32 %v3349, %v3549
    %v3551 = vmul.f32 %v3351, %v3549
    %v3552 = vrcp.pop %v3458
    %v3553 = vmul.f32 %v3353, %v3552
    %v3554 = vmul.f32 %v3355, %v3552
    %v3555 = vrcp.pop %v3461
    %v3556 = vmul.f32 %v3357, %v3555
    %v3557 = vmul.f32 %v3359, %v3555
    %v3558 = vrcp.pop %v3464
    %v3559 = vmul.f32 %v3361, %v3558
    %v3560 = vmul.f32 %v3363, %v3558
    %v3561 = vrcp.pop %v3467
    %v3562 = vmul.f32 %v3365, %v3561
    %v3563 = vmul.f32 %v3367, %v3561
    %v3564 = vrcp.pop %v3470
    %v3565 = vmul.f32 %v3369, %v3564
    %v3566 = vmul.f32 %v3371, %v3564
    %v3567 = vrcp.pop %v3473
    %v3568 = vmul.f32 %v3373, %v3567
    %v3569 = vmul.f32 %v3375, %v3567
    %v3570 = vrcp.pop %v3476
    %v3571 = vmul.f32 %v3377, %v3570
    %v3572 = vmul.f32 %v3379, %v3570
    %v3573 = vrcp.pop %v3479
    %v3574 = vmul.f32 %v3381, %v3573
    %v3575 = vmul.f32 %v3383, %v3573
    %3576 = vmatprep.subr.mxu0 %v3482
    %3577 = vmatpush1.xpose.msra.mxu0 %v3481
    %3578 = vmatprep.subr.mxu0 %v3485
    %3579 = vmatpush1.xpose.msra.mxu0 %v3484
    %3580 = vmatprep.subr.mxu0 %v3488
    %3581 = vmatpush1.xpose.msra.mxu0 %v3487
    %3582 = vmatprep.subr.mxu0 %v3491
    %3583 = vmatpush1.xpose.msra.mxu0 %v3490
    %3584 = vmatprep.subr.mxu0 %v3494
    %3585 = vmatpush1.xpose.msra.mxu0 %v3493
    %3586 = vmatprep.subr.mxu0 %v3497
    %3587 = vmatpush1.xpose.msra.mxu0 %v3496
    %3588 = vmatprep.subr.mxu0 %v3500
    %3589 = vmatpush1.xpose.msra.mxu0 %v3499
    %3590 = vmatprep.subr.mxu0 %v3503
    %3591 = vmatpush1.xpose.msra.mxu0 %v3502
    %3592 = vmatprep.subr.mxu0 %v3506
    %3593 = vmatpush1.xpose.msra.mxu0 %v3505
    %3594 = vmatprep.subr.mxu0 %v3509
    %3595 = vmatpush1.xpose.msra.mxu0 %v3508
    %3596 = vmatprep.subr.mxu0 %v3512
    %3597 = vmatpush1.xpose.msra.mxu0 %v3511
    %3598 = vmatprep.subr.mxu0 %v3515
    %3599 = vmatpush1.xpose.msra.mxu0 %v3514
    %3600 = vmatprep.subr.mxu0 %v3518
    %3601 = vmatpush1.xpose.msra.mxu0 %v3517
    %3602 = vmatprep.subr.mxu0 %v3521
    %3603 = vmatpush1.xpose.msra.mxu0 %v3520
    %3604 = vmatprep.subr.mxu0 %v3524
    %3605 = vmatpush1.xpose.msra.mxu0 %v3523
    %3606 = vmatprep.subr.mxu0 %v3527
    %3607 = vmatpush1.xpose.msra.mxu0 %v3526
    %3608 = vmatprep.subr.mxu0 %v3530
    %3609 = vmatpush1.xpose.msra.mxu0 %v3529
    %3610 = vmatprep.subr.mxu0 %v3533
    %3611 = vmatpush1.xpose.msra.mxu0 %v3532
    %3612 = vmatprep.subr.mxu0 %v3536
    %3613 = vmatpush1.xpose.msra.mxu0 %v3535
    %3614 = vmatprep.subr.mxu0 %v3539
    %3615 = vmatpush1.xpose.msra.mxu0 %v3538
    %3616 = vmatprep.subr.mxu0 %v3542
    %3617 = vmatpush1.xpose.msra.mxu0 %v3541
    %3618 = vmatprep.subr.mxu0 %v3545
    %3619 = vmatpush1.xpose.msra.mxu0 %v3544
    %3620 = vmatprep.subr.mxu0 %v3548
    %3621 = vmatpush1.xpose.msra.mxu0 %v3547
    %3622 = vmatprep.subr.mxu0 %v3551
    %3623 = vmatpush1.xpose.msra.mxu0 %v3550
    %3624 = vmatprep.subr.mxu0 %v3554
    %3625 = vmatpush1.xpose.msra.mxu0 %v3553
    %3626 = vmatprep.subr.mxu0 %v3557
    %3627 = vmatpush1.xpose.msra.mxu0 %v3556
    %3628 = vmatprep.subr.mxu0 %v3560
    %3629 = vmatpush1.xpose.msra.mxu0 %v3559
    %3630 = vmatprep.subr.mxu0 %v3563
    %3631 = vmatpush1.xpose.msra.mxu0 %v3562
    %3632 = vmatprep.subr.mxu0 %v3566
    %3633 = vmatpush1.xpose.msra.mxu0 %v3565
    %3634 = vmatprep.subr.mxu0 %v3569
    %3635 = vmatpush1.xpose.msra.mxu0 %v3568
    %3636 = vmatprep.subr.mxu0 %v3572
    %3637 = vmatpush1.xpose.msra.mxu0 %v3571
    %3638 = vmatprep.subr.mxu0 %v3575
    %3639 = vmatpush1.xpose.msra.mxu0 %v3574
    %3640 = vmatprep.mubr.f32.mxu0 %v2635
    %3641 = vmatmul.mubr.f32.gmra.mrb[0].mxu0 %v2633
    %v3642 = vpop.f32.mrb[0].mxu0
    %v3643 = vadd.f32 0.0, %v3642
    %v3644 = vpop.f32.mrb[0].mxu0
    %v3645 = vadd.f32 0.0, %v3644
    %3646 = vmatprep.mubr.f32.mxu0 %v2641
    %3647 = vmatmul.mubr.f32.gmra.mrb[0].mxu0 %v2639
    %v3648 = vpop.f32.mrb[0].mxu0
    %v3649 = vadd.f32 0.0, %v3648
    %v3650 = vpop.f32.mrb[0].mxu0
    %v3651 = vadd.f32 0.0, %v3650
    %3652 = vmatprep.mubr.f32.mxu0 %v2647
    %3653 = vmatmul.mubr.f32.gmra.mrb[0].mxu0 %v2645
    %v3654 = vpop.f32.mrb[0].mxu0
    %v3655 = vadd.f32 0.0, %v3654
    %v3656 = vpop.f32.mrb[0].mxu0
    %v3657 = vadd.f32 0.0, %v3656
    %3658 = vmatprep.mubr.f32.mxu0 %v2653
    %3659 = vmatmul.mubr.f32.gmra.mrb[0].mxu0 %v2651
    %v3660 = vpop.f32.mrb[0].mxu0
    %v3661 = vadd.f32 0.0, %v3660
    %v3662 = vpop.f32.mrb[0].mxu0
    %v3663 = vadd.f32 0.0, %v3662
    %3664 = vmatprep.mubr.f32.mxu0 %v2659
    %3665 = vmatmul.mubr.f32.gmra.mrb[0].mxu0 %v2657
    %v3666 = vpop.f32.mrb[0].mxu0
    %v3667 = vadd.f32 0.0, %v3666
    %v3668 = vpop.f32.mrb[0].mxu0
    %v3669 = vadd.f32 0.0, %v3668
    %3670 = vmatprep.mubr.f32.mxu0 %v2665
    %3671 = vmatmul.mubr.f32.gmra.mrb[0].mxu0 %v2663
    %v3672 = vpop.f32.mrb[0].mxu0
    %v3673 = vadd.f32 0.0, %v3672
    %v3674 = vpop.f32.mrb[0].mxu0
    %v3675 = vadd.f32 0.0, %v3674
    %3676 = vmatprep.mubr.f32.mxu0 %v2671
    %3677 = vmatmul.mubr.f32.gmra.mrb[0].mxu0 %v2669
    %v3678 = vpop.f32.mrb[0].mxu0
    %v3679 = vadd.f32 0.0, %v3678
    %v3680 = vpop.f32.mrb[0].mxu0
    %v3681 = vadd.f32 0.0, %v3680
    %3682 = vmatprep.mubr.f32.mxu0 %v2677
    %3683 = vmatmul.mubr.f32.gmra.mrb[0].mxu0 %v2675
    %v3684 = vpop.f32.mrb[0].mxu0
    %v3685 = vadd.f32 0.0, %v3684
    %v3686 = vpop.f32.mrb[0].mxu0
    %v3687 = vadd.f32 0.0, %v3686
    %3688 = vdwg.mxu0
    %v3689 = vmul.f32 %v1287, %v3643
    %v3690 = vmul.f32 %v1287, %v3645
    %v3691 = vmul.f32 %v1287, %v3649
    %v3692 = vmul.f32 %v1287, %v3651
    %v3693 = vmul.f32 %v1287, %v3655
    %v3694 = vmul.f32 %v1287, %v3657
    %v3695 = vmul.f32 %v1287, %v3661
    %v3696 = vmul.f32 %v1287, %v3663
    %v3697 = vmul.f32 %v1287, %v3667
    %v3698 = vmul.f32 %v1287, %v3669
    %v3699 = vmul.f32 %v1287, %v3673
    %v3700 = vmul.f32 %v1287, %v3675
    %v3701 = vmul.f32 %v1287, %v3679
    %v3702 = vmul.f32 %v1287, %v3681
    %v3703 = vmul.f32 %v1287, %v3685
    %v3704 = vmul.f32 %v1287, %v3687
    %v3705 = vadd.f32 %v3689, %v2538
    %v3706 = vadd.f32 %v3690, %v2539
    %v3707 = vadd.f32 %v3691, %v2540
    %v3708 = vadd.f32 %v3692, %v2541
    %v3709 = vadd.f32 %v3693, %v2542
    %v3710 = vadd.f32 %v3694, %v2543
    %v3711 = vadd.f32 %v3695, %v2544
    %v3712 = vadd.f32 %v3696, %v2545
    %v3713 = vadd.f32 %v3697, %v2546
    %v3714 = vadd.f32 %v3698, %v2547
    %v3715 = vadd.f32 %v3699, %v2548
    %v3716 = vadd.f32 %v3700, %v2549
    %v3717 = vadd.f32 %v3701, %v2550
    %v3718 = vadd.f32 %v3702, %v2551
    %v3719 = vadd.f32 %v3703, %v2552
    %v3720 = vadd.f32 %v3704, %v2553
    %s3721 = scalar_lea.vmem [#allocation6], 256
    %3722 = vst [vmem:[%s3721] sm:$0xff] %v3705
    %3723 = vst [vmem:[%s3721 + $0x8] sm:$0xff] %v3706
    %3724 = vst [vmem:[%s3721 + $0x10] sm:$0xff] %v3707
    %3725 = vst [vmem:[%s3721 + $0x18] sm:$0xff] %v3708
    %3726 = vst [vmem:[%s3721 + $0x20] sm:$0xff] %v3709
    %3727 = vst [vmem:[%s3721 + $0x28] sm:$0xff] %v3710
    %3728 = vst [vmem:[%s3721 + $0x30] sm:$0xff] %v3711
    %3729 = vst [vmem:[%s3721 + $0x38] sm:$0xff] %v3712
    %3730 = vst [vmem:[%s3721 + $0x40] sm:$0xff] %v3713
    %3731 = vst [vmem:[%s3721 + $0x48] sm:$0xff] %v3714
    %3732 = vst [vmem:[%s3721 + $0x50] sm:$0xff] %v3715
    %3733 = vst [vmem:[%s3721 + $0x58] sm:$0xff] %v3716
    %3734 = vst [vmem:[%s3721 + $0x60] sm:$0xff] %v3717
    %3735 = vst [vmem:[%s3721 + $0x68] sm:$0xff] %v3718
    %3736 = vst [vmem:[%s3721 + $0x70] sm:$0xff] %v3719
    %3737 = vst [vmem:[%s3721 + $0x78] sm:$0xff] %v3720
    %s3738 = scalar_lea.vmem [#allocation3], 384
    %v3739 = vld [vmem:[%s3738] sm:$0xff]
    %v3740 = vld [vmem:[%s3738 + $0x8] sm:$0xff]
    %v3741 = vld [vmem:[%s3738 + $0x10] sm:$0xff]
    %v3742 = vld [vmem:[%s3738 + $0x18] sm:$0xff]
    %v3743 = vld [vmem:[%s3738 + $0x20] sm:$0xff]
    %v3744 = vld [vmem:[%s3738 + $0x28] sm:$0xff]
    %v3745 = vld [vmem:[%s3738 + $0x30] sm:$0xff]
    %v3746 = vld [vmem:[%s3738 + $0x38] sm:$0xff]
    %v3747 = vld [vmem:[%s3738 + $0x40] sm:$0xff]
    %v3748 = vld [vmem:[%s3738 + $0x48] sm:$0xff]
    %v3749 = vld [vmem:[%s3738 + $0x50] sm:$0xff]
    %v3750 = vld [vmem:[%s3738 + $0x58] sm:$0xff]
    %v3751 = vld [vmem:[%s3738 + $0x60] sm:$0xff]
    %v3752 = vld [vmem:[%s3738 + $0x68] sm:$0xff]
    %v3753 = vld [vmem:[%s3738 + $0x70] sm:$0xff]
    %v3754 = vld [vmem:[%s3738 + $0x78] sm:$0xff]
    %3755 = vmatprep.subr.mxu0 %v3740
    %3756 = vmatpush1.msra.mxu0 %v3739
    %3757 = vmatprep.subr.mxu0 %v3742
    %3758 = vmatpush1.msra.mxu0 %v3741
    %3759 = vmatprep.subr.mxu0 %v3744
    %3760 = vmatpush1.msra.mxu0 %v3743
    %3761 = vmatprep.subr.mxu0 %v3746
    %3762 = vmatpush1.msra.mxu0 %v3745
    %3763 = vmatprep.subr.mxu0 %v3748
    %3764 = vmatpush1.msra.mxu0 %v3747
    %3765 = vmatprep.subr.mxu0 %v3750
    %3766 = vmatpush1.msra.mxu0 %v3749
    %3767 = vmatprep.subr.mxu0 %v3752
    %3768 = vmatpush1.msra.mxu0 %v3751
    %3769 = vmatprep.subr.mxu0 %v3754
    %3770 = vmatpush1.msra.mxu0 %v3753
    %3771 = vmatprep.subr.mxu0 0.0
    %3772 = vmatpush1.msra.mxu0 0.0
    %3773 = vmatprep.subr.mxu0 0.0
    %3774 = vmatpush1.msra.mxu0 0.0
    %3775 = vmatprep.subr.mxu0 0.0
    %3776 = vmatpush1.msra.mxu0 0.0
    %3777 = vmatprep.subr.mxu0 0.0
    %3778 = vmatpush1.msra.mxu0 0.0
    %3779 = vmatprep.subr.mxu0 0.0
    %3780 = vmatpush1.msra.mxu0 0.0
    %3781 = vmatprep.subr.mxu0 0.0
    %3782 = vmatpush1.msra.mxu0 0.0
    %3783 = vmatprep.subr.mxu0 0.0
    %3784 = vmatpush1.msra.mxu0 0.0
    %3785 = vmatprep.subr.mxu0 0.0
    %3786 = vmatpush1.msra.mxu0 0.0
    %3787 = vmatprep.subr.mxu0 0.0
    %3788 = vmatpush1.msra.mxu0 0.0
    %3789 = vmatprep.subr.mxu0 0.0
    %3790 = vmatpush1.msra.mxu0 0.0
    %3791 = vmatprep.subr.mxu0 0.0
    %3792 = vmatpush1.msra.mxu0 0.0
    %3793 = vmatprep.subr.mxu0 0.0
    %3794 = vmatpush1.msra.mxu0 0.0
    %3795 = vmatprep.subr.mxu0 0.0
    %3796 = vmatpush1.msra.mxu0 0.0
    %3797 = vmatprep.subr.mxu0 0.0
    %3798 = vmatpush1.msra.mxu0 0.0
    %3799 = vmatprep.subr.mxu0 0.0
    %3800 = vmatpush1.msra.mxu0 0.0
    %3801 = vmatprep.subr.mxu0 0.0
    %3802 = vmatpush1.msra.mxu0 0.0
    %3803 = vmatprep.subr.mxu0 0.0
    %3804 = vmatpush1.msra.mxu0 0.0
    %3805 = vmatprep.subr.mxu0 0.0
    %3806 = vmatpush1.msra.mxu0 0.0
    %3807 = vmatprep.subr.mxu0 0.0
    %3808 = vmatpush1.msra.mxu0 0.0
    %3809 = vmatprep.subr.mxu0 0.0
    %3810 = vmatpush1.msra.mxu0 0.0
    %3811 = vmatprep.subr.mxu0 0.0
    %3812 = vmatpush1.msra.mxu0 0.0
    %3813 = vmatprep.subr.mxu0 0.0
    %3814 = vmatpush1.msra.mxu0 0.0
    %3815 = vmatprep.subr.mxu0 0.0
    %3816 = vmatpush1.msra.mxu0 0.0
    %3817 = vmatprep.subr.mxu0 0.0
    %3818 = vmatpush1.msra.mxu0 0.0
    %3819 = vmatprep.mubr.f32.mxu0 0.0
    %3820 = vmatmul.mubr.f32.gmra.mrb[0].mxu0 %v122
    %v3821 = vpop.f32.mrb[0].mxu0
    %v3822 = vadd.f32 %v73, %v3821
    %v3823 = vpop.f32.mrb[0].mxu0
    %v3824 = vadd.f32 %v73, %v3823
    %3825 = vmatprep.mubr.f32.mxu0 0.0
    %3826 = vmatmul.mubr.f32.gmra.mrb[0].mxu0 %v125
    %v3827 = vpop.f32.mrb[0].mxu0
    %v3828 = vadd.f32 %v78, %v3827
    %v3829 = vpop.f32.mrb[0].mxu0
    %v3830 = vadd.f32 %v78, %v3829
    %3831 = vmatprep.mubr.f32.mxu0 0.0
    %3832 = vmatmul.mubr.f32.gmra.mrb[0].mxu0 %v128
    %v3833 = vpop.f32.mrb[0].mxu0
    %v3834 = vadd.f32 %v83, %v3833
    %v3835 = vpop.f32.mrb[0].mxu0
    %v3836 = vadd.f32 %v83, %v3835
    %3837 = vmatprep.mubr.f32.mxu0 0.0
    %3838 = vmatmul.mubr.f32.gmra.mrb[0].mxu0 %v131
    %v3839 = vpop.f32.mrb[0].mxu0
    %v3840 = vadd.f32 %v88, %v3839
    %v3841 = vpop.f32.mrb[0].mxu0
    %v3842 = vadd.f32 %v88, %v3841
    %3843 = vmatprep.mubr.f32.mxu0 0.0
    %3844 = vmatmul.mubr.f32.gmra.mrb[0].mxu0 %v134
    %v3845 = vpop.f32.mrb[0].mxu0
    %v3846 = vadd.f32 %v93, %v3845
    %v3847 = vpop.f32.mrb[0].mxu0
    %v3848 = vadd.f32 %v93, %v3847
    %3849 = vmatprep.mubr.f32.mxu0 0.0
    %3850 = vmatmul.mubr.f32.gmra.mrb[0].mxu0 %v137
    %v3851 = vpop.f32.mrb[0].mxu0
    %v3852 = vadd.f32 %v98, %v3851
    %v3853 = vpop.f32.mrb[0].mxu0
    %v3854 = vadd.f32 %v98, %v3853
    %3855 = vmatprep.mubr.f32.mxu0 0.0
    %3856 = vmatmul.mubr.f32.gmra.mrb[0].mxu0 %v140
    %v3857 = vpop.f32.mrb[0].mxu0
    %v3858 = vadd.f32 %v103, %v3857
    %v3859 = vpop.f32.mrb[0].mxu0
    %v3860 = vadd.f32 %v103, %v3859
    %3861 = vmatprep.mubr.f32.mxu0 0.0
    %3862 = vmatmul.mubr.f32.gmra.mrb[0].mxu0 %v143
    %v3863 = vpop.f32.mrb[0].mxu0
    %v3864 = vadd.f32 %v108, %v3863
    %v3865 = vpop.f32.mrb[0].mxu0
    %v3866 = vadd.f32 %v108, %v3865
    %3867 = vmatprep.mubr.f32.mxu0 0.0
    %3868 = vmatmul.mubr.f32.gmra.mrb[0].mxu0 %v146
    %v3869 = vpop.f32.mrb[0].mxu0
    %v3870 = vadd.f32 %v113, %v3869
    %v3871 = vpop.f32.mrb[0].mxu0
    %v3872 = vadd.f32 %v113, %v3871
    %3873 = vmatprep.mubr.f32.mxu0 0.0
    %3874 = vmatmul.mubr.f32.gmra.mrb[0].mxu0 %v149
    %v3875 = vpop.f32.mrb[0].mxu0
    %v3876 = vadd.f32 %v118, %v3875
    %v3877 = vpop.f32.mrb[0].mxu0
    %v3878 = vadd.f32 %v118, %v3877
    %3879 = vdwg.mxu0
    %3880 = vxpose.xlu0.b32.start [1/16] %v3822, 128
    %3881 = vxpose.xlu0.b32.cont [2/16] 0.0, 128
    %3882 = vxpose.xlu0.b32.cont [3/16] 0.0, 128
    %3883 = vxpose.xlu0.b32.cont [4/16] 0.0, 128
    %3884 = vxpose.xlu0.b32.cont [5/16] 0.0, 128
    %3885 = vxpose.xlu0.b32.cont [6/16] 0.0, 128
    %3886 = vxpose.xlu0.b32.cont [7/16] 0.0, 128
    %3887 = vxpose.xlu0.b32.cont [8/16] 0.0, 128
    %3888 = vxpose.xlu0.b32.cont [9/16] 0.0, 128
    %3889 = vxpose.xlu0.b32.cont [10/16] 0.0, 128
    %3890 = vxpose.xlu0.b32.cont [11/16] 0.0, 128
    %3891 = vxpose.xlu0.b32.cont [12/16] 0.0, 128
    %3892 = vxpose.xlu0.b32.cont [13/16] 0.0, 128
    %3893 = vxpose.xlu0.b32.cont [14/16] 0.0, 128
    %3894 = vxpose.xlu0.b32.cont [15/16] 0.0, 128
    %3895 = vxpose.xlu0.b32.end [16/16] 0.0, 128
    %v3896 = vpop.trf.xlu0
    %v3897 = vpop.trf.xlu0
    %v3898 = vpop.trf.xlu0
    %v3899 = vpop.trf.xlu0
    %v3900 = vpop.trf.xlu0
    %v3901 = vpop.trf.xlu0
    %v3902 = vpop.trf.xlu0
    %v3903 = vpop.trf.xlu0
    %v3904 = vpop.trf.xlu0
    %v3905 = vpop.trf.xlu0
    %v3906 = vpop.trf.xlu0
    %v3907 = vpop.trf.xlu0
    %v3908 = vpop.trf.xlu0
    %v3909 = vpop.trf.xlu0
    %v3910 = vpop.trf.xlu0
    %v3911 = vpop.trf.xlu0
    %3912 = vxpose.xlu0.b32.start [1/16] %v3824, 128
    %3913 = vxpose.xlu0.b32.cont [2/16] 0.0, 128
    %3914 = vxpose.xlu0.b32.cont [3/16] 0.0, 128
    %3915 = vxpose.xlu0.b32.cont [4/16] 0.0, 128
    %3916 = vxpose.xlu0.b32.cont [5/16] 0.0, 128
    %3917 = vxpose.xlu0.b32.cont [6/16] 0.0, 128
    %3918 = vxpose.xlu0.b32.cont [7/16] 0.0, 128
    %3919 = vxpose.xlu0.b32.cont [8/16] 0.0, 128
    %3920 = vxpose.xlu0.b32.cont [9/16] 0.0, 128
    %3921 = vxpose.xlu0.b32.cont [10/16] 0.0, 128
    %3922 = vxpose.xlu0.b32.cont [11/16] 0.0, 128
    %3923 = vxpose.xlu0.b32.cont [12/16] 0.0, 128
    %3924 = vxpose.xlu0.b32.cont [13/16] 0.0, 128
    %3925 = vxpose.xlu0.b32.cont [14/16] 0.0, 128
    %3926 = vxpose.xlu0.b32.cont [15/16] 0.0, 128
    %3927 = vxpose.xlu0.b32.end [16/16] 0.0, 128
    %v3928 = vpop.trf.xlu0
    %v3929 = vpop.trf.xlu0
    %v3930 = vpop.trf.xlu0
    %v3931 = vpop.trf.xlu0
    %v3932 = vpop.trf.xlu0
    %v3933 = vpop.trf.xlu0
    %v3934 = vpop.trf.xlu0
    %v3935 = vpop.trf.xlu0
    %v3936 = vpop.trf.xlu0
    %v3937 = vpop.trf.xlu0
    %v3938 = vpop.trf.xlu0
    %v3939 = vpop.trf.xlu0
    %v3940 = vpop.trf.xlu0
    %v3941 = vpop.trf.xlu0
    %v3942 = vpop.trf.xlu0
    %v3943 = vpop.trf.xlu0
    %v3945 = vsel %vm340, %v3896, 0
    %v3948 = vsel %vm340, %v3897, 0
    %v3951 = vsel %vm340, %v3898, 0
    %v3954 = vsel %vm340, %v3899, 0
    %v3957 = vsel %vm340, %v3900, 0
    %v3960 = vsel %vm340, %v3901, 0
    %v3963 = vsel %vm340, %v3902, 0
    %v3966 = vsel %vm340, %v3903, 0
    %v3969 = vsel %vm340, %v3904, 0
    %v3972 = vsel %vm340, %v3905, 0
    %v3975 = vsel %vm340, %v3906, 0
    %v3978 = vsel %vm340, %v3907, 0
    %v3981 = vsel %vm340, %v3908, 0
    %v3984 = vsel %vm340, %v3909, 0
    %v3987 = vsel %vm340, %v3910, 0
    %v3990 = vsel %vm340, %v3911, 0
    %v3993 = vsel %vm340, %v3928, 0
    %v3996 = vsel %vm340, %v3929, 0
    %v3999 = vsel %vm340, %v3930, 0
    %v4002 = vsel %vm340, %v3931, 0
    %v4005 = vsel %vm340, %v3932, 0
    %v4008 = vsel %vm340, %v3933, 0
    %v4011 = vsel %vm340, %v3934, 0
    %v4014 = vsel %vm340, %v3935, 0
    %v4017 = vsel %vm340, %v3936, 0
    %v4020 = vsel %vm340, %v3937, 0
    %v4023 = vsel %vm340, %v3938, 0
    %v4026 = vsel %vm340, %v3939, 0
    %v4029 = vsel %vm340, %v3940, 0
    %v4032 = vsel %vm340, %v3941, 0
    %v4035 = vsel %vm340, %v3942, 0
    %v4038 = vsel %vm340, %v3943, 0
    %4040 = vmatprep.subr.mxu0 %v3830
    %4041 = vmatpush1.msra.mxu0 %v3828
    %4042 = vmatprep.subr.mxu0 0.0
    %4043 = vmatpush1.msra.mxu0 0.0
    %4044 = vmatprep.subr.mxu0 0.0
    %4045 = vmatpush1.msra.mxu0 0.0
    %4046 = vmatprep.subr.mxu0 0.0
    %4047 = vmatpush1.msra.mxu0 0.0
    %4048 = vmatprep.subr.mxu0 0.0
    %4049 = vmatpush1.msra.mxu0 0.0
    %4050 = vmatprep.subr.mxu0 0.0
    %4051 = vmatpush1.msra.mxu0 0.0
    %4052 = vmatprep.subr.mxu0 0.0
    %4053 = vmatpush1.msra.mxu0 0.0
    %4054 = vmatprep.subr.mxu0 0.0
    %4055 = vmatpush1.msra.mxu0 0.0
    %4056 = vmatprep.subr.mxu0 0.0
    %4057 = vmatpush1.msra.mxu0 0.0
    %4058 = vmatprep.subr.mxu0 0.0
    %4059 = vmatpush1.msra.mxu0 0.0
    %4060 = vmatprep.subr.mxu0 0.0
    %4061 = vmatpush1.msra.mxu0 0.0
    %4062 = vmatprep.subr.mxu0 0.0
    %4063 = vmatpush1.msra.mxu0 0.0
    %4064 = vmatprep.subr.mxu0 0.0
    %4065 = vmatpush1.msra.mxu0 0.0
    %4066 = vmatprep.subr.mxu0 0.0
    %4067 = vmatpush1.msra.mxu0 0.0
    %4068 = vmatprep.subr.mxu0 0.0
    %4069 = vmatpush1.msra.mxu0 0.0
    %4070 = vmatprep.subr.mxu0 0.0
    %4071 = vmatpush1.msra.mxu0 0.0
    %4072 = vmatprep.subr.mxu0 0.0
    %4073 = vmatpush1.msra.mxu0 0.0
    %4074 = vmatprep.subr.mxu0 0.0
    %4075 = vmatpush1.msra.mxu0 0.0
    %4076 = vmatprep.subr.mxu0 0.0
    %4077 = vmatpush1.msra.mxu0 0.0
    %4078 = vmatprep.subr.mxu0 0.0
    %4079 = vmatpush1.msra.mxu0 0.0
    %4080 = vmatprep.subr.mxu0 0.0
    %4081 = vmatpush1.msra.mxu0 0.0
    %4082 = vmatprep.subr.mxu0 0.0
    %4083 = vmatpush1.msra.mxu0 0.0
    %4084 = vmatprep.subr.mxu0 0.0
    %4085 = vmatpush1.msra.mxu0 0.0
    %4086 = vmatprep.subr.mxu0 0.0
    %4087 = vmatpush1.msra.mxu0 0.0
    %4088 = vmatprep.subr.mxu0 0.0
    %4089 = vmatpush1.msra.mxu0 0.0
    %4090 = vmatprep.subr.mxu0 0.0
    %4091 = vmatpush1.msra.mxu0 0.0
    %4092 = vmatprep.subr.mxu0 0.0
    %4093 = vmatpush1.msra.mxu0 0.0
    %4094 = vmatprep.subr.mxu0 0.0
    %4095 = vmatpush1.msra.mxu0 0.0
    %4096 = vmatprep.subr.mxu0 0.0
    %4097 = vmatpush1.msra.mxu0 0.0
    %4098 = vmatprep.subr.mxu0 0.0
    %4099 = vmatpush1.msra.mxu0 0.0
    %4100 = vmatprep.subr.mxu0 0.0
    %4101 = vmatpush1.msra.mxu0 0.0
    %4102 = vmatprep.subr.mxu0 0.0
    %4103 = vmatpush1.msra.mxu0 0.0
    %4104 = vmatprep.mubr.f32.mxu0 0.0
    %4105 = vmatmul.mubr.f32.gmra.mrb[0].mxu0 %v3945
    %v4106 = vpop.f32.mrb[0].mxu0
    %v4107 = vadd.f32 0.0, %v4106
    %v4108 = vpop.f32.mrb[0].mxu0
    %v4109 = vadd.f32 0.0, %v4108
    %4110 = vmatprep.mubr.f32.mxu0 0.0
    %4111 = vmatmul.mubr.f32.gmra.mrb[0].mxu0 %v3948
    %v4112 = vpop.f32.mrb[0].mxu0
    %v4113 = vadd.f32 0.0, %v4112
    %v4114 = vpop.f32.mrb[0].mxu0
    %v4115 = vadd.f32 0.0, %v4114
    %4116 = vmatprep.mubr.f32.mxu0 0.0
    %4117 = vmatmul.mubr.f32.gmra.mrb[0].mxu0 %v3951
    %v4118 = vpop.f32.mrb[0].mxu0
    %v4119 = vadd.f32 0.0, %v4118
    %v4120 = vpop.f32.mrb[0].mxu0
    %v4121 = vadd.f32 0.0, %v4120
    %4122 = vmatprep.mubr.f32.mxu0 0.0
    %4123 = vmatmul.mubr.f32.gmra.mrb[0].mxu0 %v3954
    %v4124 = vpop.f32.mrb[0].mxu0
    %v4125 = vadd.f32 0.0, %v4124
    %v4126 = vpop.f32.mrb[0].mxu0
    %v4127 = vadd.f32 0.0, %v4126
    %4128 = vmatprep.mubr.f32.mxu0 0.0
    %4129 = vmatmul.mubr.f32.gmra.mrb[0].mxu0 %v3957
    %v4130 = vpop.f32.mrb[0].mxu0
    %v4131 = vadd.f32 0.0, %v4130
    %v4132 = vpop.f32.mrb[0].mxu0
    %v4133 = vadd.f32 0.0, %v4132
    %4134 = vmatprep.mubr.f32.mxu0 0.0
    %4135 = vmatmul.mubr.f32.gmra.mrb[0].mxu0 %v3960
    %v4136 = vpop.f32.mrb[0].mxu0
    %v4137 = vadd.f32 0.0, %v4136
    %v4138 = vpop.f32.mrb[0].mxu0
    %v4139 = vadd.f32 0.0, %v4138
    %4140 = vmatprep.mubr.f32.mxu0 0.0
    %4141 = vmatmul.mubr.f32.gmra.mrb[0].mxu0 %v3963
    %v4142 = vpop.f32.mrb[0].mxu0
    %v4143 = vadd.f32 0.0, %v4142
    %v4144 = vpop.f32.mrb[0].mxu0
    %v4145 = vadd.f32 0.0, %v4144
    %4146 = vmatprep.mubr.f32.mxu0 0.0
    %4147 = vmatmul.mubr.f32.gmra.mrb[0].mxu0 %v3966
    %v4148 = vpop.f32.mrb[0].mxu0
    %v4149 = vadd.f32 0.0, %v4148
    %v4150 = vpop.f32.mrb[0].mxu0
    %v4151 = vadd.f32 0.0, %v4150
    %4152 = vmatprep.mubr.f32.mxu0 0.0
    %4153 = vmatmul.mubr.f32.gmra.mrb[0].mxu0 %v3969
    %v4154 = vpop.f32.mrb[0].mxu0
    %v4155 = vadd.f32 0.0, %v4154
    %v4156 = vpop.f32.mrb[0].mxu0
    %v4157 = vadd.f32 0.0, %v4156
    %4158 = vmatprep.mubr.f32.mxu0 0.0
    %4159 = vmatmul.mubr.f32.gmra.mrb[0].mxu0 %v3972
    %v4160 = vpop.f32.mrb[0].mxu0
    %v4161 = vadd.f32 0.0, %v4160
    %v4162 = vpop.f32.mrb[0].mxu0
    %v4163 = vadd.f32 0.0, %v4162
    %4164 = vmatprep.mubr.f32.mxu0 0.0
    %4165 = vmatmul.mubr.f32.gmra.mrb[0].mxu0 %v3975
    %v4166 = vpop.f32.mrb[0].mxu0
    %v4167 = vadd.f32 0.0, %v4166
    %v4168 = vpop.f32.mrb[0].mxu0
    %v4169 = vadd.f32 0.0, %v4168
    %4170 = vmatprep.mubr.f32.mxu0 0.0
    %4171 = vmatmul.mubr.f32.gmra.mrb[0].mxu0 %v3978
    %v4172 = vpop.f32.mrb[0].mxu0
    %v4173 = vadd.f32 0.0, %v4172
    %v4174 = vpop.f32.mrb[0].mxu0
    %v4175 = vadd.f32 0.0, %v4174
    %4176 = vmatprep.mubr.f32.mxu0 0.0
    %4177 = vmatmul.mubr.f32.gmra.mrb[0].mxu0 %v3981
    %v4178 = vpop.f32.mrb[0].mxu0
    %v4179 = vadd.f32 0.0, %v4178
    %v4180 = vpop.f32.mrb[0].mxu0
    %v4181 = vadd.f32 0.0, %v4180
    %4182 = vmatprep.mubr.f32.mxu0 0.0
    %4183 = vmatmul.mubr.f32.gmra.mrb[0].mxu0 %v3984
    %v4184 = vpop.f32.mrb[0].mxu0
    %v4185 = vadd.f32 0.0, %v4184
    %v4186 = vpop.f32.mrb[0].mxu0
    %v4187 = vadd.f32 0.0, %v4186
    %4188 = vmatprep.mubr.f32.mxu0 0.0
    %4189 = vmatmul.mubr.f32.gmra.mrb[0].mxu0 %v3987
    %v4190 = vpop.f32.mrb[0].mxu0
    %v4191 = vadd.f32 0.0, %v4190
    %v4192 = vpop.f32.mrb[0].mxu0
    %v4193 = vadd.f32 0.0, %v4192
    %4194 = vmatprep.mubr.f32.mxu0 0.0
    %4195 = vmatmul.mubr.f32.gmra.mrb[0].mxu0 %v3990
    %v4196 = vpop.f32.mrb[0].mxu0
    %v4197 = vadd.f32 0.0, %v4196
    %v4198 = vpop.f32.mrb[0].mxu0
    %v4199 = vadd.f32 0.0, %v4198
    %4200 = vmatprep.mubr.f32.mxu0 0.0
    %4201 = vmatmul.mubr.f32.gmra.mrb[0].mxu0 %v3993
    %v4202 = vpop.f32.mrb[0].mxu0
    %v4203 = vadd.f32 0.0, %v4202
    %v4204 = vpop.f32.mrb[0].mxu0
    %v4205 = vadd.f32 0.0, %v4204
    %4206 = vmatprep.mubr.f32.mxu0 0.0
    %4207 = vmatmul.mubr.f32.gmra.mrb[0].mxu0 %v3996
    %v4208 = vpop.f32.mrb[0].mxu0
    %v4209 = vadd.f32 0.0, %v4208
    %v4210 = vpop.f32.mrb[0].mxu0
    %v4211 = vadd.f32 0.0, %v4210
    %4212 = vmatprep.mubr.f32.mxu0 0.0
    %4213 = vmatmul.mubr.f32.gmra.mrb[0].mxu0 %v3999
    %v4214 = vpop.f32.mrb[0].mxu0
    %v4215 = vadd.f32 0.0, %v4214
    %v4216 = vpop.f32.mrb[0].mxu0
    %v4217 = vadd.f32 0.0, %v4216
    %4218 = vmatprep.mubr.f32.mxu0 0.0
    %4219 = vmatmul.mubr.f32.gmra.mrb[0].mxu0 %v4002
    %v4220 = vpop.f32.mrb[0].mxu0
    %v4221 = vadd.f32 0.0, %v4220
    %v4222 = vpop.f32.mrb[0].mxu0
    %v4223 = vadd.f32 0.0, %v4222
    %4224 = vmatprep.mubr.f32.mxu0 0.0
    %4225 = vmatmul.mubr.f32.gmra.mrb[0].mxu0 %v4005
    %v4226 = vpop.f32.mrb[0].mxu0
    %v4227 = vadd.f32 0.0, %v4226
    %v4228 = vpop.f32.mrb[0].mxu0
    %v4229 = vadd.f32 0.0, %v4228
    %4230 = vmatprep.mubr.f32.mxu0 0.0
    %4231 = vmatmul.mubr.f32.gmra.mrb[0].mxu0 %v4008
    %v4232 = vpop.f32.mrb[0].mxu0
    %v4233 = vadd.f32 0.0, %v4232
    %v4234 = vpop.f32.mrb[0].mxu0
    %v4235 = vadd.f32 0.0, %v4234
    %4236 = vmatprep.mubr.f32.mxu0 0.0
    %4237 = vmatmul.mubr.f32.gmra.mrb[0].mxu0 %v4011
    %v4238 = vpop.f32.mrb[0].mxu0
    %v4239 = vadd.f32 0.0, %v4238
    %v4240 = vpop.f32.mrb[0].mxu0
    %v4241 = vadd.f32 0.0, %v4240
    %4242 = vmatprep.mubr.f32.mxu0 0.0
    %4243 = vmatmul.mubr.f32.gmra.mrb[0].mxu0 %v4014
    %v4244 = vpop.f32.mrb[0].mxu0
    %v4245 = vadd.f32 0.0, %v4244
    %v4246 = vpop.f32.mrb[0].mxu0
    %v4247 = vadd.f32 0.0, %v4246
    %4248 = vmatprep.mubr.f32.mxu0 0.0
    %4249 = vmatmul.mubr.f32.gmra.mrb[0].mxu0 %v4017
    %v4250 = vpop.f32.mrb[0].mxu0
    %v4251 = vadd.f32 0.0, %v4250
    %v4252 = vpop.f32.mrb[0].mxu0
    %v4253 = vadd.f32 0.0, %v4252
    %4254 = vmatprep.mubr.f32.mxu0 0.0
    %4255 = vmatmul.mubr.f32.gmra.mrb[0].mxu0 %v4020
    %v4256 = vpop.f32.mrb[0].mxu0
    %v4257 = vadd.f32 0.0, %v4256
    %v4258 = vpop.f32.mrb[0].mxu0
    %v4259 = vadd.f32 0.0, %v4258
    %4260 = vmatprep.mubr.f32.mxu0 0.0
    %4261 = vmatmul.mubr.f32.gmra.mrb[0].mxu0 %v4023
    %v4262 = vpop.f32.mrb[0].mxu0
    %v4263 = vadd.f32 0.0, %v4262
    %v4264 = vpop.f32.mrb[0].mxu0
    %v4265 = vadd.f32 0.0, %v4264
    %4266 = vmatprep.mubr.f32.mxu0 0.0
    %4267 = vmatmul.mubr.f32.gmra.mrb[0].mxu0 %v4026
    %v4268 = vpop.f32.mrb[0].mxu0
    %v4269 = vadd.f32 0.0, %v4268
    %v4270 = vpop.f32.mrb[0].mxu0
    %v4271 = vadd.f32 0.0, %v4270
    %4272 = vmatprep.mubr.f32.mxu0 0.0
    %4273 = vmatmul.mubr.f32.gmra.mrb[0].mxu0 %v4029
    %v4274 = vpop.f32.mrb[0].mxu0
    %v4275 = vadd.f32 0.0, %v4274
    %v4276 = vpop.f32.mrb[0].mxu0
    %v4277 = vadd.f32 0.0, %v4276
    %4278 = vmatprep.mubr.f32.mxu0 0.0
    %4279 = vmatmul.mubr.f32.gmra.mrb[0].mxu0 %v4032
    %v4280 = vpop.f32.mrb[0].mxu0
    %v4281 = vadd.f32 0.0, %v4280
    %v4282 = vpop.f32.mrb[0].mxu0
    %v4283 = vadd.f32 0.0, %v4282
    %4284 = vmatprep.mubr.f32.mxu0 0.0
    %4285 = vmatmul.mubr.f32.gmra.mrb[0].mxu0 %v4035
    %v4286 = vpop.f32.mrb[0].mxu0
    %v4287 = vadd.f32 0.0, %v4286
    %v4288 = vpop.f32.mrb[0].mxu0
    %v4289 = vadd.f32 0.0, %v4288
    %4290 = vmatprep.mubr.f32.mxu0 0.0
    %4291 = vmatmul.mubr.f32.gmra.mrb[0].mxu0 %v4038
    %v4292 = vpop.f32.mrb[0].mxu0
    %v4293 = vadd.f32 0.0, %v4292
    %v4294 = vpop.f32.mrb[0].mxu0
    %v4295 = vadd.f32 0.0, %v4294
    %4296 = vdwg.mxu0
    %v4297 = vmax.f32 %v4107, %v4109
    %4298 = vmax.xlane.f32.xlu0 %v4297
    %v4299 = vpop.xlane.xlu0 %4298
    %v4300 = vmax.f32 %v4113, %v4115
    %4301 = vmax.xlane.f32.xlu0 %v4300
    %v4302 = vpop.xlane.xlu0 %4301
    %v4303 = vmax.f32 %v4119, %v4121
    %4304 = vmax.xlane.f32.xlu0 %v4303
    %v4305 = vpop.xlane.xlu0 %4304
    %v4306 = vmax.f32 %v4125, %v4127
    %4307 = vmax.xlane.f32.xlu0 %v4306
    %v4308 = vpop.xlane.xlu0 %4307
    %v4309 = vmax.f32 %v4131, %v4133
    %4310 = vmax.xlane.f32.xlu0 %v4309
    %v4311 = vpop.xlane.xlu0 %4310
    %v4312 = vmax.f32 %v4137, %v4139
    %4313 = vmax.xlane.f32.xlu0 %v4312
    %v4314 = vpop.xlane.xlu0 %4313
    %v4315 = vmax.f32 %v4143, %v4145
    %4316 = vmax.xlane.f32.xlu0 %v4315
    %v4317 = vpop.xlane.xlu0 %4316
    %v4318 = vmax.f32 %v4149, %v4151
    %4319 = vmax.xlane.f32.xlu0 %v4318
    %v4320 = vpop.xlane.xlu0 %4319
    %v4321 = vmax.f32 %v4155, %v4157
    %4322 = vmax.xlane.f32.xlu0 %v4321
    %v4323 = vpop.xlane.xlu0 %4322
    %v4324 = vmax.f32 %v4161, %v4163
    %4325 = vmax.xlane.f32.xlu0 %v4324
    %v4326 = vpop.xlane.xlu0 %4325
    %v4327 = vmax.f32 %v4167, %v4169
    %4328 = vmax.xlane.f32.xlu0 %v4327
    %v4329 = vpop.xlane.xlu0 %4328
    %v4330 = vmax.f32 %v4173, %v4175
    %4331 = vmax.xlane.f32.xlu0 %v4330
    %v4332 = vpop.xlane.xlu0 %4331
    %v4333 = vmax.f32 %v4179, %v4181
    %4334 = vmax.xlane.f32.xlu0 %v4333
    %v4335 = vpop.xlane.xlu0 %4334
    %v4336 = vmax.f32 %v4185, %v4187
    %4337 = vmax.xlane.f32.xlu0 %v4336
    %v4338 = vpop.xlane.xlu0 %4337
    %v4339 = vmax.f32 %v4191, %v4193
    %4340 = vmax.xlane.f32.xlu0 %v4339
    %v4341 = vpop.xlane.xlu0 %4340
    %v4342 = vmax.f32 %v4197, %v4199
    %4343 = vmax.xlane.f32.xlu0 %v4342
    %v4344 = vpop.xlane.xlu0 %4343
    %v4345 = vmax.f32 %v4203, %v4205
    %4346 = vmax.xlane.f32.xlu0 %v4345
    %v4347 = vpop.xlane.xlu0 %4346
    %v4348 = vmax.f32 %v4209, %v4211
    %4349 = vmax.xlane.f32.xlu0 %v4348
    %v4350 = vpop.xlane.xlu0 %4349
    %v4351 = vmax.f32 %v4215, %v4217
    %4352 = vmax.xlane.f32.xlu0 %v4351
    %v4353 = vpop.xlane.xlu0 %4352
    %v4354 = vmax.f32 %v4221, %v4223
    %4355 = vmax.xlane.f32.xlu0 %v4354
    %v4356 = vpop.xlane.xlu0 %4355
    %v4357 = vmax.f32 %v4227, %v4229
    %4358 = vmax.xlane.f32.xlu0 %v4357
    %v4359 = vpop.xlane.xlu0 %4358
    %v4360 = vmax.f32 %v4233, %v4235
    %4361 = vmax.xlane.f32.xlu0 %v4360
    %v4362 = vpop.xlane.xlu0 %4361
    %v4363 = vmax.f32 %v4239, %v4241
    %4364 = vmax.xlane.f32.xlu0 %v4363
    %v4365 = vpop.xlane.xlu0 %4364
    %v4366 = vmax.f32 %v4245, %v4247
    %4367 = vmax.xlane.f32.xlu0 %v4366
    %v4368 = vpop.xlane.xlu0 %4367
    %v4369 = vmax.f32 %v4251, %v4253
    %4370 = vmax.xlane.f32.xlu0 %v4369
    %v4371 = vpop.xlane.xlu0 %4370
    %v4372 = vmax.f32 %v4257, %v4259
    %4373 = vmax.xlane.f32.xlu0 %v4372
    %v4374 = vpop.xlane.xlu0 %4373
    %v4375 = vmax.f32 %v4263, %v4265
    %4376 = vmax.xlane.f32.xlu0 %v4375
    %v4377 = vpop.xlane.xlu0 %4376
    %v4378 = vmax.f32 %v4269, %v4271
    %4379 = vmax.xlane.f32.xlu0 %v4378
    %v4380 = vpop.xlane.xlu0 %4379
    %v4381 = vmax.f32 %v4275, %v4277
    %4382 = vmax.xlane.f32.xlu0 %v4381
    %v4383 = vpop.xlane.xlu0 %4382
    %v4384 = vmax.f32 %v4281, %v4283
    %4385 = vmax.xlane.f32.xlu0 %v4384
    %v4386 = vpop.xlane.xlu0 %4385
    %v4387 = vmax.f32 %v4287, %v4289
    %4388 = vmax.xlane.f32.xlu0 %v4387
    %v4389 = vpop.xlane.xlu0 %4388
    %v4390 = vmax.f32 %v4293, %v4295
    %4391 = vmax.xlane.f32.xlu0 %v4390
    %v4392 = vpop.xlane.xlu0 %4391
    %v4393 = vsub.f32 %v4107, %v4299
    %v4394 = vsub.f32 %v4109, %v4299
    %v4395 = vsub.f32 %v4113, %v4302
    %v4396 = vsub.f32 %v4115, %v4302
    %v4397 = vsub.f32 %v4119, %v4305
    %v4398 = vsub.f32 %v4121, %v4305
    %v4399 = vsub.f32 %v4125, %v4308
    %v4400 = vsub.f32 %v4127, %v4308
    %v4401 = vsub.f32 %v4131, %v4311
    %v4402 = vsub.f32 %v4133, %v4311
    %v4403 = vsub.f32 %v4137, %v4314
    %v4404 = vsub.f32 %v4139, %v4314
    %v4405 = vsub.f32 %v4143, %v4317
    %v4406 = vsub.f32 %v4145, %v4317
    %v4407 = vsub.f32 %v4149, %v4320
    %v4408 = vsub.f32 %v4151, %v4320
    %v4409 = vsub.f32 %v4155, %v4323
    %v4410 = vsub.f32 %v4157, %v4323
    %v4411 = vsub.f32 %v4161, %v4326
    %v4412 = vsub.f32 %v4163, %v4326
    %v4413 = vsub.f32 %v4167, %v4329
    %v4414 = vsub.f32 %v4169, %v4329
    %v4415 = vsub.f32 %v4173, %v4332
    %v4416 = vsub.f32 %v4175, %v4332
    %v4417 = vsub.f32 %v4179, %v4335
    %v4418 = vsub.f32 %v4181, %v4335
    %v4419 = vsub.f32 %v4185, %v4338
    %v4420 = vsub.f32 %v4187, %v4338
    %v4421 = vsub.f32 %v4191, %v4341
    %v4422 = vsub.f32 %v4193, %v4341
    %v4423 = vsub.f32 %v4197, %v4344
    %v4424 = vsub.f32 %v4199, %v4344
    %v4425 = vsub.f32 %v4203, %v4347
    %v4426 = vsub.f32 %v4205, %v4347
    %v4427 = vsub.f32 %v4209, %v4350
    %v4428 = vsub.f32 %v4211, %v4350
    %v4429 = vsub.f32 %v4215, %v4353
    %v4430 = vsub.f32 %v4217, %v4353
    %v4431 = vsub.f32 %v4221, %v4356
    %v4432 = vsub.f32 %v4223, %v4356
    %v4433 = vsub.f32 %v4227, %v4359
    %v4434 = vsub.f32 %v4229, %v4359
    %v4435 = vsub.f32 %v4233, %v4362
    %v4436 = vsub.f32 %v4235, %v4362
    %v4437 = vsub.f32 %v4239, %v4365
    %v4438 = vsub.f32 %v4241, %v4365
    %v4439 = vsub.f32 %v4245, %v4368
    %v4440 = vsub.f32 %v4247, %v4368
    %v4441 = vsub.f32 %v4251, %v4371
    %v4442 = vsub.f32 %v4253, %v4371
    %v4443 = vsub.f32 %v4257, %v4374
    %v4444 = vsub.f32 %v4259, %v4374
    %v4445 = vsub.f32 %v4263, %v4377
    %v4446 = vsub.f32 %v4265, %v4377
    %v4447 = vsub.f32 %v4269, %v4380
    %v4448 = vsub.f32 %v4271, %v4380
    %v4449 = vsub.f32 %v4275, %v4383
    %v4450 = vsub.f32 %v4277, %v4383
    %v4451 = vsub.f32 %v4281, %v4386
    %v4452 = vsub.f32 %v4283, %v4386
    %v4453 = vsub.f32 %v4287, %v4389
    %v4454 = vsub.f32 %v4289, %v4389
    %v4455 = vsub.f32 %v4293, %v4392
    %v4456 = vsub.f32 %v4295, %v4392
    %v4457 = vmul.f32 %v4393, 1.442695
    %v4458 = vpow.pop %v4457
    %v4459 = vmul.f32 %v4394, 1.442695
    %v4460 = vpow.pop %v4459
    %v4461 = vmul.f32 %v4395, 1.442695
    %v4462 = vpow.pop %v4461
    %v4463 = vmul.f32 %v4396, 1.442695
    %v4464 = vpow.pop %v4463
    %v4465 = vmul.f32 %v4397, 1.442695
    %v4466 = vpow.pop %v4465
    %v4467 = vmul.f32 %v4398, 1.442695
    %v4468 = vpow.pop %v4467
    %v4469 = vmul.f32 %v4399, 1.442695
    %v4470 = vpow.pop %v4469
    %v4471 = vmul.f32 %v4400, 1.442695
    %v4472 = vpow.pop %v4471
    %v4473 = vmul.f32 %v4401, 1.442695
    %v4474 = vpow.pop %v4473
    %v4475 = vmul.f32 %v4402, 1.442695
    %v4476 = vpow.pop %v4475
    %v4477 = vmul.f32 %v4403, 1.442695
    %v4478 = vpow.pop %v4477
    %v4479 = vmul.f32 %v4404, 1.442695
    %v4480 = vpow.pop %v4479
    %v4481 = vmul.f32 %v4405, 1.442695
    %v4482 = vpow.pop %v4481
    %v4483 = vmul.f32 %v4406, 1.442695
    %v4484 = vpow.pop %v4483
    %v4485 = vmul.f32 %v4407, 1.442695
    %v4486 = vpow.pop %v4485
    %v4487 = vmul.f32 %v4408, 1.442695
    %v4488 = vpow.pop %v4487
    %v4489 = vmul.f32 %v4409, 1.442695
    %v4490 = vpow.pop %v4489
    %v4491 = vmul.f32 %v4410, 1.442695
    %v4492 = vpow.pop %v4491
    %v4493 = vmul.f32 %v4411, 1.442695
    %v4494 = vpow.pop %v4493
    %v4495 = vmul.f32 %v4412, 1.442695
    %v4496 = vpow.pop %v4495
    %v4497 = vmul.f32 %v4413, 1.442695
    %v4498 = vpow.pop %v4497
    %v4499 = vmul.f32 %v4414, 1.442695
    %v4500 = vpow.pop %v4499
    %v4501 = vmul.f32 %v4415, 1.442695
    %v4502 = vpow.pop %v4501
    %v4503 = vmul.f32 %v4416, 1.442695
    %v4504 = vpow.pop %v4503
    %v4505 = vmul.f32 %v4417, 1.442695
    %v4506 = vpow.pop %v4505
    %v4507 = vmul.f32 %v4418, 1.442695
    %v4508 = vpow.pop %v4507
    %v4509 = vmul.f32 %v4419, 1.442695
    %v4510 = vpow.pop %v4509
    %v4511 = vmul.f32 %v4420, 1.442695
    %v4512 = vpow.pop %v4511
    %v4513 = vmul.f32 %v4421, 1.442695
    %v4514 = vpow.pop %v4513
    %v4515 = vmul.f32 %v4422, 1.442695
    %v4516 = vpow.pop %v4515
    %v4517 = vmul.f32 %v4423, 1.442695
    %v4518 = vpow.pop %v4517
    %v4519 = vmul.f32 %v4424, 1.442695
    %v4520 = vpow.pop %v4519
    %v4521 = vmul.f32 %v4425, 1.442695
    %v4522 = vpow.pop %v4521
    %v4523 = vmul.f32 %v4426, 1.442695
    %v4524 = vpow.pop %v4523
    %v4525 = vmul.f32 %v4427, 1.442695
    %v4526 = vpow.pop %v4525
    %v4527 = vmul.f32 %v4428, 1.442695
    %v4528 = vpow.pop %v4527
    %v4529 = vmul.f32 %v4429, 1.442695
    %v4530 = vpow.pop %v4529
    %v4531 = vmul.f32 %v4430, 1.442695
    %v4532 = vpow.pop %v4531
    %v4533 = vmul.f32 %v4431, 1.442695
    %v4534 = vpow.pop %v4533
    %v4535 = vmul.f32 %v4432, 1.442695
    %v4536 = vpow.pop %v4535
    %v4537 = vmul.f32 %v4433, 1.442695
    %v4538 = vpow.pop %v4537
    %v4539 = vmul.f32 %v4434, 1.442695
    %v4540 = vpow.pop %v4539
    %v4541 = vmul.f32 %v4435, 1.442695
    %v4542 = vpow.pop %v4541
    %v4543 = vmul.f32 %v4436, 1.442695
    %v4544 = vpow.pop %v4543
    %v4545 = vmul.f32 %v4437, 1.442695
    %v4546 = vpow.pop %v4545
    %v4547 = vmul.f32 %v4438, 1.442695
    %v4548 = vpow.pop %v4547
    %v4549 = vmul.f32 %v4439, 1.442695
    %v4550 = vpow.pop %v4549
    %v4551 = vmul.f32 %v4440, 1.442695
    %v4552 = vpow.pop %v4551
    %v4553 = vmul.f32 %v4441, 1.442695
    %v4554 = vpow.pop %v4553
    %v4555 = vmul.f32 %v4442, 1.442695
    %v4556 = vpow.pop %v4555
    %v4557 = vmul.f32 %v4443, 1.442695
    %v4558 = vpow.pop %v4557
    %v4559 = vmul.f32 %v4444, 1.442695
    %v4560 = vpow.pop %v4559
    %v4561 = vmul.f32 %v4445, 1.442695
    %v4562 = vpow.pop %v4561
    %v4563 = vmul.f32 %v4446, 1.442695
    %v4564 = vpow.pop %v4563
    %v4565 = vmul.f32 %v4447, 1.442695
    %v4566 = vpow.pop %v4565
    %v4567 = vmul.f32 %v4448, 1.442695
    %v4568 = vpow.pop %v4567
    %v4569 = vmul.f32 %v4449, 1.442695
    %v4570 = vpow.pop %v4569
    %v4571 = vmul.f32 %v4450, 1.442695
    %v4572 = vpow.pop %v4571
    %v4573 = vmul.f32 %v4451, 1.442695
    %v4574 = vpow.pop %v4573
    %v4575 = vmul.f32 %v4452, 1.442695
    %v4576 = vpow.pop %v4575
    %v4577 = vmul.f32 %v4453, 1.442695
    %v4578 = vpow.pop %v4577
    %v4579 = vmul.f32 %v4454, 1.442695
    %v4580 = vpow.pop %v4579
    %v4581 = vmul.f32 %v4455, 1.442695
    %v4582 = vpow.pop %v4581
    %v4583 = vmul.f32 %v4456, 1.442695
    %v4584 = vpow.pop %v4583
    %v4585 = vadd.f32 %v4458, %v4460
    %4586 = vadd.xlane.f32.xlu0 %v4585
    %v4587 = vpop.xlane.xlu0 %4586
    %v4588 = vadd.f32 %v4462, %v4464
    %4589 = vadd.xlane.f32.xlu0 %v4588
    %v4590 = vpop.xlane.xlu0 %4589
    %v4591 = vadd.f32 %v4466, %v4468
    %4592 = vadd.xlane.f32.xlu0 %v4591
    %v4593 = vpop.xlane.xlu0 %4592
    %v4594 = vadd.f32 %v4470, %v4472
    %4595 = vadd.xlane.f32.xlu0 %v4594
    %v4596 = vpop.xlane.xlu0 %4595
    %v4597 = vadd.f32 %v4474, %v4476
    %4598 = vadd.xlane.f32.xlu0 %v4597
    %v4599 = vpop.xlane.xlu0 %4598
    %v4600 = vadd.f32 %v4478, %v4480
    %4601 = vadd.xlane.f32.xlu0 %v4600
    %v4602 = vpop.xlane.xlu0 %4601
    %v4603 = vadd.f32 %v4482, %v4484
    %4604 = vadd.xlane.f32.xlu0 %v4603
    %v4605 = vpop.xlane.xlu0 %4604
    %v4606 = vadd.f32 %v4486, %v4488
    %4607 = vadd.xlane.f32.xlu0 %v4606
    %v4608 = vpop.xlane.xlu0 %4607
    %v4609 = vadd.f32 %v4490, %v4492
    %4610 = vadd.xlane.f32.xlu0 %v4609
    %v4611 = vpop.xlane.xlu0 %4610
    %v4612 = vadd.f32 %v4494, %v4496
    %4613 = vadd.xlane.f32.xlu0 %v4612
    %v4614 = vpop.xlane.xlu0 %4613
    %v4615 = vadd.f32 %v4498, %v4500
    %4616 = vadd.xlane.f32.xlu0 %v4615
    %v4617 = vpop.xlane.xlu0 %4616
    %v4618 = vadd.f32 %v4502, %v4504
    %4619 = vadd.xlane.f32.xlu0 %v4618
    %v4620 = vpop.xlane.xlu0 %4619
    %v4621 = vadd.f32 %v4506, %v4508
    %4622 = vadd.xlane.f32.xlu0 %v4621
    %v4623 = vpop.xlane.xlu0 %4622
    %v4624 = vadd.f32 %v4510, %v4512
    %4625 = vadd.xlane.f32.xlu0 %v4624
    %v4626 = vpop.xlane.xlu0 %4625
    %v4627 = vadd.f32 %v4514, %v4516
    %4628 = vadd.xlane.f32.xlu0 %v4627
    %v4629 = vpop.xlane.xlu0 %4628
    %v4630 = vadd.f32 %v4518, %v4520
    %4631 = vadd.xlane.f32.xlu0 %v4630
    %v4632 = vpop.xlane.xlu0 %4631
    %v4633 = vadd.f32 %v4522, %v4524
    %4634 = vadd.xlane.f32.xlu0 %v4633
    %v4635 = vpop.xlane.xlu0 %4634
    %v4636 = vadd.f32 %v4526, %v4528
    %4637 = vadd.xlane.f32.xlu0 %v4636
    %v4638 = vpop.xlane.xlu0 %4637
    %v4639 = vadd.f32 %v4530, %v4532
    %4640 = vadd.xlane.f32.xlu0 %v4639
    %v4641 = vpop.xlane.xlu0 %4640
    %v4642 = vadd.f32 %v4534, %v4536
    %4643 = vadd.xlane.f32.xlu0 %v4642
    %v4644 = vpop.xlane.xlu0 %4643
    %v4645 = vadd.f32 %v4538, %v4540
    %4646 = vadd.xlane.f32.xlu0 %v4645
    %v4647 = vpop.xlane.xlu0 %4646
    %v4648 = vadd.f32 %v4542, %v4544
    %4649 = vadd.xlane.f32.xlu0 %v4648
    %v4650 = vpop.xlane.xlu0 %4649
    %v4651 = vadd.f32 %v4546, %v4548
    %4652 = vadd.xlane.f32.xlu0 %v4651
    %v4653 = vpop.xlane.xlu0 %4652
    %v4654 = vadd.f32 %v4550, %v4552
    %4655 = vadd.xlane.f32.xlu0 %v4654
    %v4656 = vpop.xlane.xlu0 %4655
    %v4657 = vadd.f32 %v4554, %v4556
    %4658 = vadd.xlane.f32.xlu0 %v4657
    %v4659 = vpop.xlane.xlu0 %4658
    %v4660 = vadd.f32 %v4558, %v4560
    %4661 = vadd.xlane.f32.xlu0 %v4660
    %v4662 = vpop.xlane.xlu0 %4661
    %v4663 = vadd.f32 %v4562, %v4564
    %4664 = vadd.xlane.f32.xlu0 %v4663
    %v4665 = vpop.xlane.xlu0 %4664
    %v4666 = vadd.f32 %v4566, %v4568
    %4667 = vadd.xlane.f32.xlu0 %v4666
    %v4668 = vpop.xlane.xlu0 %4667
    %v4669 = vadd.f32 %v4570, %v4572
    %4670 = vadd.xlane.f32.xlu0 %v4669
    %v4671 = vpop.xlane.xlu0 %4670
    %v4672 = vadd.f32 %v4574, %v4576
    %4673 = vadd.xlane.f32.xlu0 %v4672
    %v4674 = vpop.xlane.xlu0 %4673
    %v4675 = vadd.f32 %v4578, %v4580
    %4676 = vadd.xlane.f32.xlu0 %v4675
    %v4677 = vpop.xlane.xlu0 %4676
    %v4678 = vadd.f32 %v4582, %v4584
    %4679 = vadd.xlane.f32.xlu0 %v4678
    %v4680 = vpop.xlane.xlu0 %4679
    %v4681 = vrcp.pop %v4587
    %v4682 = vmul.f32 %v4458, %v4681
    %v4683 = vmul.f32 %v4460, %v4681
    %v4684 = vrcp.pop %v4590
    %v4685 = vmul.f32 %v4462, %v4684
    %v4686 = vmul.f32 %v4464, %v4684
    %v4687 = vrcp.pop %v4593
    %v4688 = vmul.f32 %v4466, %v4687
    %v4689 = vmul.f32 %v4468, %v4687
    %v4690 = vrcp.pop %v4596
    %v4691 = vmul.f32 %v4470, %v4690
    %v4692 = vmul.f32 %v4472, %v4690
    %v4693 = vrcp.pop %v4599
    %v4694 = vmul.f32 %v4474, %v4693
    %v4695 = vmul.f32 %v4476, %v4693
    %v4696 = vrcp.pop %v4602
    %v4697 = vmul.f32 %v4478, %v4696
    %v4698 = vmul.f32 %v4480, %v4696
    %v4699 = vrcp.pop %v4605
    %v4700 = vmul.f32 %v4482, %v4699
    %v4701 = vmul.f32 %v4484, %v4699
    %v4702 = vrcp.pop %v4608
    %v4703 = vmul.f32 %v4486, %v4702
    %v4704 = vmul.f32 %v4488, %v4702
    %v4705 = vrcp.pop %v4611
    %v4706 = vmul.f32 %v4490, %v4705
    %v4707 = vmul.f32 %v4492, %v4705
    %v4708 = vrcp.pop %v4614
    %v4709 = vmul.f32 %v4494, %v4708
    %v4710 = vmul.f32 %v4496, %v4708
    %v4711 = vrcp.pop %v4617
    %v4712 = vmul.f32 %v4498, %v4711
    %v4713 = vmul.f32 %v4500, %v4711
    %v4714 = vrcp.pop %v4620
    %v4715 = vmul.f32 %v4502, %v4714
    %v4716 = vmul.f32 %v4504, %v4714
    %v4717 = vrcp.pop %v4623
    %v4718 = vmul.f32 %v4506, %v4717
    %v4719 = vmul.f32 %v4508, %v4717
    %v4720 = vrcp.pop %v4626
    %v4721 = vmul.f32 %v4510, %v4720
    %v4722 = vmul.f32 %v4512, %v4720
    %v4723 = vrcp.pop %v4629
    %v4724 = vmul.f32 %v4514, %v4723
    %v4725 = vmul.f32 %v4516, %v4723
    %v4726 = vrcp.pop %v4632
    %v4727 = vmul.f32 %v4518, %v4726
    %v4728 = vmul.f32 %v4520, %v4726
    %v4729 = vrcp.pop %v4635
    %v4730 = vmul.f32 %v4522, %v4729
    %v4731 = vmul.f32 %v4524, %v4729
    %v4732 = vrcp.pop %v4638
    %v4733 = vmul.f32 %v4526, %v4732
    %v4734 = vmul.f32 %v4528, %v4732
    %v4735 = vrcp.pop %v4641
    %v4736 = vmul.f32 %v4530, %v4735
    %v4737 = vmul.f32 %v4532, %v4735
    %v4738 = vrcp.pop %v4644
    %v4739 = vmul.f32 %v4534, %v4738
    %v4740 = vmul.f32 %v4536, %v4738
    %v4741 = vrcp.pop %v4647
    %v4742 = vmul.f32 %v4538, %v4741
    %v4743 = vmul.f32 %v4540, %v4741
    %v4744 = vrcp.pop %v4650
    %v4745 = vmul.f32 %v4542, %v4744
    %v4746 = vmul.f32 %v4544, %v4744
    %v4747 = vrcp.pop %v4653
    %v4748 = vmul.f32 %v4546, %v4747
    %v4749 = vmul.f32 %v4548, %v4747
    %v4750 = vrcp.pop %v4656
    %v4751 = vmul.f32 %v4550, %v4750
    %v4752 = vmul.f32 %v4552, %v4750
    %v4753 = vrcp.pop %v4659
    %v4754 = vmul.f32 %v4554, %v4753
    %v4755 = vmul.f32 %v4556, %v4753
    %v4756 = vrcp.pop %v4662
    %v4757 = vmul.f32 %v4558, %v4756
    %v4758 = vmul.f32 %v4560, %v4756
    %v4759 = vrcp.pop %v4665
    %v4760 = vmul.f32 %v4562, %v4759
    %v4761 = vmul.f32 %v4564, %v4759
    %v4762 = vrcp.pop %v4668
    %v4763 = vmul.f32 %v4566, %v4762
    %v4764 = vmul.f32 %v4568, %v4762
    %v4765 = vrcp.pop %v4671
    %v4766 = vmul.f32 %v4570, %v4765
    %v4767 = vmul.f32 %v4572, %v4765
    %v4768 = vrcp.pop %v4674
    %v4769 = vmul.f32 %v4574, %v4768
    %v4770 = vmul.f32 %v4576, %v4768
    %v4771 = vrcp.pop %v4677
    %v4772 = vmul.f32 %v4578, %v4771
    %v4773 = vmul.f32 %v4580, %v4771
    %v4774 = vrcp.pop %v4680
    %v4775 = vmul.f32 %v4582, %v4774
    %v4776 = vmul.f32 %v4584, %v4774
    %4777 = vmatprep.subr.mxu0 %v4683
    %4778 = vmatpush1.xpose.msra.mxu0 %v4682
    %4779 = vmatprep.subr.mxu0 %v4686
    %4780 = vmatpush1.xpose.msra.mxu0 %v4685
    %4781 = vmatprep.subr.mxu0 %v4689
    %4782 = vmatpush1.xpose.msra.mxu0 %v4688
    %4783 = vmatprep.subr.mxu0 %v4692
    %4784 = vmatpush1.xpose.msra.mxu0 %v4691
    %4785 = vmatprep.subr.mxu0 %v4695
    %4786 = vmatpush1.xpose.msra.mxu0 %v4694
    %4787 = vmatprep.subr.mxu0 %v4698
    %4788 = vmatpush1.xpose.msra.mxu0 %v4697
    %4789 = vmatprep.subr.mxu0 %v4701
    %4790 = vmatpush1.xpose.msra.mxu0 %v4700
    %4791 = vmatprep.subr.mxu0 %v4704
    %4792 = vmatpush1.xpose.msra.mxu0 %v4703
    %4793 = vmatprep.subr.mxu0 %v4707
    %4794 = vmatpush1.xpose.msra.mxu0 %v4706
    %4795 = vmatprep.subr.mxu0 %v4710
    %4796 = vmatpush1.xpose.msra.mxu0 %v4709
    %4797 = vmatprep.subr.mxu0 %v4713
    %4798 = vmatpush1.xpose.msra.mxu0 %v4712
    %4799 = vmatprep.subr.mxu0 %v4716
    %4800 = vmatpush1.xpose.msra.mxu0 %v4715
    %4801 = vmatprep.subr.mxu0 %v4719
    %4802 = vmatpush1.xpose.msra.mxu0 %v4718
    %4803 = vmatprep.subr.mxu0 %v4722
    %4804 = vmatpush1.xpose.msra.mxu0 %v4721
    %4805 = vmatprep.subr.mxu0 %v4725
    %4806 = vmatpush1.xpose.msra.mxu0 %v4724
    %4807 = vmatprep.subr.mxu0 %v4728
    %4808 = vmatpush1.xpose.msra.mxu0 %v4727
    %4809 = vmatprep.subr.mxu0 %v4731
    %4810 = vmatpush1.xpose.msra.mxu0 %v4730
    %4811 = vmatprep.subr.mxu0 %v4734
    %4812 = vmatpush1.xpose.msra.mxu0 %v4733
    %4813 = vmatprep.subr.mxu0 %v4737
    %4814 = vmatpush1.xpose.msra.mxu0 %v4736
    %4815 = vmatprep.subr.mxu0 %v4740
    %4816 = vmatpush1.xpose.msra.mxu0 %v4739
    %4817 = vmatprep.subr.mxu0 %v4743
    %4818 = vmatpush1.xpose.msra.mxu0 %v4742
    %4819 = vmatprep.subr.mxu0 %v4746
    %4820 = vmatpush1.xpose.msra.mxu0 %v4745
    %4821 = vmatprep.subr.mxu0 %v4749
    %4822 = vmatpush1.xpose.msra.mxu0 %v4748
    %4823 = vmatprep.subr.mxu0 %v4752
    %4824 = vmatpush1.xpose.msra.mxu0 %v4751
    %4825 = vmatprep.subr.mxu0 %v4755
    %4826 = vmatpush1.xpose.msra.mxu0 %v4754
    %4827 = vmatprep.subr.mxu0 %v4758
    %4828 = vmatpush1.xpose.msra.mxu0 %v4757
    %4829 = vmatprep.subr.mxu0 %v4761
    %4830 = vmatpush1.xpose.msra.mxu0 %v4760
    %4831 = vmatprep.subr.mxu0 %v4764
    %4832 = vmatpush1.xpose.msra.mxu0 %v4763
    %4833 = vmatprep.subr.mxu0 %v4767
    %4834 = vmatpush1.xpose.msra.mxu0 %v4766
    %4835 = vmatprep.subr.mxu0 %v4770
    %4836 = vmatpush1.xpose.msra.mxu0 %v4769
    %4837 = vmatprep.subr.mxu0 %v4773
    %4838 = vmatpush1.xpose.msra.mxu0 %v4772
    %4839 = vmatprep.subr.mxu0 %v4776
    %4840 = vmatpush1.xpose.msra.mxu0 %v4775
    %4841 = vmatprep.mubr.f32.mxu0 %v3836
    %4842 = vmatmul.mubr.f32.gmra.mrb[0].mxu0 %v3834
    %v4843 = vpop.f32.mrb[0].mxu0
    %v4844 = vadd.f32 0.0, %v4843
    %v4845 = vpop.f32.mrb[0].mxu0
    %v4846 = vadd.f32 0.0, %v4845
    %4847 = vmatprep.mubr.f32.mxu0 %v3842
    %4848 = vmatmul.mubr.f32.gmra.mrb[0].mxu0 %v3840
    %v4849 = vpop.f32.mrb[0].mxu0
    %v4850 = vadd.f32 0.0, %v4849
    %v4851 = vpop.f32.mrb[0].mxu0
    %v4852 = vadd.f32 0.0, %v4851
    %4853 = vmatprep.mubr.f32.mxu0 %v3848
    %4854 = vmatmul.mubr.f32.gmra.mrb[0].mxu0 %v3846
    %v4855 = vpop.f32.mrb[0].mxu0
    %v4856 = vadd.f32 0.0, %v4855
    %v4857 = vpop.f32.mrb[0].mxu0
    %v4858 = vadd.f32 0.0, %v4857
    %4859 = vmatprep.mubr.f32.mxu0 %v3854
    %4860 = vmatmul.mubr.f32.gmra.mrb[0].mxu0 %v3852
    %v4861 = vpop.f32.mrb[0].mxu0
    %v4862 = vadd.f32 0.0, %v4861
    %v4863 = vpop.f32.mrb[0].mxu0
    %v4864 = vadd.f32 0.0, %v4863
    %4865 = vmatprep.mubr.f32.mxu0 %v3860
    %4866 = vmatmul.mubr.f32.gmra.mrb[0].mxu0 %v3858
    %v4867 = vpop.f32.mrb[0].mxu0
    %v4868 = vadd.f32 0.0, %v4867
    %v4869 = vpop.f32.mrb[0].mxu0
    %v4870 = vadd.f32 0.0, %v4869
    %4871 = vmatprep.mubr.f32.mxu0 %v3866
    %4872 = vmatmul.mubr.f32.gmra.mrb[0].mxu0 %v3864
    %v4873 = vpop.f32.mrb[0].mxu0
    %v4874 = vadd.f32 0.0, %v4873
    %v4875 = vpop.f32.mrb[0].mxu0
    %v4876 = vadd.f32 0.0, %v4875
    %4877 = vmatprep.mubr.f32.mxu0 %v3872
    %4878 = vmatmul.mubr.f32.gmra.mrb[0].mxu0 %v3870
    %v4879 = vpop.f32.mrb[0].mxu0
    %v4880 = vadd.f32 0.0, %v4879
    %v4881 = vpop.f32.mrb[0].mxu0
    %v4882 = vadd.f32 0.0, %v4881
    %4883 = vmatprep.mubr.f32.mxu0 %v3878
    %4884 = vmatmul.mubr.f32.gmra.mrb[0].mxu0 %v3876
    %v4885 = vpop.f32.mrb[0].mxu0
    %v4886 = vadd.f32 0.0, %v4885
    %v4887 = vpop.f32.mrb[0].mxu0
    %v4888 = vadd.f32 0.0, %v4887
    %4889 = vdwg.mxu0
    %v4890 = vmul.f32 %v1287, %v4844
    %v4891 = vmul.f32 %v1287, %v4846
    %v4892 = vmul.f32 %v1287, %v4850
    %v4893 = vmul.f32 %v1287, %v4852
    %v4894 = vmul.f32 %v1287, %v4856
    %v4895 = vmul.f32 %v1287, %v4858
    %v4896 = vmul.f32 %v1287, %v4862
    %v4897 = vmul.f32 %v1287, %v4864
    %v4898 = vmul.f32 %v1287, %v4868
    %v4899 = vmul.f32 %v1287, %v4870
    %v4900 = vmul.f32 %v1287, %v4874
    %v4901 = vmul.f32 %v1287, %v4876
    %v4902 = vmul.f32 %v1287, %v4880
    %v4903 = vmul.f32 %v1287, %v4882
    %v4904 = vmul.f32 %v1287, %v4886
    %v4905 = vmul.f32 %v1287, %v4888
    %v4906 = vadd.f32 %v4890, %v3739
    %v4907 = vadd.f32 %v4891, %v3740
    %v4908 = vadd.f32 %v4892, %v3741
    %v4909 = vadd.f32 %v4893, %v3742
    %v4910 = vadd.f32 %v4894, %v3743
    %v4911 = vadd.f32 %v4895, %v3744
    %v4912 = vadd.f32 %v4896, %v3745
    %v4913 = vadd.f32 %v4897, %v3746
    %v4914 = vadd.f32 %v4898, %v3747
    %v4915 = vadd.f32 %v4899, %v3748
    %v4916 = vadd.f32 %v4900, %v3749
    %v4917 = vadd.f32 %v4901, %v3750
    %v4918 = vadd.f32 %v4902, %v3751
    %v4919 = vadd.f32 %v4903, %v3752
    %v4920 = vadd.f32 %v4904, %v3753
    %v4921 = vadd.f32 %v4905, %v3754
    %s4922 = scalar_lea.vmem [#allocation6], 384
    %4923 = vst [vmem:[%s4922] sm:$0xff] %v4906
    %4924 = vst [vmem:[%s4922 + $0x8] sm:$0xff] %v4907
    %4925 = vst [vmem:[%s4922 + $0x10] sm:$0xff] %v4908
    %4926 = vst [vmem:[%s4922 + $0x18] sm:$0xff] %v4909
    %4927 = vst [vmem:[%s4922 + $0x20] sm:$0xff] %v4910
    %4928 = vst [vmem:[%s4922 + $0x28] sm:$0xff] %v4911
    %4929 = vst [vmem:[%s4922 + $0x30] sm:$0xff] %v4912
    %4930 = vst [vmem:[%s4922 + $0x38] sm:$0xff] %v4913
    %4931 = vst [vmem:[%s4922 + $0x40] sm:$0xff] %v4914
    %4932 = vst [vmem:[%s4922 + $0x48] sm:$0xff] %v4915
    %4933 = vst [vmem:[%s4922 + $0x50] sm:$0xff] %v4916
    %4934 = vst [vmem:[%s4922 + $0x58] sm:$0xff] %v4917
    %4935 = vst [vmem:[%s4922 + $0x60] sm:$0xff] %v4918
    %4936 = vst [vmem:[%s4922 + $0x68] sm:$0xff] %v4919
    %4937 = vst [vmem:[%s4922 + $0x70] sm:$0xff] %v4920
    %4938 = vst [vmem:[%s4922 + $0x78] sm:$0xff] %v4921
    // Predicated region
    $region22: #{tpu_custom_call.1} parent=1 // pred_check
      _
    $region23: #{tpu_custom_call.1} parent=1 // pred_check_branch
      %4940 = sbr.rel (0) target = $region25
    $region24: #{tpu_custom_call.1} parent=1 // pred_region
      %s4942 = ssub.s32 8192, 8192
      %4943 = vsyncadd [#allocation5], %s4942
      %s4944 = sshll.u32 [#allocation6], 4
      %s4945 = int_to_ptr.vmem [resolvable:$true] %s4944
      %4950 = dma.vmem_to_hbm [thread:$0]  %s4945, 8192, %s4, [#allocation5], 256, 256, 16
    $region25: #{tpu_custom_call.1} parent=1 // pred_fallthru
      _
    // Predicated region
    $region26: #{tpu_custom_call.1} parent=1 // pred_check
      _
    $region27: #{tpu_custom_call.1} parent=1 // pred_check_branch
      %4952 = sbr.rel (0) target = $region29
    $region28: #{tpu_custom_call.1} parent=1 // pred_region
      %4953 = dma.done [#allocation5], 8192
    $region29: #{tpu_custom_call.1} parent=1 // pred_fallthru
      _
    %4954 = vsyncpa [#allocation4], 1
    %4955 = vsyncpa [#allocation5], 1

</llo_original>
